<compile_context>
chip_gen: v7x
topology: tpu7x:2x2x1
jax: 0.10.0
libtpu: 0.0.40
codegen_flags: <defaults>
</compile_context>

<pallas_src>
import jax
import jax.numpy as jnp
from jax.experimental import pallas as pl
from jax.experimental.pallas import tpu as pltpu


def _round_up(x, m):
    return (x + m - 1) // m * m


# ---------------------------------------------------------------------------
# Pallas kernels
# ---------------------------------------------------------------------------
def _conv_lrelu_kernel(p_ref, w_ref, o_ref):
    """im2col matmul tile + LeakyReLU(0.2) (conv1, no BN)."""
    acc = jnp.dot(p_ref[...], w_ref[...], preferred_element_type=jnp.float32)
    o_ref[...] = jnp.where(acc > 0, acc, 0.2 * acc).astype(o_ref.dtype)


def _conv_bn_lrelu_kernel(p_ref, w_ref, o_ref, acc_ref):
    """K-tiled im2col matmul; epilogue: BatchNorm2d (batch stats, identity
    affine) + LeakyReLU(0.2).

    The conv output is (M, C) with M = N*Ho*Wo, so the axis-0 reduction is
    exactly BatchNorm2d's per-channel reduction over (N, H, W).  Zero-padded
    output channels have mean = var = 0 and stay exactly zero.
    """
    k = pl.program_id(0)

    @pl.when(k == 0)
    def _init():
        acc_ref[...] = jnp.zeros_like(acc_ref)

    acc_ref[...] += jnp.dot(p_ref[...], w_ref[...],
                            preferred_element_type=jnp.float32)

    @pl.when(k == pl.num_programs(0) - 1)
    def _epilogue():
        acc = acc_ref[...]
        m = acc.shape[0]
        s = jnp.sum(acc, axis=0, keepdims=True)
        s2 = jnp.sum(acc * acc, axis=0, keepdims=True)
        mean = s * (1.0 / m)
        var = s2 * (1.0 / m) - mean * mean            # biased, as in BN training
        y = (acc - mean) * jax.lax.rsqrt(var + 1e-5)
        o_ref[...] = jnp.where(y > 0, y, 0.2 * y).astype(o_ref.dtype)


def _conv_head_kernel(p_ref, w4_ref, w5_ref, o_ref, acc_ref):
    """conv4 (K-tiled) + BN + LeakyReLU + conv5 (full 4x4 reduction) + Sigmoid."""
    k = pl.program_id(0)

    @pl.when(k == 0)
    def _init():
        acc_ref[...] = jnp.zeros_like(acc_ref)

    acc_ref[...] += jnp.dot(p_ref[...], w4_ref[...],
                            preferred_element_type=jnp.float32)

    @pl.when(k == pl.num_programs(0) - 1)
    def _epilogue():
        acc = acc_ref[...]                              # (N*16, C)
        m = acc.shape[0]
        n = o_ref.shape[0]
        s = jnp.sum(acc, axis=0, keepdims=True)
        s2 = jnp.sum(acc * acc, axis=0, keepdims=True)
        mean = s * (1.0 / m)
        var = s2 * (1.0 / m) - mean * mean
        y = (acc - mean) * jax.lax.rsqrt(var + 1e-5)
        y = jnp.where(y > 0, y, 0.2 * y)                # conv4 activation
        # conv5: per-sample sum over the 16 spatial taps and all channels.
        y3 = y.reshape(n, m // n, y.shape[1])           # (N, 16, C); lane dim untouched
        t = y3 * w5_ref[...]                            # broadcast (16, C) over batch
        z = jnp.sum(t, axis=1)                          # (N, C)
        logits = jnp.sum(z, axis=1, keepdims=True)      # (N, 1)
        o_ref[...] = 1.0 / (1.0 + jnp.exp(-logits))


# ---------------------------------------------------------------------------
# pallas_call wrappers
# ---------------------------------------------------------------------------
def _pick_tk(k):
    if k % 256 == 0:       # fill v6e/v7x 256-wide MXU contraction
        return 256
    if k % 128 == 0:
        return 128
    return k


def conv_lrelu(patches, w2d):
    M, K = patches.shape
    C = w2d.shape[1]
    TM = M
    for cand in (1024, 512, 256, 128):
        if M % cand == 0 and M // cand >= 2:
            TM = cand
            break
    return pl.pallas_call(
        _conv_lrelu_kernel,
        out_shape=jax.ShapeDtypeStruct((M, C), jnp.bfloat16),
        grid=(M // TM,),
        in_specs=[pl.BlockSpec((TM, K), lambda i: (i, 0)),
                  pl.BlockSpec((K, C), lambda i: (0, 0))],
        out_specs=pl.BlockSpec((TM, C), lambda i: (i, 0)),
        compiler_params=pltpu.CompilerParams(
            dimension_semantics=("parallel",)),
    )(patches, w2d)


def conv_bn_lrelu(patches, w2d):
    # BN needs the full M = N*Ho*Wo extent resident (batch statistics), so only
    # the reduction (K) axis is gridded; patch DMA pipelines against the MXU.
    M, K = patches.shape
    C = w2d.shape[1]
    TK = _pick_tk(K)
    return pl.pallas_call(
        _conv_bn_lrelu_kernel,
        out_shape=jax.ShapeDtypeStruct((M, C), jnp.bfloat16),
        grid=(K // TK,),
        in_specs=[pl.BlockSpec((M, TK), lambda k: (0, k)),
                  pl.BlockSpec((TK, C), lambda k: (k, 0))],
        out_specs=pl.BlockSpec((M, C), lambda k: (0, 0)),
        scratch_shapes=[pltpu.VMEM((M, C), jnp.float32)],
        compiler_params=pltpu.CompilerParams(
            dimension_semantics=("arbitrary",)),
    )(patches, w2d)


def conv_head(patches, w4_2d, w5_mat, n):
    M, K = patches.shape
    C = w4_2d.shape[1]
    P = w5_mat.shape[0]
    TK = _pick_tk(K)
    return pl.pallas_call(
        _conv_head_kernel,
        out_shape=jax.ShapeDtypeStruct((n, 1), jnp.float32),
        grid=(K // TK,),
        in_specs=[pl.BlockSpec((M, TK), lambda k: (0, k)),
                  pl.BlockSpec((TK, C), lambda k: (k, 0)),
                  pl.BlockSpec((P, C), lambda k: (0, 0))],
        out_specs=pl.BlockSpec((n, 1), lambda k: (0, 0)),
        scratch_shapes=[pltpu.VMEM((M, C), jnp.float32)],
        compiler_params=pltpu.CompilerParams(
            dimension_semantics=("arbitrary",)),
    )(patches, w4_2d, w5_mat)


# ---------------------------------------------------------------------------
# Plain-JAX glue (NHWC im2col: strided slices + stack, no transposes)
# ---------------------------------------------------------------------------
def im2col_nhwc(x, kh, kw, stride, pad):
    """x: (N, H, W, C) -> (N*Ho*Wo, kh*kw*C), feature order (i, j, c)."""
    N, H, W, C = x.shape
    if pad:
        x = jnp.pad(x, ((0, 0), (pad, pad), (pad, pad), (0, 0)))
    Ho = (H + 2 * pad - kh) // stride + 1
    Wo = (W + 2 * pad - kw) // stride + 1
    taps = []
    for i in range(kh):
        for j in range(kw):
            taps.append(x[:, i:i + stride * Ho:stride, j:j + stride * Wo:stride, :])
    p = jnp.stack(taps, axis=3)                     # (N, Ho, Wo, kh*kw, C)
    return p.reshape(N * Ho * Wo, kh * kw * C), Ho, Wo


# ---------------------------------------------------------------------------
# Weight packing — hoisted out of the per-forward path (run once)
# ---------------------------------------------------------------------------
def prep_w(w, cin_pad, cout_pad):
    """OIHW -> (kh*kw*cin_pad, cout_pad) bf16, rows ordered (i, j, cin)."""
    cout, cin, kh, kw = w.shape
    wt = jnp.transpose(w, (2, 3, 1, 0))             # (kh, kw, Cin, Cout)
    wt = jnp.pad(wt, ((0, 0), (0, 0), (0, cin_pad - cin), (0, cout_pad - cout)))
    return wt.reshape(kh * kw * cin_pad, cout_pad).astype(jnp.bfloat16)


def prep_w5(w5, c_pad):
    """Conv5 (1, Cin, 4, 4) -> (16, c_pad) f32, row p = oh*4 + ow."""
    _, cin, kh, kw = w5.shape
    wt = jnp.transpose(w5, (2, 3, 1, 0))[:, :, :, 0]     # (4, 4, Cin)
    wt = jnp.pad(wt, ((0, 0), (0, 0), (0, c_pad - cin)))
    return wt.reshape(kh * kw, c_pad).astype(jnp.float32)


def pack_params(params):
    """Pack weights once.  meta[i] = (cin_pad, cout_real, cout_pad) for conv i."""
    w1, w2, w3, w4, w5 = params
    meta, packed = [], []
    for w in (w1, w2, w3, w4):
        cout, cin = int(w.shape[0]), int(w.shape[1])
        cin_pad = _round_up(cin, 8)       # K = 16*cin_pad stays a multiple of 128
        cout_pad = _round_up(cout, 128)   # lane-dense output stores (works for cout > 128 too)
        meta.append((cin_pad, cout, cout_pad))
        packed.append(prep_w(w, cin_pad, cout_pad))
    w5_mat = prep_w5(w5, meta[3][2])      # conv5 Cin padded to conv4's cout_pad
    return tuple(packed) + (w5_mat,), tuple(meta)


# ---------------------------------------------------------------------------
# _netlocalD forward
# ---------------------------------------------------------------------------
def netlocalD_forward(x, packed, meta):
    w1p, w2p, w3p, w4p, w5_mat = packed
    N, nc, H, W = x.shape

    # NCHW -> NHWC once, pad image channels, cast to bf16 for the MXU.
    xh = jnp.transpose(x, (0, 2, 3, 1))
    xh = jnp.pad(xh, ((0, 0), (0, 0), (0, 0),
                      (0, meta[0][0] - nc))).astype(jnp.bfloat16)

    # conv1 + LeakyReLU (M-parallel grid, both v7x TCs busy)
    p, Ho, Wo = im2col_nhwc(xh, 4, 4, 2, 1)
    out = conv_lrelu(p, w1p)
    xh = out.reshape(N, Ho, Wo, meta[0][2])[..., :meta[1][0]]   # drop zero pad from K

    # conv2 / conv3: fused conv + BN + LeakyReLU, K-pipelined
    for li, wp in ((1, w2p), (2, w3p)):
        p, Ho, Wo = im2col_nhwc(xh, 4, 4, 2, 1)
        out = conv_bn_lrelu(p, wp)
        xh = out.reshape(N, Ho, Wo, meta[li][2])[..., :meta[li + 1][0]]

    # conv4 + BN + LeakyReLU + conv5 + Sigmoid, fused in one kernel
    p, Ho, Wo = im2col_nhwc(xh, 4, 4, 2, 1)                     # Ho = Wo = 4
    assert Ho * Wo == 16, "conv5 (4x4/s1/p0) expects a 4x4 spatial map (64x64 input)"
    return conv_head(p, w4p, w5_mat, N)                         # (N, 1) == output.view(-1, 1)


# ---------------------------------------------------------------------------
# Pure-JAX f32 reference (correctness check)
# ---------------------------------------------------------------------------
def ref_forward(x, params):
    w1, w2, w3, w4, w5 = params

    def conv(x, w, s, p):
        return jax.lax.conv_general_dilated(
            x, w, (s, s), [(p, p), (p, p)],
            dimension_numbers=("NCHW", "OIHW", "NCHW"),
            precision=jax.lax.Precision.HIGHEST)

    def lrelu(x):
        return jnp.where(x > 0, x, 0.2 * x)

    def bn(x):
        mean = jnp.mean(x, axis=(0, 2, 3), keepdims=True)
        var = jnp.mean((x - mean) ** 2, axis=(0, 2, 3), keepdims=True)
        return (x - mean) * jax.lax.rsqrt(var + 1e-5)

    x = lrelu(conv(x, w1, 2, 1))
    x = lrelu(bn(conv(x, w2, 2, 1)))
    x = lrelu(bn(conv(x, w3, 2, 1)))
    x = lrelu(bn(conv(x, w4, 2, 1)))
    x = 1.0 / (1.0 + jnp.exp(-conv(x, w5, 1, 0)))
    return x.reshape(-1, 1)


# ---------------------------------------------------------------------------
if __name__ == "__main__":
    # nc=3 channels, ndf=8, 64x64 input (required so the final 4x4/s1/p0 conv
    # reduces to 1x1), batch=2.
    N, nc, ndf, H = 2, 3, 8, 64

    key = jax.random.PRNGKey(0)
    k_x, k1, k2, k3, k4, k5 = jax.random.split(key, 6)
    x = jax.random.normal(k_x, (N, nc, H, H), dtype=jnp.float32)

    def winit(k, cout, cin):   # DCGAN-style N(0, 0.02) init, bias-free (OIHW)
        return 0.02 * jax.random.normal(k, (cout, cin, 4, 4), dtype=jnp.float32)

    params = (
        winit(k1, ndf, nc),
        winit(k2, ndf * 2, ndf),
        winit(k3, ndf * 4, ndf * 2),
        winit(k4, ndf * 8, ndf * 4),
        winit(k5, 1, ndf * 8),
    )

    # Weight packing hoisted: done once, outside the traced forward.
    packed, meta = pack_params(params)
    fwd = jax.jit(lambda xx, pw: netlocalD_forward(xx, pw, meta))

    out = jax.block_until_ready(fwd(x, packed))
    assert out.shape == (N, 1), out.shape

    ref = jax.block_until_ready(ref_forward(x, params))
    # bf16 MXU operands / bf16 inter-layer activations vs f32 HIGHEST reference:
    # compare at bf16-scale tolerance.
    assert jnp.allclose(out, ref, atol=3e-2, rtol=0.0), (out, ref)

    print("KERNEL_OK")
</pallas_src>

<mosaic_0001>
module attributes {stable_mosaic.version = 11 : i64} {
  func.func @_conv_lrelu_kernel(%arg0: i32, %arg1: memref<1024x128xbf16, #tpu.memory_space<vmem>>, %arg2: memref<128x128xbf16, #tpu.memory_space<vmem>>, %arg3: memref<1024x128xbf16, #tpu.memory_space<vmem>>) attributes {dimension_semantics = [#tpu.dimension_semantics<parallel>], iteration_bounds = array<i64: 2>, scalar_prefetch = 0 : i64, scratch_operands = 0 : i64, tpu.core_type = #tpu.core_type<tc>, window_params = [{transform_indices = @transform_0, window_bounds = array<i64: 1024, 128>}, {pipeline_mode = #tpu.pipeline_mode<synchronous>, transform_indices = @transform_1, window_bounds = array<i64: 128, 128>}, {transform_indices = @transform_2, window_bounds = array<i64: 1024, 128>}]} {
    %c0 = arith.constant 0 : index
    %c0_0 = arith.constant 0 : index
    %0 = vector.load %arg1[%c0, %c0_0] : memref<1024x128xbf16, #tpu.memory_space<vmem>>, vector<1024x128xbf16>
    %c0_1 = arith.constant 0 : index
    %c0_2 = arith.constant 0 : index
    %1 = vector.load %arg2[%c0_1, %c0_2] : memref<128x128xbf16, #tpu.memory_space<vmem>>, vector<128x128xbf16>
    %cst = arith.constant dense<0.000000e+00> : vector<1024x128xf32>
    %2 = tpu.matmul %0, %1, %cst {dimension_numbers = #tpu.dot_dimension_numbers<[1], [0], [0], [1], [0, 0, 1, 1], [], []>} : vector<1024x128xbf16>, vector<128x128xbf16>, vector<1024x128xf32> -> vector<1024x128xf32>
    %cst_3 = arith.constant 0.000000e+00 : f32
    %3 = vector.broadcast %cst_3 : f32 to vector<1024x128xf32>
    %4 = arith.cmpf ogt, %2, %3 : vector<1024x128xf32>
    %cst_4 = arith.constant 2.000000e-01 : f32
    %5 = vector.broadcast %cst_4 : f32 to vector<1024x128xf32>
    %6 = arith.mulf %5, %2 : vector<1024x128xf32>
    %7 = arith.select %4, %2, %6 : vector<1024x128xi1>, vector<1024x128xf32>
    %8 = arith.truncf %7 : vector<1024x128xf32> to vector<1024x128xbf16>
    %c0_5 = arith.constant 0 : index
    %c0_6 = arith.constant 0 : index
    %9 = vector.load %arg3[%c0_5, %c0_6] : memref<1024x128xbf16, #tpu.memory_space<vmem>>, vector<1024x128xbf16>
    tpu.vector_store %arg3[%c0_5, %c0_6], %8 {strides = array<i32>} : memref<1024x128xbf16, #tpu.memory_space<vmem>>, vector<1024x128xbf16>,
    return
  }
  func.func @transform_0(%arg0: i32) -> (i32, i32) {
    %c0_i32 = arith.constant 0 : i32
    %c0_i32_0 = arith.constant 0 : i32
    return %arg0, %c0_i32 : i32, i32
  }
  func.func @transform_1(%arg0: i32) -> (i32, i32) {
    %c0_i32 = arith.constant 0 : i32
    %c0_i32_0 = arith.constant 0 : i32
    %c0_i32_1 = arith.constant 0 : i32
    return %c0_i32, %c0_i32_0 : i32, i32
  }
  func.func @transform_2(%arg0: i32) -> (i32, i32) {
    %c0_i32 = arith.constant 0 : i32
    %c0_i32_0 = arith.constant 0 : i32
    return %arg0, %c0_i32 : i32, i32
  }
}

module attributes {stable_mosaic.version = 11 : i64} {
  func.func @_conv_bn_lrelu_kernel(%arg0: i32, %arg1: memref<512x128xbf16, #tpu.memory_space<vmem>>, %arg2: memref<128x128xbf16, #tpu.memory_space<vmem>>, %arg3: memref<512x128xbf16, #tpu.memory_space<vmem>>, %arg4: memref<512x128xf32, #tpu.memory_space<vmem>>) attributes {dimension_semantics = [#tpu.dimension_semantics<arbitrary>], iteration_bounds = array<i64: 1>, scalar_prefetch = 0 : i64, scratch_operands = 1 : i64, tpu.core_type = #tpu.core_type<tc>, window_params = [{transform_indices = @transform_0, window_bounds = array<i64: 512, 128>}, {transform_indices = @transform_1, window_bounds = array<i64: 128, 128>}, {pipeline_mode = #tpu.pipeline_mode<synchronous>, transform_indices = @transform_2, window_bounds = array<i64: 512, 128>}]} {
    %c0_i32 = arith.constant 0 : i32
    %0 = arith.cmpi eq, %arg0, %c0_i32 : i32
    %1 = arith.extui %0 : i1 to i32
    %c0_i32_0 = arith.constant 0 : i32
    %2 = arith.cmpi ne, %1, %c0_i32_0 : i32
    scf.if %2 {
      %cst_10 = arith.constant 0.000000e+00 : f32
      %12 = vector.broadcast %cst_10 : f32 to vector<512x128xf32>
      %c0_11 = arith.constant 0 : index
      %c0_12 = arith.constant 0 : index
      %13 = vector.load %arg4[%c0_11, %c0_12] : memref<512x128xf32, #tpu.memory_space<vmem>>, vector<512x128xf32>
      tpu.vector_store %arg4[%c0_11, %c0_12], %12 {strides = array<i32>} : memref<512x128xf32, #tpu.memory_space<vmem>>, vector<512x128xf32>,
    } else {
    }
    %c0 = arith.constant 0 : index
    %c0_1 = arith.constant 0 : index
    %3 = vector.load %arg4[%c0, %c0_1] : memref<512x128xf32, #tpu.memory_space<vmem>>, vector<512x128xf32>
    %c0_2 = arith.constant 0 : index
    %c0_3 = arith.constant 0 : index
    %4 = vector.load %arg1[%c0_2, %c0_3] : memref<512x128xbf16, #tpu.memory_space<vmem>>, vector<512x128xbf16>
    %c0_4 = arith.constant 0 : index
    %c0_5 = arith.constant 0 : index
    %5 = vector.load %arg2[%c0_4, %c0_5] : memref<128x128xbf16, #tpu.memory_space<vmem>>, vector<128x128xbf16>
    %cst = arith.constant dense<0.000000e+00> : vector<512x128xf32>
    %6 = tpu.matmul %4, %5, %cst {dimension_numbers = #tpu.dot_dimension_numbers<[1], [0], [0], [1], [0, 0, 1, 1], [], []>} : vector<512x128xbf16>, vector<128x128xbf16>, vector<512x128xf32> -> vector<512x128xf32>
    %7 = arith.addf %3, %6 : vector<512x128xf32>
    %c0_6 = arith.constant 0 : index
    %c0_7 = arith.constant 0 : index
    %8 = vector.load %arg4[%c0_6, %c0_7] : memref<512x128xf32, #tpu.memory_space<vmem>>, vector<512x128xf32>
    tpu.vector_store %arg4[%c0_6, %c0_7], %7 {strides = array<i32>} : memref<512x128xf32, #tpu.memory_space<vmem>>, vector<512x128xf32>,
    %c0_i32_8 = arith.constant 0 : i32
    %9 = arith.cmpi eq, %arg0, %c0_i32_8 : i32
    %10 = arith.extui %9 : i1 to i32
    %c0_i32_9 = arith.constant 0 : i32
    %11 = arith.cmpi ne, %10, %c0_i32_9 : i32
    scf.if %11 {
      %c0_10 = arith.constant 0 : index
      %c0_11 = arith.constant 0 : index
      %12 = vector.load %arg4[%c0_10, %c0_11] : memref<512x128xf32, #tpu.memory_space<vmem>>, vector<512x128xf32>
      %cst_12 = arith.constant dense<0.000000e+00> : vector<128xf32>
      %13 = vector.multi_reduction <add>, %12, %cst_12 [0] : vector<512x128xf32> to vector<128xf32>
      %14 = vector.shape_cast %13 : vector<128xf32> to vector<1x128xf32>
      %15 = arith.mulf %12, %12 : vector<512x128xf32>
      %cst_13 = arith.constant dense<0.000000e+00> : vector<128xf32>
      %16 = vector.multi_reduction <add>, %15, %cst_13 [0] : vector<512x128xf32> to vector<128xf32>
      %17 = vector.shape_cast %16 : vector<128xf32> to vector<1x128xf32>
      %cst_14 = arith.constant 0.001953125 : f32
      %18 = vector.broadcast %cst_14 : f32 to vector<1x128xf32>
      %19 = arith.mulf %14, %18 : vector<1x128xf32>
      %cst_15 = arith.constant 0.001953125 : f32
      %20 = vector.broadcast %cst_15 : f32 to vector<1x128xf32>
      %21 = arith.mulf %17, %20 : vector<1x128xf32>
      %22 = arith.mulf %19, %19 : vector<1x128xf32>
      %23 = arith.subf %21, %22 : vector<1x128xf32>
      %24 = vector.broadcast %19 : vector<1x128xf32> to vector<512x128xf32>
      %25 = arith.subf %12, %24 : vector<512x128xf32>
      %cst_16 = arith.constant 9.99999974E-6 : f32
      %26 = vector.broadcast %cst_16 : f32 to vector<1x128xf32>
      %27 = arith.addf %23, %26 : vector<1x128xf32>
      %28 = math.rsqrt %27 : vector<1x128xf32>
      %29 = vector.broadcast %28 : vector<1x128xf32> to vector<512x128xf32>
      %30 = arith.mulf %25, %29 : vector<512x128xf32>
      %cst_17 = arith.constant 0.000000e+00 : f32
      %31 = vector.broadcast %cst_17 : f32 to vector<512x128xf32>
      %32 = arith.cmpf ogt, %30, %31 : vector<512x128xf32>
      %cst_18 = arith.constant 2.000000e-01 : f32
      %33 = vector.broadcast %cst_18 : f32 to vector<512x128xf32>
      %34 = arith.mulf %33, %30 : vector<512x128xf32>
      %35 = arith.select %32, %30, %34 : vector<512x128xi1>, vector<512x128xf32>
      %36 = arith.truncf %35 : vector<512x128xf32> to vector<512x128xbf16>
      %c0_19 = arith.constant 0 : index
      %c0_20 = arith.constant 0 : index
      %37 = vector.load %arg3[%c0_19, %c0_20] : memref<512x128xbf16, #tpu.memory_space<vmem>>, vector<512x128xbf16>
      tpu.vector_store %arg3[%c0_19, %c0_20], %36 {strides = array<i32>} : memref<512x128xbf16, #tpu.memory_space<vmem>>, vector<512x128xbf16>,
    } else {
    }
    return
  }
  func.func @transform_0(%arg0: i32) -> (i32, i32) {
    %c0_i32 = arith.constant 0 : i32
    %c0_i32_0 = arith.constant 0 : i32
    return %c0_i32, %arg0 : i32, i32
  }
  func.func @transform_1(%arg0: i32) -> (i32, i32) {
    %c0_i32 = arith.constant 0 : i32
    %c0_i32_0 = arith.constant 0 : i32
    return %arg0, %c0_i32 : i32, i32
  }
  func.func @transform_2(%arg0: i32) -> (i32, i32) {
    %c0_i32 = arith.constant 0 : i32
    %c0_i32_0 = arith.constant 0 : i32
    %c0_i32_1 = arith.constant 0 : i32
    return %c0_i32, %c0_i32_0 : i32, i32
  }
}

module attributes {stable_mosaic.version = 11 : i64} {
  func.func @_conv_bn_lrelu_kernel(%arg0: i32, %arg1: memref<128x256xbf16, #tpu.memory_space<vmem>>, %arg2: memref<256x128xbf16, #tpu.memory_space<vmem>>, %arg3: memref<128x128xbf16, #tpu.memory_space<vmem>>, %arg4: memref<128x128xf32, #tpu.memory_space<vmem>>) attributes {dimension_semantics = [#tpu.dimension_semantics<arbitrary>], iteration_bounds = array<i64: 1>, scalar_prefetch = 0 : i64, scratch_operands = 1 : i64, tpu.core_type = #tpu.core_type<tc>, window_params = [{transform_indices = @transform_0, window_bounds = array<i64: 128, 256>}, {transform_indices = @transform_1, window_bounds = array<i64: 256, 128>}, {pipeline_mode = #tpu.pipeline_mode<synchronous>, transform_indices = @transform_2, window_bounds = array<i64: 128, 128>}]} {
    %c0_i32 = arith.constant 0 : i32
    %0 = arith.cmpi eq, %arg0, %c0_i32 : i32
    %1 = arith.extui %0 : i1 to i32
    %c0_i32_0 = arith.constant 0 : i32
    %2 = arith.cmpi ne, %1, %c0_i32_0 : i32
    scf.if %2 {
      %cst_10 = arith.constant 0.000000e+00 : f32
      %12 = vector.broadcast %cst_10 : f32 to vector<128x128xf32>
      %c0_11 = arith.constant 0 : index
      %c0_12 = arith.constant 0 : index
      %13 = vector.load %arg4[%c0_11, %c0_12] : memref<128x128xf32, #tpu.memory_space<vmem>>, vector<128x128xf32>
      tpu.vector_store %arg4[%c0_11, %c0_12], %12 {strides = array<i32>} : memref<128x128xf32, #tpu.memory_space<vmem>>, vector<128x128xf32>,
    } else {
    }
    %c0 = arith.constant 0 : index
    %c0_1 = arith.constant 0 : index
    %3 = vector.load %arg4[%c0, %c0_1] : memref<128x128xf32, #tpu.memory_space<vmem>>, vector<128x128xf32>
    %c0_2 = arith.constant 0 : index
    %c0_3 = arith.constant 0 : index
    %4 = vector.load %arg1[%c0_2, %c0_3] : memref<128x256xbf16, #tpu.memory_space<vmem>>, vector<128x256xbf16>
    %c0_4 = arith.constant 0 : index
    %c0_5 = arith.constant 0 : index
    %5 = vector.load %arg2[%c0_4, %c0_5] : memref<256x128xbf16, #tpu.memory_space<vmem>>, vector<256x128xbf16>
    %cst = arith.constant dense<0.000000e+00> : vector<128x128xf32>
    %6 = tpu.matmul %4, %5, %cst {dimension_numbers = #tpu.dot_dimension_numbers<[1], [0], [0], [1], [0, 0, 1, 1], [], []>} : vector<128x256xbf16>, vector<256x128xbf16>, vector<128x128xf32> -> vector<128x128xf32>
    %7 = arith.addf %3, %6 : vector<128x128xf32>
    %c0_6 = arith.constant 0 : index
    %c0_7 = arith.constant 0 : index
    %8 = vector.load %arg4[%c0_6, %c0_7] : memref<128x128xf32, #tpu.memory_space<vmem>>, vector<128x128xf32>
    tpu.vector_store %arg4[%c0_6, %c0_7], %7 {strides = array<i32>} : memref<128x128xf32, #tpu.memory_space<vmem>>, vector<128x128xf32>,
    %c0_i32_8 = arith.constant 0 : i32
    %9 = arith.cmpi eq, %arg0, %c0_i32_8 : i32
    %10 = arith.extui %9 : i1 to i32
    %c0_i32_9 = arith.constant 0 : i32
    %11 = arith.cmpi ne, %10, %c0_i32_9 : i32
    scf.if %11 {
      %c0_10 = arith.constant 0 : index
      %c0_11 = arith.constant 0 : index
      %12 = vector.load %arg4[%c0_10, %c0_11] : memref<128x128xf32, #tpu.memory_space<vmem>>, vector<128x128xf32>
      %cst_12 = arith.constant dense<0.000000e+00> : vector<128xf32>
      %13 = vector.multi_reduction <add>, %12, %cst_12 [0] : vector<128x128xf32> to vector<128xf32>
      %14 = vector.shape_cast %13 : vector<128xf32> to vector<1x128xf32>
      %15 = arith.mulf %12, %12 : vector<128x128xf32>
      %cst_13 = arith.constant dense<0.000000e+00> : vector<128xf32>
      %16 = vector.multi_reduction <add>, %15, %cst_13 [0] : vector<128x128xf32> to vector<128xf32>
      %17 = vector.shape_cast %16 : vector<128xf32> to vector<1x128xf32>
      %cst_14 = arith.constant 7.812500e-03 : f32
      %18 = vector.broadcast %cst_14 : f32 to vector<1x128xf32>
      %19 = arith.mulf %14, %18 : vector<1x128xf32>
      %cst_15 = arith.constant 7.812500e-03 : f32
      %20 = vector.broadcast %cst_15 : f32 to vector<1x128xf32>
      %21 = arith.mulf %17, %20 : vector<1x128xf32>
      %22 = arith.mulf %19, %19 : vector<1x128xf32>
      %23 = arith.subf %21, %22 : vector<1x128xf32>
      %24 = vector.broadcast %19 : vector<1x128xf32> to vector<128x128xf32>
      %25 = arith.subf %12, %24 : vector<128x128xf32>
      %cst_16 = arith.constant 9.99999974E-6 : f32
      %26 = vector.broadcast %cst_16 : f32 to vector<1x128xf32>
      %27 = arith.addf %23, %26 : vector<1x128xf32>
      %28 = math.rsqrt %27 : vector<1x128xf32>
      %29 = vector.broadcast %28 : vector<1x128xf32> to vector<128x128xf32>
      %30 = arith.mulf %25, %29 : vector<128x128xf32>
      %cst_17 = arith.constant 0.000000e+00 : f32
      %31 = vector.broadcast %cst_17 : f32 to vector<128x128xf32>
      %32 = arith.cmpf ogt, %30, %31 : vector<128x128xf32>
      %cst_18 = arith.constant 2.000000e-01 : f32
      %33 = vector.broadcast %cst_18 : f32 to vector<128x128xf32>
      %34 = arith.mulf %33, %30 : vector<128x128xf32>
      %35 = arith.select %32, %30, %34 : vector<128x128xi1>, vector<128x128xf32>
      %36 = arith.truncf %35 : vector<128x128xf32> to vector<128x128xbf16>
      %c0_19 = arith.constant 0 : index
      %c0_20 = arith.constant 0 : index
      %37 = vector.load %arg3[%c0_19, %c0_20] : memref<128x128xbf16, #tpu.memory_space<vmem>>, vector<128x128xbf16>
      tpu.vector_store %arg3[%c0_19, %c0_20], %36 {strides = array<i32>} : memref<128x128xbf16, #tpu.memory_space<vmem>>, vector<128x128xbf16>,
    } else {
    }
    return
  }
  func.func @transform_0(%arg0: i32) -> (i32, i32) {
    %c0_i32 = arith.constant 0 : i32
    %c0_i32_0 = arith.constant 0 : i32
    return %c0_i32, %arg0 : i32, i32
  }
  func.func @transform_1(%arg0: i32) -> (i32, i32) {
    %c0_i32 = arith.constant 0 : i32
    %c0_i32_0 = arith.constant 0 : i32
    return %arg0, %c0_i32 : i32, i32
  }
  func.func @transform_2(%arg0: i32) -> (i32, i32) {
    %c0_i32 = arith.constant 0 : i32
    %c0_i32_0 = arith.constant 0 : i32
    %c0_i32_1 = arith.constant 0 : i32
    return %c0_i32, %c0_i32_0 : i32, i32
  }
}

module attributes {stable_mosaic.version = 11 : i64} {
  func.func @_conv_head_kernel(%arg0: i32, %arg1: memref<32x256xbf16, #tpu.memory_space<vmem>>, %arg2: memref<256x128xbf16, #tpu.memory_space<vmem>>, %arg3: memref<16x128xf32, #tpu.memory_space<vmem>>, %arg4: memref<2x1xf32, #tpu.memory_space<vmem>>, %arg5: memref<32x128xf32, #tpu.memory_space<vmem>>) attributes {dimension_semantics = [#tpu.dimension_semantics<arbitrary>], iteration_bounds = array<i64: 2>, scalar_prefetch = 0 : i64, scratch_operands = 1 : i64, tpu.core_type = #tpu.core_type<tc>, window_params = [{transform_indices = @transform_0, window_bounds = array<i64: 32, 256>}, {transform_indices = @transform_1, window_bounds = array<i64: 256, 128>}, {pipeline_mode = #tpu.pipeline_mode<synchronous>, transform_indices = @transform_2, window_bounds = array<i64: 16, 128>}, {pipeline_mode = #tpu.pipeline_mode<synchronous>, transform_indices = @transform_3, window_bounds = array<i64: 2, 1>}]} {
    %c0_i32 = arith.constant 0 : i32
    %0 = arith.cmpi eq, %arg0, %c0_i32 : i32
    %1 = arith.extui %0 : i1 to i32
    %c0_i32_0 = arith.constant 0 : i32
    %2 = arith.cmpi ne, %1, %c0_i32_0 : i32
    scf.if %2 {
      %cst_9 = arith.constant 0.000000e+00 : f32
      %12 = vector.broadcast %cst_9 : f32 to vector<32x128xf32>
      %c0_10 = arith.constant 0 : index
      %c0_11 = arith.constant 0 : index
      %13 = vector.load %arg5[%c0_10, %c0_11] : memref<32x128xf32, #tpu.memory_space<vmem>>, vector<32x128xf32>
      tpu.vector_store %arg5[%c0_10, %c0_11], %12 {strides = array<i32>} : memref<32x128xf32, #tpu.memory_space<vmem>>, vector<32x128xf32>,
    } else {
    }
    %c0 = arith.constant 0 : index
    %c0_1 = arith.constant 0 : index
    %3 = vector.load %arg5[%c0, %c0_1] : memref<32x128xf32, #tpu.memory_space<vmem>>, vector<32x128xf32>
    %c0_2 = arith.constant 0 : index
    %c0_3 = arith.constant 0 : index
    %4 = vector.load %arg1[%c0_2, %c0_3] : memref<32x256xbf16, #tpu.memory_space<vmem>>, vector<32x256xbf16>
    %c0_4 = arith.constant 0 : index
    %c0_5 = arith.constant 0 : index
    %5 = vector.load %arg2[%c0_4, %c0_5] : memref<256x128xbf16, #tpu.memory_space<vmem>>, vector<256x128xbf16>
    %cst = arith.constant dense<0.000000e+00> : vector<32x128xf32>
    %6 = tpu.matmul %4, %5, %cst {dimension_numbers = #tpu.dot_dimension_numbers<[1], [0], [0], [1], [0, 0, 1, 1], [], []>} : vector<32x256xbf16>, vector<256x128xbf16>, vector<32x128xf32> -> vector<32x128xf32>
    %7 = arith.addf %3, %6 : vector<32x128xf32>
    %c0_6 = arith.constant 0 : index
    %c0_7 = arith.constant 0 : index
    %8 = vector.load %arg5[%c0_6, %c0_7] : memref<32x128xf32, #tpu.memory_space<vmem>>, vector<32x128xf32>
    tpu.vector_store %arg5[%c0_6, %c0_7], %7 {strides = array<i32>} : memref<32x128xf32, #tpu.memory_space<vmem>>, vector<32x128xf32>,
    %c1_i32 = arith.constant 1 : i32
    %9 = arith.cmpi eq, %arg0, %c1_i32 : i32
    %10 = arith.extui %9 : i1 to i32
    %c0_i32_8 = arith.constant 0 : i32
    %11 = arith.cmpi ne, %10, %c0_i32_8 : i32
    scf.if %11 {
      %c0_9 = arith.constant 0 : index
      %c0_10 = arith.constant 0 : index
      %12 = vector.load %arg5[%c0_9, %c0_10] : memref<32x128xf32, #tpu.memory_space<vmem>>, vector<32x128xf32>
      %cst_11 = arith.constant dense<0.000000e+00> : vector<128xf32>
      %13 = vector.multi_reduction <add>, %12, %cst_11 [0] : vector<32x128xf32> to vector<128xf32>
      %14 = vector.shape_cast %13 : vector<128xf32> to vector<1x128xf32>
      %15 = arith.mulf %12, %12 : vector<32x128xf32>
      %cst_12 = arith.constant dense<0.000000e+00> : vector<128xf32>
      %16 = vector.multi_reduction <add>, %15, %cst_12 [0] : vector<32x128xf32> to vector<128xf32>
      %17 = vector.shape_cast %16 : vector<128xf32> to vector<1x128xf32>
      %cst_13 = arith.constant 3.125000e-02 : f32
      %18 = vector.broadcast %cst_13 : f32 to vector<1x128xf32>
      %19 = arith.mulf %14, %18 : vector<1x128xf32>
      %cst_14 = arith.constant 3.125000e-02 : f32
      %20 = vector.broadcast %cst_14 : f32 to vector<1x128xf32>
      %21 = arith.mulf %17, %20 : vector<1x128xf32>
      %22 = arith.mulf %19, %19 : vector<1x128xf32>
      %23 = arith.subf %21, %22 : vector<1x128xf32>
      %24 = vector.broadcast %19 : vector<1x128xf32> to vector<32x128xf32>
      %25 = arith.subf %12, %24 : vector<32x128xf32>
      %cst_15 = arith.constant 9.99999974E-6 : f32
      %26 = vector.broadcast %cst_15 : f32 to vector<1x128xf32>
      %27 = arith.addf %23, %26 : vector<1x128xf32>
      %28 = math.rsqrt %27 : vector<1x128xf32>
      %29 = vector.broadcast %28 : vector<1x128xf32> to vector<32x128xf32>
      %30 = arith.mulf %25, %29 : vector<32x128xf32>
      %cst_16 = arith.constant 0.000000e+00 : f32
      %31 = vector.broadcast %cst_16 : f32 to vector<32x128xf32>
      %32 = arith.cmpf ogt, %30, %31 : vector<32x128xf32>
      %cst_17 = arith.constant 2.000000e-01 : f32
      %33 = vector.broadcast %cst_17 : f32 to vector<32x128xf32>
      %34 = arith.mulf %33, %30 : vector<32x128xf32>
      %35 = arith.select %32, %30, %34 : vector<32x128xi1>, vector<32x128xf32>
      %36 = vector.shape_cast %35 : vector<32x128xf32> to vector<2x16x128xf32>
      %c0_18 = arith.constant 0 : index
      %c0_19 = arith.constant 0 : index
      %37 = vector.load %arg3[%c0_18, %c0_19] : memref<16x128xf32, #tpu.memory_space<vmem>>, vector<16x128xf32>
      %38 = vector.shape_cast %37 : vector<16x128xf32> to vector<1x16x128xf32>
      %39 = vector.broadcast %38 : vector<1x16x128xf32> to vector<2x16x128xf32>
      %40 = arith.mulf %36, %39 : vector<2x16x128xf32>
      %cst_20 = arith.constant dense<0.000000e+00> : vector<2x128xf32>
      %41 = vector.multi_reduction <add>, %40, %cst_20 [1] : vector<2x16x128xf32> to vector<2x128xf32>
      %cst_21 = arith.constant dense<0.000000e+00> : vector<2xf32>
      %42 = vector.multi_reduction <add>, %41, %cst_21 [1] : vector<2x128xf32> to vector<2xf32>
      %43 = vector.shape_cast %42 : vector<2xf32> to vector<2x1xf32>
      %cst_22 = arith.constant 0.000000e+00 : f32
      %44 = vector.broadcast %cst_22 : f32 to vector<2x1xf32>
      %45 = arith.subf %44, %43 : vector<2x1xf32>
      %46 = math.exp %45 : vector<2x1xf32>
      %cst_23 = arith.constant 1.000000e+00 : f32
      %47 = vector.broadcast %cst_23 : f32 to vector<2x1xf32>
      %48 = arith.addf %47, %46 : vector<2x1xf32>
      %cst_24 = arith.constant 1.000000e+00 : f32
      %49 = vector.broadcast %cst_24 : f32 to vector<2x1xf32>
      %50 = arith.divf %49, %48 : vector<2x1xf32>
      %c0_25 = arith.constant 0 : index
      %c0_26 = arith.constant 0 : index
      %51 = vector.load %arg4[%c0_25, %c0_26] : memref<2x1xf32, #tpu.memory_space<vmem>>, vector<2x1xf32>
      tpu.vector_store %arg4[%c0_25, %c0_26], %50 {strides = array<i32>} : memref<2x1xf32, #tpu.memory_space<vmem>>, vector<2x1xf32>,
    } else {
    }
    return
  }
  func.func @transform_0(%arg0: i32) -> (i32, i32) {
    %c0_i32 = arith.constant 0 : i32
    %c0_i32_0 = arith.constant 0 : i32
    return %c0_i32, %arg0 : i32, i32
  }
  func.func @transform_1(%arg0: i32) -> (i32, i32) {
    %c0_i32 = arith.constant 0 : i32
    %c0_i32_0 = arith.constant 0 : i32
    return %arg0, %c0_i32 : i32, i32
  }
  func.func @transform_2(%arg0: i32) -> (i32, i32) {
    %c0_i32 = arith.constant 0 : i32
    %c0_i32_0 = arith.constant 0 : i32
    %c0_i32_1 = arith.constant 0 : i32
    return %c0_i32, %c0_i32_0 : i32, i32
  }
  func.func @transform_3(%arg0: i32) -> (i32, i32) {
    %c0_i32 = arith.constant 0 : i32
    %c0_i32_0 = arith.constant 0 : i32
    %c0_i32_1 = arith.constant 0 : i32
    return %c0_i32, %c0_i32_0 : i32, i32
  }
}

</mosaic_0001>

<llo_original>
// kernel: _lambda_.4
$region0: #{_lambda_.4}
  #allocation0 [shape = 'u32[]', space=smem, size = 0x4, offset = 0x4, fixed_abs, tag = 'smem constant byte address 0x4 - core index']
  #allocation1 [shape = 'u32[144,128]{1,0:T(1,128)}', space=vmem, size = 0x12000, scoped, tag = 'internal scratch']
  %s0 = inlined_call_operand.vmem [shape: bf16[2048,128], index: 0, kind: input, shape index: {}]
  %s1 = inlined_call_operand.vmem [shape: bf16[128,128], index: 1, kind: input, shape index: {}]
  %s2 = inlined_call_operand.vmem [shape: bf16[2048,128], index: 2, kind: output, shape index: {}]
  %s3 = sld [smem:[#allocation0]]
  $region41: #{_lambda_.4} parent=0
    _
  %s5 = ssub.s32 1, %s3
  %s6 = scalar_select 0, %s5, %s3
  loop: start=0, step=1, limit=4
  $region2: #{_lambda_.4} parent=0 // loop_pre_header
    _
  $region3: #{_lambda_.4} parent=0 // loop_header
    %s8 = sphi 0, %s12
    %p9 = scmp.ge.s32.totalorder %s8, 4
    %s18 = sphi 0, %s20
    %s21 = sphi 0, %s18
    %s22 = sphi 0, %s21
    %s38 = sphi 0, %s22
    %s42 = sphi 0, %s42
    %s44 = sphi 0, %s42
    %s45 = sphi 0, %s44
    %s59 = sphi 0, %s45
    %s65 = sphi 0, %s67
    %s68 = sphi 0, %s65
    %s69 = sphi 0, %s68
    %s85 = sphi 0, %s69
  $region4: #{_lambda_.4} parent=0 // loop_header_branch
    %11 = sbr.rel (%p9) target = $region8
  $region5: #{_lambda_.4} parent=0 // loop_body
    %s13 = ssub.s32 %s8, 1
    %s14 = ssub.s32 %s8, 2
    %s15 = sadd.s32 %s8, 1
    %s16 = ssub.s32 %s8, %s15
    %p17 = scmp.eq.s32.totalorder %s16, 0
    %s19 = sadd.s32 %s18, 1
    %s20 = scalar_select %p17, %s18, %s19
    %p23 = pneg %p17
    %p24 = scmp.eq.s32.totalorder %s8, 1
    %p25 = por %p23, %p24
    %p26 = scmp.ne.s32.totalorder %s18, %s21
    %p27 = scmp.eq.s32.totalorder %s8, 0
    %p28 = por %p26, %p27
    %p29 = scmp.ne.s32.totalorder %s18, %s21
    %p30 = scmp.eq.s32.totalorder %s13, 1
    %p31 = por %p29, %p30
    %p32 = scmp.ne.s32.totalorder %s21, %s22
    %p33 = scmp.eq.s32.totalorder %s13, 0
    %p34 = por %p32, %p33
    %p35 = scmp.ne.s32.totalorder %s21, %s22
    %p36 = scmp.eq.s32.totalorder %s14, 1
    %p37 = por %p35, %p36
    %p39 = scmp.ne.s32.totalorder %s22, %s38
    %p40 = scmp.eq.s32.totalorder %s14, 0
    %p41 = por %p39, %p40
    %s43 = sadd.s32 %s42, 1
    %p46 = scmp.eq.s32.totalorder %s8, 1
    %p47 = scmp.ne.s32.totalorder %s42, %s44
    %p48 = scmp.eq.s32.totalorder %s8, 0
    %p49 = por %p47, %p48
    %p50 = scmp.ne.s32.totalorder %s42, %s44
    %p51 = scmp.eq.s32.totalorder %s13, 1
    %p52 = por %p50, %p51
    %p53 = scmp.ne.s32.totalorder %s44, %s45
    %p54 = scmp.eq.s32.totalorder %s13, 0
    %p55 = por %p53, %p54
    %p56 = scmp.ne.s32.totalorder %s44, %s45
    %p57 = scmp.eq.s32.totalorder %s14, 1
    %p58 = por %p56, %p57
    %p60 = scmp.ne.s32.totalorder %s45, %s59
    %p61 = scmp.eq.s32.totalorder %s14, 0
    %p62 = por %p60, %p61
    %s63 = ssub.s32 %s8, %s15
    %p64 = scmp.eq.s32.totalorder %s63, 0
    %s66 = sadd.s32 %s65, 1
    %s67 = scalar_select %p64, %s65, %s66
    %p70 = pneg %p64
    %p71 = scmp.eq.s32.totalorder %s8, 1
    %p72 = por %p70, %p71
    %p73 = scmp.ne.s32.totalorder %s65, %s68
    %p74 = scmp.eq.s32.totalorder %s8, 0
    %p75 = por %p73, %p74
    %p76 = scmp.ne.s32.totalorder %s65, %s68
    %p77 = scmp.eq.s32.totalorder %s13, 1
    %p78 = por %p76, %p77
    %p79 = scmp.ne.s32.totalorder %s68, %s69
    %p80 = scmp.eq.s32.totalorder %s13, 0
    %p81 = por %p79, %p80
    %p82 = scmp.ne.s32.totalorder %s68, %s69
    %p83 = scmp.eq.s32.totalorder %s14, 1
    %p84 = por %p82, %p83
    %p86 = scmp.ne.s32.totalorder %s69, %s85
    %p87 = scmp.eq.s32.totalorder %s14, 0
    %p88 = por %p86, %p87
    %p89 = scmp.le.s32.totalorder 1, %s8
    %p90 = scmp.lt.s32.totalorder %s8, 3
    %p91 = pnand %p89, %p90
    %p92 = pneg %p91
    // Predicated region
    $region9: #{_lambda_.4} parent=5 // pred_check
      _
    $region10: #{_lambda_.4} parent=5 // pred_check_branch
      %94 = sbr.rel (%p91) target = $region12
    $region11: #{_lambda_.4} parent=5 // pred_region
      %s95 = ssub.s32 %s8, 1
      // Predicated region
      $region13: #{_lambda_.4} parent=11 // pred_check
        %p96 = pneg %p55
      $region14: #{_lambda_.4} parent=11 // pred_check_branch
        %98 = sbr.rel (%p96) target = $region16
      $region15: #{_lambda_.4} parent=11 // pred_region
        _
      $region16: #{_lambda_.4} parent=11 // pred_fallthru
        _
    $region12: #{_lambda_.4} parent=5 // pred_fallthru
      _
    %p99 = scmp.lt.s32.totalorder %s8, 2
    // Predicated region
    $region17: #{_lambda_.4} parent=5 // pred_check
      %p100 = pneg %p99
    $region18: #{_lambda_.4} parent=5 // pred_check_branch
      %102 = sbr.rel (%p100) target = $region20
    $region19: #{_lambda_.4} parent=5 // pred_region
      // Predicated region
      $region21: #{_lambda_.4} parent=19 // pred_check
        %p103 = pneg %p28
      $region22: #{_lambda_.4} parent=19 // pred_check_branch
        %105 = sbr.rel (%p103) target = $region24
      $region23: #{_lambda_.4} parent=19 // pred_region
        %s106 = smul.u32 128, %s8
        %p107 = scmp.lt.s32.totalorder %s106, 255
        %s108 = scalar_select %p107, %s106, 255
        %s109 = smul.addr %s108, 4
        %s110 = scalar_lea.vmem %s0, %s109
        %s111 = smul.u32 128, %s8
      $region24: #{_lambda_.4} parent=19 // pred_fallthru
        _
    $region20: #{_lambda_.4} parent=5 // pred_fallthru
      _
    %p112 = scmp.le.s32.totalorder 1, %s8
    %p113 = scmp.lt.s32.totalorder %s8, 3
    %p114 = pnand %p112, %p113
    %p115 = pneg %p114
    // Predicated region
    $region25: #{_lambda_.4} parent=5 // pred_check
      _
    $region26: #{_lambda_.4} parent=5 // pred_check_branch
      %117 = sbr.rel (%p114) target = $region28
    $region27: #{_lambda_.4} parent=5 // pred_region
      %s118 = ssub.s32 %s8, 1
      %s119 = smul.u32 128, %s13
      %p120 = scmp.lt.s32.totalorder %s119, 255
      %s121 = scalar_select %p120, %s119, 255
      %s122 = smul.addr %s121, 4
      %s123 = scalar_lea.vmem %s0, %s122
      %p124 = pneg %p34
      %p125 = pneg %p31
      %p126 = pneg %p55
      %p127 = pneg %p52
      %p128 = pneg %p81
      %p129 = pneg %p78
      %s130 = smul.u32 128, %s13
      %p131 = scmp.lt.s32.totalorder %s130, 255
      %s132 = scalar_select %p131, %s130, 255
      %s133 = smul.addr %s132, 4
      %s134 = scalar_lea.vmem %s2, %s133
      %s135 = smul.u32 128, %s13
      %p136 = scmp.lt.s32.totalorder %s135, 255
      %s137 = scalar_select %p136, %s135, 255
      %s138 = smul.addr %s137, 4
      %s139 = scalar_lea.vmem %s0, %s138
      %s140 = smul.u32 128, %s13
      %s141 = smul.u32 128, %s13
      %p142 = scmp.lt.s32.totalorder %s141, 255
      %s143 = scalar_select %p142, %s141, 255
      %s144 = smul.addr %s143, 4
      %s145 = scalar_lea.vmem %s2, %s144
      %s146 = smul.u32 128, %s13
      %v148 = vld [vmem:[%s139] sm:$0xf]
      %v149 = vld [vmem:[%s139 + $0x4] sm:$0xf]
      %v150 = vld [vmem:[%s139 + $0x8] sm:$0xf]
      %v151 = vld [vmem:[%s139 + $0xc] sm:$0xf]
      %v152 = vld [vmem:[%s139 + $0x10] sm:$0xf]
      %v153 = vld [vmem:[%s139 + $0x14] sm:$0xf]
      %v154 = vld [vmem:[%s139 + $0x18] sm:$0xf]
      %v155 = vld [vmem:[%s139 + $0x1c] sm:$0xf]
      %v156 = vld [vmem:[%s139 + $0x20] sm:$0xf]
      %v157 = vld [vmem:[%s139 + $0x24] sm:$0xf]
      %v158 = vld [vmem:[%s139 + $0x28] sm:$0xf]
      %v159 = vld [vmem:[%s139 + $0x2c] sm:$0xf]
      %v160 = vld [vmem:[%s139 + $0x30] sm:$0xf]
      %v161 = vld [vmem:[%s139 + $0x34] sm:$0xf]
      %v162 = vld [vmem:[%s139 + $0x38] sm:$0xf]
      %v163 = vld [vmem:[%s139 + $0x3c] sm:$0xf]
      %v164 = vld [vmem:[%s139 + $0x40] sm:$0xf]
      %v165 = vld [vmem:[%s139 + $0x44] sm:$0xf]
      %v166 = vld [vmem:[%s139 + $0x48] sm:$0xf]
      %v167 = vld [vmem:[%s139 + $0x4c] sm:$0xf]
      %v168 = vld [vmem:[%s139 + $0x50] sm:$0xf]
      %v169 = vld [vmem:[%s139 + $0x54] sm:$0xf]
      %v170 = vld [vmem:[%s139 + $0x58] sm:$0xf]
      %v171 = vld [vmem:[%s139 + $0x5c] sm:$0xf]
      %v172 = vld [vmem:[%s139 + $0x60] sm:$0xf]
      %v173 = vld [vmem:[%s139 + $0x64] sm:$0xf]
      %v174 = vld [vmem:[%s139 + $0x68] sm:$0xf]
      %v175 = vld [vmem:[%s139 + $0x6c] sm:$0xf]
      %v176 = vld [vmem:[%s139 + $0x70] sm:$0xf]
      %v177 = vld [vmem:[%s139 + $0x74] sm:$0xf]
      %v178 = vld [vmem:[%s139 + $0x78] sm:$0xf]
      %v179 = vld [vmem:[%s139 + $0x7c] sm:$0xf]
      %v180 = vld [vmem:[%s139 + $0x80] sm:$0xf]
      %v181 = vld [vmem:[%s139 + $0x84] sm:$0xf]
      %v182 = vld [vmem:[%s139 + $0x88] sm:$0xf]
      %v183 = vld [vmem:[%s139 + $0x8c] sm:$0xf]
      %v184 = vld [vmem:[%s139 + $0x90] sm:$0xf]
      %v185 = vld [vmem:[%s139 + $0x94] sm:$0xf]
      %v186 = vld [vmem:[%s139 + $0x98] sm:$0xf]
      %v187 = vld [vmem:[%s139 + $0x9c] sm:$0xf]
      %v188 = vld [vmem:[%s139 + $0xa0] sm:$0xf]
      %v189 = vld [vmem:[%s139 + $0xa4] sm:$0xf]
      %v190 = vld [vmem:[%s139 + $0xa8] sm:$0xf]
      %v191 = vld [vmem:[%s139 + $0xac] sm:$0xf]
      %v192 = vld [vmem:[%s139 + $0xb0] sm:$0xf]
      %v193 = vld [vmem:[%s139 + $0xb4] sm:$0xf]
      %v194 = vld [vmem:[%s139 + $0xb8] sm:$0xf]
      %v195 = vld [vmem:[%s139 + $0xbc] sm:$0xf]
      %v196 = vld [vmem:[%s139 + $0xc0] sm:$0xf]
      %v197 = vld [vmem:[%s139 + $0xc4] sm:$0xf]
      %v198 = vld [vmem:[%s139 + $0xc8] sm:$0xf]
      %v199 = vld [vmem:[%s139 + $0xcc] sm:$0xf]
      %v200 = vld [vmem:[%s139 + $0xd0] sm:$0xf]
      %v201 = vld [vmem:[%s139 + $0xd4] sm:$0xf]
      %v202 = vld [vmem:[%s139 + $0xd8] sm:$0xf]
      %v203 = vld [vmem:[%s139 + $0xdc] sm:$0xf]
      %v204 = vld [vmem:[%s139 + $0xe0] sm:$0xf]
      %v205 = vld [vmem:[%s139 + $0xe4] sm:$0xf]
      %v206 = vld [vmem:[%s139 + $0xe8] sm:$0xf]
      %v207 = vld [vmem:[%s139 + $0xec] sm:$0xf]
      %v208 = vld [vmem:[%s139 + $0xf0] sm:$0xf]
      %v209 = vld [vmem:[%s139 + $0xf4] sm:$0xf]
      %v210 = vld [vmem:[%s139 + $0xf8] sm:$0xf]
      %v211 = vld [vmem:[%s139 + $0xfc] sm:$0xf]
      %v212 = vld [vmem:[%s139 + $0x100] sm:$0xf]
      %v213 = vld [vmem:[%s139 + $0x104] sm:$0xf]
      %v214 = vld [vmem:[%s139 + $0x108] sm:$0xf]
      %v215 = vld [vmem:[%s139 + $0x10c] sm:$0xf]
      %v216 = vld [vmem:[%s139 + $0x110] sm:$0xf]
      %v217 = vld [vmem:[%s139 + $0x114] sm:$0xf]
      %v218 = vld [vmem:[%s139 + $0x118] sm:$0xf]
      %v219 = vld [vmem:[%s139 + $0x11c] sm:$0xf]
      %v220 = vld [vmem:[%s139 + $0x120] sm:$0xf]
      %v221 = vld [vmem:[%s139 + $0x124] sm:$0xf]
      %v222 = vld [vmem:[%s139 + $0x128] sm:$0xf]
      %v223 = vld [vmem:[%s139 + $0x12c] sm:$0xf]
      %v224 = vld [vmem:[%s139 + $0x130] sm:$0xf]
      %v225 = vld [vmem:[%s139 + $0x134] sm:$0xf]
      %v226 = vld [vmem:[%s139 + $0x138] sm:$0xf]
      %v227 = vld [vmem:[%s139 + $0x13c] sm:$0xf]
      %v228 = vld [vmem:[%s139 + $0x140] sm:$0xf]
      %v229 = vld [vmem:[%s139 + $0x144] sm:$0xf]
      %v230 = vld [vmem:[%s139 + $0x148] sm:$0xf]
      %v231 = vld [vmem:[%s139 + $0x14c] sm:$0xf]
      %v232 = vld [vmem:[%s139 + $0x150] sm:$0xf]
      %v233 = vld [vmem:[%s139 + $0x154] sm:$0xf]
      %v234 = vld [vmem:[%s139 + $0x158] sm:$0xf]
      %v235 = vld [vmem:[%s139 + $0x15c] sm:$0xf]
      %v236 = vld [vmem:[%s139 + $0x160] sm:$0xf]
      %v237 = vld [vmem:[%s139 + $0x164] sm:$0xf]
      %v238 = vld [vmem:[%s139 + $0x168] sm:$0xf]
      %v239 = vld [vmem:[%s139 + $0x16c] sm:$0xf]
      %v240 = vld [vmem:[%s139 + $0x170] sm:$0xf]
      %v241 = vld [vmem:[%s139 + $0x174] sm:$0xf]
      %v242 = vld [vmem:[%s139 + $0x178] sm:$0xf]
      %v243 = vld [vmem:[%s139 + $0x17c] sm:$0xf]
      %v244 = vld [vmem:[%s139 + $0x180] sm:$0xf]
      %v245 = vld [vmem:[%s139 + $0x184] sm:$0xf]
      %v246 = vld [vmem:[%s139 + $0x188] sm:$0xf]
      %v247 = vld [vmem:[%s139 + $0x18c] sm:$0xf]
      %v248 = vld [vmem:[%s139 + $0x190] sm:$0xf]
      %v249 = vld [vmem:[%s139 + $0x194] sm:$0xf]
      %v250 = vld [vmem:[%s139 + $0x198] sm:$0xf]
      %v251 = vld [vmem:[%s139 + $0x19c] sm:$0xf]
      %v252 = vld [vmem:[%s139 + $0x1a0] sm:$0xf]
      %v253 = vld [vmem:[%s139 + $0x1a4] sm:$0xf]
      %v254 = vld [vmem:[%s139 + $0x1a8] sm:$0xf]
      %v255 = vld [vmem:[%s139 + $0x1ac] sm:$0xf]
      %v256 = vld [vmem:[%s139 + $0x1b0] sm:$0xf]
      %v257 = vld [vmem:[%s139 + $0x1b4] sm:$0xf]
      %v258 = vld [vmem:[%s139 + $0x1b8] sm:$0xf]
      %v259 = vld [vmem:[%s139 + $0x1bc] sm:$0xf]
      %v260 = vld [vmem:[%s139 + $0x1c0] sm:$0xf]
      %v261 = vld [vmem:[%s139 + $0x1c4] sm:$0xf]
      %v262 = vld [vmem:[%s139 + $0x1c8] sm:$0xf]
      %v263 = vld [vmem:[%s139 + $0x1cc] sm:$0xf]
      %v264 = vld [vmem:[%s139 + $0x1d0] sm:$0xf]
      %v265 = vld [vmem:[%s139 + $0x1d4] sm:$0xf]
      %v266 = vld [vmem:[%s139 + $0x1d8] sm:$0xf]
      %v267 = vld [vmem:[%s139 + $0x1dc] sm:$0xf]
      %v268 = vld [vmem:[%s139 + $0x1e0] sm:$0xf]
      %v269 = vld [vmem:[%s139 + $0x1e4] sm:$0xf]
      %v270 = vld [vmem:[%s139 + $0x1e8] sm:$0xf]
      %v271 = vld [vmem:[%s139 + $0x1ec] sm:$0xf]
      %v272 = vld [vmem:[%s139 + $0x1f0] sm:$0xf]
      %v273 = vld [vmem:[%s139 + $0x1f4] sm:$0xf]
      %v274 = vld [vmem:[%s139 + $0x1f8] sm:$0xf]
      %v275 = vld [vmem:[%s139 + $0x1fc] sm:$0xf]
      %v276 = vld [vmem:[%s1] sm:$0xf]
      %v277 = vld [vmem:[%s1 + $0x4] sm:$0xf]
      %v278 = vld [vmem:[%s1 + $0x8] sm:$0xf]
      %v279 = vld [vmem:[%s1 + $0xc] sm:$0xf]
      %v280 = vld [vmem:[%s1 + $0x10] sm:$0xf]
      %v281 = vld [vmem:[%s1 + $0x14] sm:$0xf]
      %v282 = vld [vmem:[%s1 + $0x18] sm:$0xf]
      %v283 = vld [vmem:[%s1 + $0x1c] sm:$0xf]
      %v284 = vld [vmem:[%s1 + $0x20] sm:$0xf]
      %v285 = vld [vmem:[%s1 + $0x24] sm:$0xf]
      %v286 = vld [vmem:[%s1 + $0x28] sm:$0xf]
      %v287 = vld [vmem:[%s1 + $0x2c] sm:$0xf]
      %v288 = vld [vmem:[%s1 + $0x30] sm:$0xf]
      %v289 = vld [vmem:[%s1 + $0x34] sm:$0xf]
      %v290 = vld [vmem:[%s1 + $0x38] sm:$0xf]
      %v291 = vld [vmem:[%s1 + $0x3c] sm:$0xf]
      %v420 = vunpack.c.l.b16 %v148
      %v421 = vunpack.c.l.b16 %v149
      %v422 = vunpack.c.l.b16 %v150
      %v423 = vunpack.c.l.b16 %v151
      %v424 = vunpack.c.l.b16 %v152
      %v425 = vunpack.c.l.b16 %v153
      %v426 = vunpack.c.l.b16 %v154
      %v427 = vunpack.c.l.b16 %v155
      %v428 = vunpack.c.l.b16 %v156
      %v429 = vunpack.c.l.b16 %v157
      %v430 = vunpack.c.l.b16 %v158
      %v431 = vunpack.c.l.b16 %v159
      %v432 = vunpack.c.l.b16 %v160
      %v433 = vunpack.c.l.b16 %v161
      %v434 = vunpack.c.l.b16 %v162
      %v435 = vunpack.c.l.b16 %v163
      %v436 = vunpack.c.l.b16 %v164
      %v437 = vunpack.c.l.b16 %v165
      %v438 = vunpack.c.l.b16 %v166
      %v439 = vunpack.c.l.b16 %v167
      %v440 = vunpack.c.l.b16 %v168
      %v441 = vunpack.c.l.b16 %v169
      %v442 = vunpack.c.l.b16 %v170
      %v443 = vunpack.c.l.b16 %v171
      %v444 = vunpack.c.l.b16 %v172
      %v445 = vunpack.c.l.b16 %v173
      %v446 = vunpack.c.l.b16 %v174
      %v447 = vunpack.c.l.b16 %v175
      %v448 = vunpack.c.l.b16 %v176
      %v449 = vunpack.c.l.b16 %v177
      %v450 = vunpack.c.l.b16 %v178
      %v451 = vunpack.c.l.b16 %v179
      %v452 = vunpack.c.l.b16 %v180
      %v453 = vunpack.c.l.b16 %v181
      %v454 = vunpack.c.l.b16 %v182
      %v455 = vunpack.c.l.b16 %v183
      %v456 = vunpack.c.l.b16 %v184
      %v457 = vunpack.c.l.b16 %v185
      %v458 = vunpack.c.l.b16 %v186
      %v459 = vunpack.c.l.b16 %v187
      %v460 = vunpack.c.l.b16 %v188
      %v461 = vunpack.c.l.b16 %v189
      %v462 = vunpack.c.l.b16 %v190
      %v463 = vunpack.c.l.b16 %v191
      %v464 = vunpack.c.l.b16 %v192
      %v465 = vunpack.c.l.b16 %v193
      %v466 = vunpack.c.l.b16 %v194
      %v467 = vunpack.c.l.b16 %v195
      %v468 = vunpack.c.l.b16 %v196
      %v469 = vunpack.c.l.b16 %v197
      %v470 = vunpack.c.l.b16 %v198
      %v471 = vunpack.c.l.b16 %v199
      %v472 = vunpack.c.l.b16 %v200
      %v473 = vunpack.c.l.b16 %v201
      %v474 = vunpack.c.l.b16 %v202
      %v475 = vunpack.c.l.b16 %v203
      %v476 = vunpack.c.l.b16 %v204
      %v477 = vunpack.c.l.b16 %v205
      %v478 = vunpack.c.l.b16 %v206
      %v479 = vunpack.c.l.b16 %v207
      %v480 = vunpack.c.l.b16 %v208
      %v481 = vunpack.c.l.b16 %v209
      %v482 = vunpack.c.l.b16 %v210
      %v483 = vunpack.c.l.b16 %v211
      %v484 = vunpack.c.l.b16 %v212
      %v485 = vunpack.c.l.b16 %v213
      %v486 = vunpack.c.l.b16 %v214
      %v487 = vunpack.c.l.b16 %v215
      %v488 = vunpack.c.l.b16 %v216
      %v489 = vunpack.c.l.b16 %v217
      %v490 = vunpack.c.l.b16 %v218
      %v491 = vunpack.c.l.b16 %v219
      %v492 = vunpack.c.l.b16 %v220
      %v493 = vunpack.c.l.b16 %v221
      %v494 = vunpack.c.l.b16 %v222
      %v495 = vunpack.c.l.b16 %v223
      %v496 = vunpack.c.l.b16 %v224
      %v497 = vunpack.c.l.b16 %v225
      %v498 = vunpack.c.l.b16 %v226
      %v499 = vunpack.c.l.b16 %v227
      %v500 = vunpack.c.l.b16 %v228
      %v501 = vunpack.c.l.b16 %v229
      %v502 = vunpack.c.l.b16 %v230
      %v503 = vunpack.c.l.b16 %v231
      %v504 = vunpack.c.l.b16 %v232
      %v505 = vunpack.c.l.b16 %v233
      %v506 = vunpack.c.l.b16 %v234
      %v507 = vunpack.c.l.b16 %v235
      %v508 = vunpack.c.l.b16 %v236
      %v509 = vunpack.c.l.b16 %v237
      %v510 = vunpack.c.l.b16 %v238
      %v511 = vunpack.c.l.b16 %v239
      %v512 = vunpack.c.l.b16 %v240
      %v513 = vunpack.c.l.b16 %v241
      %v514 = vunpack.c.l.b16 %v242
      %v515 = vunpack.c.l.b16 %v243
      %v516 = vunpack.c.l.b16 %v244
      %v517 = vunpack.c.l.b16 %v245
      %v518 = vunpack.c.l.b16 %v246
      %v519 = vunpack.c.l.b16 %v247
      %v520 = vunpack.c.l.b16 %v248
      %v521 = vunpack.c.l.b16 %v249
      %v522 = vunpack.c.l.b16 %v250
      %v523 = vunpack.c.l.b16 %v251
      %v524 = vunpack.c.l.b16 %v252
      %v525 = vunpack.c.l.b16 %v253
      %v526 = vunpack.c.l.b16 %v254
      %v527 = vunpack.c.l.b16 %v255
      %v528 = vunpack.c.l.b16 %v256
      %v529 = vunpack.c.l.b16 %v257
      %v530 = vunpack.c.l.b16 %v258
      %v531 = vunpack.c.l.b16 %v259
      %v532 = vunpack.c.l.b16 %v260
      %v533 = vunpack.c.l.b16 %v261
      %v534 = vunpack.c.l.b16 %v262
      %v535 = vunpack.c.l.b16 %v263
      %v536 = vunpack.c.l.b16 %v264
      %v537 = vunpack.c.l.b16 %v265
      %v538 = vunpack.c.l.b16 %v266
      %v539 = vunpack.c.l.b16 %v267
      %v540 = vunpack.c.l.b16 %v268
      %v541 = vunpack.c.l.b16 %v269
      %v542 = vunpack.c.l.b16 %v270
      %v543 = vunpack.c.l.b16 %v271
      %v544 = vunpack.c.l.b16 %v272
      %v545 = vunpack.c.l.b16 %v273
      %v546 = vunpack.c.l.b16 %v274
      %v547 = vunpack.c.l.b16 %v275
      %v548 = vpack.c.b16 %v421, %v420
      %v549 = vpack.c.b16 %v423, %v422
      %v550 = vpack.c.b16 %v425, %v424
      %v551 = vpack.c.b16 %v427, %v426
      %v552 = vpack.c.b16 %v429, %v428
      %v553 = vpack.c.b16 %v431, %v430
      %v554 = vpack.c.b16 %v433, %v432
      %v555 = vpack.c.b16 %v435, %v434
      %v556 = vpack.c.b16 %v437, %v436
      %v557 = vpack.c.b16 %v439, %v438
      %v558 = vpack.c.b16 %v441, %v440
      %v559 = vpack.c.b16 %v443, %v442
      %v560 = vpack.c.b16 %v445, %v444
      %v561 = vpack.c.b16 %v447, %v446
      %v562 = vpack.c.b16 %v449, %v448
      %v563 = vpack.c.b16 %v451, %v450
      %v564 = vpack.c.b16 %v453, %v452
      %v565 = vpack.c.b16 %v455, %v454
      %v566 = vpack.c.b16 %v457, %v456
      %v567 = vpack.c.b16 %v459, %v458
      %v568 = vpack.c.b16 %v461, %v460
      %v569 = vpack.c.b16 %v463, %v462
      %v570 = vpack.c.b16 %v465, %v464
      %v571 = vpack.c.b16 %v467, %v466
      %v572 = vpack.c.b16 %v469, %v468
      %v573 = vpack.c.b16 %v471, %v470
      %v574 = vpack.c.b16 %v473, %v472
      %v575 = vpack.c.b16 %v475, %v474
      %v576 = vpack.c.b16 %v477, %v476
      %v577 = vpack.c.b16 %v479, %v478
      %v578 = vpack.c.b16 %v481, %v480
      %v579 = vpack.c.b16 %v483, %v482
      %v580 = vpack.c.b16 %v485, %v484
      %v581 = vpack.c.b16 %v487, %v486
      %v582 = vpack.c.b16 %v489, %v488
      %v583 = vpack.c.b16 %v491, %v490
      %v584 = vpack.c.b16 %v493, %v492
      %v585 = vpack.c.b16 %v495, %v494
      %v586 = vpack.c.b16 %v497, %v496
      %v587 = vpack.c.b16 %v499, %v498
      %v588 = vpack.c.b16 %v501, %v500
      %v589 = vpack.c.b16 %v503, %v502
      %v590 = vpack.c.b16 %v505, %v504
      %v591 = vpack.c.b16 %v507, %v506
      %v592 = vpack.c.b16 %v509, %v508
      %v593 = vpack.c.b16 %v511, %v510
      %v594 = vpack.c.b16 %v513, %v512
      %v595 = vpack.c.b16 %v515, %v514
      %v596 = vpack.c.b16 %v517, %v516
      %v597 = vpack.c.b16 %v519, %v518
      %v598 = vpack.c.b16 %v521, %v520
      %v599 = vpack.c.b16 %v523, %v522
      %v600 = vpack.c.b16 %v525, %v524
      %v601 = vpack.c.b16 %v527, %v526
      %v602 = vpack.c.b16 %v529, %v528
      %v603 = vpack.c.b16 %v531, %v530
      %v604 = vpack.c.b16 %v533, %v532
      %v605 = vpack.c.b16 %v535, %v534
      %v606 = vpack.c.b16 %v537, %v536
      %v607 = vpack.c.b16 %v539, %v538
      %v608 = vpack.c.b16 %v541, %v540
      %v609 = vpack.c.b16 %v543, %v542
      %v610 = vpack.c.b16 %v545, %v544
      %v611 = vpack.c.b16 %v547, %v546
      %v692 = vunpack.c.l.b16 %v276
      %v693 = vunpack.c.l.b16 %v277
      %v694 = vunpack.c.l.b16 %v278
      %v695 = vunpack.c.l.b16 %v279
      %v696 = vunpack.c.l.b16 %v280
      %v697 = vunpack.c.l.b16 %v281
      %v698 = vunpack.c.l.b16 %v282
      %v699 = vunpack.c.l.b16 %v283
      %v700 = vunpack.c.l.b16 %v284
      %v701 = vunpack.c.l.b16 %v285
      %v702 = vunpack.c.l.b16 %v286
      %v703 = vunpack.c.l.b16 %v287
      %v704 = vunpack.c.l.b16 %v288
      %v705 = vunpack.c.l.b16 %v289
      %v706 = vunpack.c.l.b16 %v290
      %v707 = vunpack.c.l.b16 %v291
      %v708 = vpack.c.b16 %v693, %v692
      %v709 = vpack.c.b16 %v695, %v694
      %v710 = vpack.c.b16 %v697, %v696
      %v711 = vpack.c.b16 %v699, %v698
      %v712 = vpack.c.b16 %v701, %v700
      %v713 = vpack.c.b16 %v703, %v702
      %v714 = vpack.c.b16 %v705, %v704
      %v715 = vpack.c.b16 %v707, %v706
      %724 = vmatprep.subr.bf16.mxu0 0
      %725 = vmatpush1.bf16.msra.mxu0 %v708
      %726 = vmatprep.subr.bf16.mxu0 0
      %727 = vmatpush1.bf16.msra.mxu0 %v709
      %728 = vmatprep.subr.bf16.mxu0 0
      %729 = vmatpush1.bf16.msra.mxu0 %v710
      %730 = vmatprep.subr.bf16.mxu0 0
      %731 = vmatpush1.bf16.msra.mxu0 %v711
      %732 = vmatprep.subr.bf16.mxu0 0
      %733 = vmatpush1.bf16.msra.mxu0 %v712
      %734 = vmatprep.subr.bf16.mxu0 0
      %735 = vmatpush1.bf16.msra.mxu0 %v713
      %736 = vmatprep.subr.bf16.mxu0 0
      %737 = vmatpush1.bf16.msra.mxu0 %v714
      %738 = vmatprep.subr.bf16.mxu0 0
      %739 = vmatpush1.bf16.msra.mxu0 %v715
      %740 = vmatprep.subr.bf16.mxu0 0
      %741 = vmatpush1.bf16.msra.mxu0 0
      %742 = vmatprep.subr.bf16.mxu0 0
      %743 = vmatpush1.bf16.msra.mxu0 0
      %744 = vmatprep.subr.bf16.mxu0 0
      %745 = vmatpush1.bf16.msra.mxu0 0
      %746 = vmatprep.subr.bf16.mxu0 0
      %747 = vmatpush1.bf16.msra.mxu0 0
      %748 = vmatprep.subr.bf16.mxu0 0
      %749 = vmatpush1.bf16.msra.mxu0 0
      %750 = vmatprep.subr.bf16.mxu0 0
      %751 = vmatpush1.bf16.msra.mxu0 0
      %752 = vmatprep.subr.bf16.mxu0 0
      %753 = vmatpush1.bf16.msra.mxu0 0
      %754 = vmatprep.subr.bf16.mxu0 0
      %755 = vmatpush1.bf16.msra.mxu0 0
      %756 = vmatprep.mubr.bf16.mxu0 0
      %757 = vmatmul.mubr.bf16.gmra.mrb[0].mxu0 %v548
      %v758 = vpop.f32.mrb[0].mxu0
      %v759 = vadd.f32 0.0, %v758
      %v760 = vpop.f32.mrb[0].mxu0
      %v761 = vpop.f32.mrb[0].mxu0
      %v762 = vadd.f32 0.0, %v761
      %v763 = vpop.f32.mrb[0].mxu0
      %764 = vmatprep.mubr.bf16.mxu0 0
      %765 = vmatmul.mubr.bf16.gmra.mrb[0].mxu0 %v549
      %v766 = vpop.f32.mrb[0].mxu0
      %v767 = vadd.f32 0.0, %v766
      %v768 = vpop.f32.mrb[0].mxu0
      %v769 = vpop.f32.mrb[0].mxu0
      %v770 = vadd.f32 0.0, %v769
      %v771 = vpop.f32.mrb[0].mxu0
      %772 = vmatprep.mubr.bf16.mxu0 0
      %773 = vmatmul.mubr.bf16.gmra.mrb[0].mxu0 %v550
      %v774 = vpop.f32.mrb[0].mxu0
      %v775 = vadd.f32 0.0, %v774
      %v776 = vpop.f32.mrb[0].mxu0
      %v777 = vpop.f32.mrb[0].mxu0
      %v778 = vadd.f32 0.0, %v777
      %v779 = vpop.f32.mrb[0].mxu0
      %780 = vmatprep.mubr.bf16.mxu0 0
      %781 = vmatmul.mubr.bf16.gmra.mrb[0].mxu0 %v551
      %v782 = vpop.f32.mrb[0].mxu0
      %v783 = vadd.f32 0.0, %v782
      %v784 = vpop.f32.mrb[0].mxu0
      %v785 = vpop.f32.mrb[0].mxu0
      %v786 = vadd.f32 0.0, %v785
      %v787 = vpop.f32.mrb[0].mxu0
      %788 = vmatprep.mubr.bf16.mxu0 0
      %789 = vmatmul.mubr.bf16.gmra.mrb[0].mxu0 %v552
      %v790 = vpop.f32.mrb[0].mxu0
      %v791 = vadd.f32 0.0, %v790
      %v792 = vpop.f32.mrb[0].mxu0
      %v793 = vpop.f32.mrb[0].mxu0
      %v794 = vadd.f32 0.0, %v793
      %v795 = vpop.f32.mrb[0].mxu0
      %796 = vmatprep.mubr.bf16.mxu0 0
      %797 = vmatmul.mubr.bf16.gmra.mrb[0].mxu0 %v553
      %v798 = vpop.f32.mrb[0].mxu0
      %v799 = vadd.f32 0.0, %v798
      %v800 = vpop.f32.mrb[0].mxu0
      %v801 = vpop.f32.mrb[0].mxu0
      %v802 = vadd.f32 0.0, %v801
      %v803 = vpop.f32.mrb[0].mxu0
      %804 = vmatprep.mubr.bf16.mxu0 0
      %805 = vmatmul.mubr.bf16.gmra.mrb[0].mxu0 %v554
      %v806 = vpop.f32.mrb[0].mxu0
      %v807 = vadd.f32 0.0, %v806
      %v808 = vpop.f32.mrb[0].mxu0
      %v809 = vpop.f32.mrb[0].mxu0
      %v810 = vadd.f32 0.0, %v809
      %v811 = vpop.f32.mrb[0].mxu0
      %812 = vmatprep.mubr.bf16.mxu0 0
      %813 = vmatmul.mubr.bf16.gmra.mrb[0].mxu0 %v555
      %v814 = vpop.f32.mrb[0].mxu0
      %v815 = vadd.f32 0.0, %v814
      %v816 = vpop.f32.mrb[0].mxu0
      %v817 = vpop.f32.mrb[0].mxu0
      %v818 = vadd.f32 0.0, %v817
      %v819 = vpop.f32.mrb[0].mxu0
      %820 = vmatprep.mubr.bf16.mxu0 0
      %821 = vmatmul.mubr.bf16.gmra.mrb[0].mxu0 %v556
      %v822 = vpop.f32.mrb[0].mxu0
      %v823 = vadd.f32 0.0, %v822
      %v824 = vpop.f32.mrb[0].mxu0
      %v825 = vpop.f32.mrb[0].mxu0
      %v826 = vadd.f32 0.0, %v825
      %v827 = vpop.f32.mrb[0].mxu0
      %828 = vmatprep.mubr.bf16.mxu0 0
      %829 = vmatmul.mubr.bf16.gmra.mrb[0].mxu0 %v557
      %v830 = vpop.f32.mrb[0].mxu0
      %v831 = vadd.f32 0.0, %v830
      %v832 = vpop.f32.mrb[0].mxu0
      %v833 = vpop.f32.mrb[0].mxu0
      %v834 = vadd.f32 0.0, %v833
      %v835 = vpop.f32.mrb[0].mxu0
      %836 = vmatprep.mubr.bf16.mxu0 0
      %837 = vmatmul.mubr.bf16.gmra.mrb[0].mxu0 %v558
      %v838 = vpop.f32.mrb[0].mxu0
      %v839 = vadd.f32 0.0, %v838
      %v840 = vpop.f32.mrb[0].mxu0
      %v841 = vpop.f32.mrb[0].mxu0
      %v842 = vadd.f32 0.0, %v841
      %v843 = vpop.f32.mrb[0].mxu0
      %844 = vmatprep.mubr.bf16.mxu0 0
      %845 = vmatmul.mubr.bf16.gmra.mrb[0].mxu0 %v559
      %v846 = vpop.f32.mrb[0].mxu0
      %v847 = vadd.f32 0.0, %v846
      %v848 = vpop.f32.mrb[0].mxu0
      %v849 = vpop.f32.mrb[0].mxu0
      %v850 = vadd.f32 0.0, %v849
      %v851 = vpop.f32.mrb[0].mxu0
      %852 = vmatprep.mubr.bf16.mxu0 0
      %853 = vmatmul.mubr.bf16.gmra.mrb[0].mxu0 %v560
      %v854 = vpop.f32.mrb[0].mxu0
      %v855 = vadd.f32 0.0, %v854
      %v856 = vpop.f32.mrb[0].mxu0
      %v857 = vpop.f32.mrb[0].mxu0
      %v858 = vadd.f32 0.0, %v857
      %v859 = vpop.f32.mrb[0].mxu0
      %860 = vmatprep.mubr.bf16.mxu0 0
      %861 = vmatmul.mubr.bf16.gmra.mrb[0].mxu0 %v561
      %v862 = vpop.f32.mrb[0].mxu0
      %v863 = vadd.f32 0.0, %v862
      %v864 = vpop.f32.mrb[0].mxu0
      %v865 = vpop.f32.mrb[0].mxu0
      %v866 = vadd.f32 0.0, %v865
      %v867 = vpop.f32.mrb[0].mxu0
      %868 = vmatprep.mubr.bf16.mxu0 0
      %869 = vmatmul.mubr.bf16.gmra.mrb[0].mxu0 %v562
      %v870 = vpop.f32.mrb[0].mxu0
      %v871 = vadd.f32 0.0, %v870
      %v872 = vpop.f32.mrb[0].mxu0
      %v873 = vpop.f32.mrb[0].mxu0
      %v874 = vadd.f32 0.0, %v873
      %v875 = vpop.f32.mrb[0].mxu0
      %876 = vmatprep.mubr.bf16.mxu0 0
      %877 = vmatmul.mubr.bf16.gmra.mrb[0].mxu0 %v563
      %v878 = vpop.f32.mrb[0].mxu0
      %v879 = vadd.f32 0.0, %v878
      %v880 = vpop.f32.mrb[0].mxu0
      %v881 = vpop.f32.mrb[0].mxu0
      %v882 = vadd.f32 0.0, %v881
      %v883 = vpop.f32.mrb[0].mxu0
      %884 = vmatprep.mubr.bf16.mxu0 0
      %885 = vmatmul.mubr.bf16.gmra.mrb[0].mxu0 %v564
      %v886 = vpop.f32.mrb[0].mxu0
      %v887 = vadd.f32 0.0, %v886
      %v888 = vpop.f32.mrb[0].mxu0
      %v889 = vpop.f32.mrb[0].mxu0
      %v890 = vadd.f32 0.0, %v889
      %v891 = vpop.f32.mrb[0].mxu0
      %892 = vmatprep.mubr.bf16.mxu0 0
      %893 = vmatmul.mubr.bf16.gmra.mrb[0].mxu0 %v565
      %v894 = vpop.f32.mrb[0].mxu0
      %v895 = vadd.f32 0.0, %v894
      %v896 = vpop.f32.mrb[0].mxu0
      %v897 = vpop.f32.mrb[0].mxu0
      %v898 = vadd.f32 0.0, %v897
      %v899 = vpop.f32.mrb[0].mxu0
      %900 = vmatprep.mubr.bf16.mxu0 0
      %901 = vmatmul.mubr.bf16.gmra.mrb[0].mxu0 %v566
      %v902 = vpop.f32.mrb[0].mxu0
      %v903 = vadd.f32 0.0, %v902
      %v904 = vpop.f32.mrb[0].mxu0
      %v905 = vpop.f32.mrb[0].mxu0
      %v906 = vadd.f32 0.0, %v905
      %v907 = vpop.f32.mrb[0].mxu0
      %908 = vmatprep.mubr.bf16.mxu0 0
      %909 = vmatmul.mubr.bf16.gmra.mrb[0].mxu0 %v567
      %v910 = vpop.f32.mrb[0].mxu0
      %v911 = vadd.f32 0.0, %v910
      %v912 = vpop.f32.mrb[0].mxu0
      %v913 = vpop.f32.mrb[0].mxu0
      %v914 = vadd.f32 0.0, %v913
      %v915 = vpop.f32.mrb[0].mxu0
      %916 = vmatprep.mubr.bf16.mxu0 0
      %917 = vmatmul.mubr.bf16.gmra.mrb[0].mxu0 %v568
      %v918 = vpop.f32.mrb[0].mxu0
      %v919 = vadd.f32 0.0, %v918
      %v920 = vpop.f32.mrb[0].mxu0
      %v921 = vpop.f32.mrb[0].mxu0
      %v922 = vadd.f32 0.0, %v921
      %v923 = vpop.f32.mrb[0].mxu0
      %924 = vmatprep.mubr.bf16.mxu0 0
      %925 = vmatmul.mubr.bf16.gmra.mrb[0].mxu0 %v569
      %v926 = vpop.f32.mrb[0].mxu0
      %v927 = vadd.f32 0.0, %v926
      %v928 = vpop.f32.mrb[0].mxu0
      %v929 = vpop.f32.mrb[0].mxu0
      %v930 = vadd.f32 0.0, %v929
      %v931 = vpop.f32.mrb[0].mxu0
      %932 = vmatprep.mubr.bf16.mxu0 0
      %933 = vmatmul.mubr.bf16.gmra.mrb[0].mxu0 %v570
      %v934 = vpop.f32.mrb[0].mxu0
      %v935 = vadd.f32 0.0, %v934
      %v936 = vpop.f32.mrb[0].mxu0
      %v937 = vpop.f32.mrb[0].mxu0
      %v938 = vadd.f32 0.0, %v937
      %v939 = vpop.f32.mrb[0].mxu0
      %940 = vmatprep.mubr.bf16.mxu0 0
      %941 = vmatmul.mubr.bf16.gmra.mrb[0].mxu0 %v571
      %v942 = vpop.f32.mrb[0].mxu0
      %v943 = vadd.f32 0.0, %v942
      %v944 = vpop.f32.mrb[0].mxu0
      %v945 = vpop.f32.mrb[0].mxu0
      %v946 = vadd.f32 0.0, %v945
      %v947 = vpop.f32.mrb[0].mxu0
      %948 = vmatprep.mubr.bf16.mxu0 0
      %949 = vmatmul.mubr.bf16.gmra.mrb[0].mxu0 %v572
      %v950 = vpop.f32.mrb[0].mxu0
      %v951 = vadd.f32 0.0, %v950
      %v952 = vpop.f32.mrb[0].mxu0
      %v953 = vpop.f32.mrb[0].mxu0
      %v954 = vadd.f32 0.0, %v953
      %v955 = vpop.f32.mrb[0].mxu0
      %956 = vmatprep.mubr.bf16.mxu0 0
      %957 = vmatmul.mubr.bf16.gmra.mrb[0].mxu0 %v573
      %v958 = vpop.f32.mrb[0].mxu0
      %v959 = vadd.f32 0.0, %v958
      %v960 = vpop.f32.mrb[0].mxu0
      %v961 = vpop.f32.mrb[0].mxu0
      %v962 = vadd.f32 0.0, %v961
      %v963 = vpop.f32.mrb[0].mxu0
      %964 = vmatprep.mubr.bf16.mxu0 0
      %965 = vmatmul.mubr.bf16.gmra.mrb[0].mxu0 %v574
      %v966 = vpop.f32.mrb[0].mxu0
      %v967 = vadd.f32 0.0, %v966
      %v968 = vpop.f32.mrb[0].mxu0
      %v969 = vpop.f32.mrb[0].mxu0
      %v970 = vadd.f32 0.0, %v969
      %v971 = vpop.f32.mrb[0].mxu0
      %972 = vmatprep.mubr.bf16.mxu0 0
      %973 = vmatmul.mubr.bf16.gmra.mrb[0].mxu0 %v575
      %v974 = vpop.f32.mrb[0].mxu0
      %v975 = vadd.f32 0.0, %v974
      %v976 = vpop.f32.mrb[0].mxu0
      %v977 = vpop.f32.mrb[0].mxu0
      %v978 = vadd.f32 0.0, %v977
      %v979 = vpop.f32.mrb[0].mxu0
      %980 = vmatprep.mubr.bf16.mxu0 0
      %981 = vmatmul.mubr.bf16.gmra.mrb[0].mxu0 %v576
      %v982 = vpop.f32.mrb[0].mxu0
      %v983 = vadd.f32 0.0, %v982
      %v984 = vpop.f32.mrb[0].mxu0
      %v985 = vpop.f32.mrb[0].mxu0
      %v986 = vadd.f32 0.0, %v985
      %v987 = vpop.f32.mrb[0].mxu0
      %988 = vmatprep.mubr.bf16.mxu0 0
      %989 = vmatmul.mubr.bf16.gmra.mrb[0].mxu0 %v577
      %v990 = vpop.f32.mrb[0].mxu0
      %v991 = vadd.f32 0.0, %v990
      %v992 = vpop.f32.mrb[0].mxu0
      %v993 = vpop.f32.mrb[0].mxu0
      %v994 = vadd.f32 0.0, %v993
      %v995 = vpop.f32.mrb[0].mxu0
      %996 = vmatprep.mubr.bf16.mxu0 0
      %997 = vmatmul.mubr.bf16.gmra.mrb[0].mxu0 %v578
      %v998 = vpop.f32.mrb[0].mxu0
      %v999 = vadd.f32 0.0, %v998
      %v1000 = vpop.f32.mrb[0].mxu0
      %v1001 = vpop.f32.mrb[0].mxu0
      %v1002 = vadd.f32 0.0, %v1001
      %v1003 = vpop.f32.mrb[0].mxu0
      %1004 = vmatprep.mubr.bf16.mxu0 0
      %1005 = vmatmul.mubr.bf16.gmra.mrb[0].mxu0 %v579
      %v1006 = vpop.f32.mrb[0].mxu0
      %v1007 = vadd.f32 0.0, %v1006
      %v1008 = vpop.f32.mrb[0].mxu0
      %v1009 = vpop.f32.mrb[0].mxu0
      %v1010 = vadd.f32 0.0, %v1009
      %v1011 = vpop.f32.mrb[0].mxu0
      %1012 = vmatprep.mubr.bf16.mxu0 0
      %1013 = vmatmul.mubr.bf16.gmra.mrb[0].mxu0 %v580
      %v1014 = vpop.f32.mrb[0].mxu0
      %v1015 = vadd.f32 0.0, %v1014
      %v1016 = vpop.f32.mrb[0].mxu0
      %v1017 = vpop.f32.mrb[0].mxu0
      %v1018 = vadd.f32 0.0, %v1017
      %v1019 = vpop.f32.mrb[0].mxu0
      %1020 = vmatprep.mubr.bf16.mxu0 0
      %1021 = vmatmul.mubr.bf16.gmra.mrb[0].mxu0 %v581
      %v1022 = vpop.f32.mrb[0].mxu0
      %v1023 = vadd.f32 0.0, %v1022
      %v1024 = vpop.f32.mrb[0].mxu0
      %v1025 = vpop.f32.mrb[0].mxu0
      %v1026 = vadd.f32 0.0, %v1025
      %v1027 = vpop.f32.mrb[0].mxu0
      %1028 = vmatprep.mubr.bf16.mxu0 0
      %1029 = vmatmul.mubr.bf16.gmra.mrb[0].mxu0 %v582
      %v1030 = vpop.f32.mrb[0].mxu0
      %v1031 = vadd.f32 0.0, %v1030
      %v1032 = vpop.f32.mrb[0].mxu0
      %v1033 = vpop.f32.mrb[0].mxu0
      %v1034 = vadd.f32 0.0, %v1033
      %v1035 = vpop.f32.mrb[0].mxu0
      %1036 = vmatprep.mubr.bf16.mxu0 0
      %1037 = vmatmul.mubr.bf16.gmra.mrb[0].mxu0 %v583
      %v1038 = vpop.f32.mrb[0].mxu0
      %v1039 = vadd.f32 0.0, %v1038
      %v1040 = vpop.f32.mrb[0].mxu0
      %v1041 = vpop.f32.mrb[0].mxu0
      %v1042 = vadd.f32 0.0, %v1041
      %v1043 = vpop.f32.mrb[0].mxu0
      %1044 = vmatprep.mubr.bf16.mxu0 0
      %1045 = vmatmul.mubr.bf16.gmra.mrb[0].mxu0 %v584
      %v1046 = vpop.f32.mrb[0].mxu0
      %v1047 = vadd.f32 0.0, %v1046
      %v1048 = vpop.f32.mrb[0].mxu0
      %v1049 = vpop.f32.mrb[0].mxu0
      %v1050 = vadd.f32 0.0, %v1049
      %v1051 = vpop.f32.mrb[0].mxu0
      %1052 = vmatprep.mubr.bf16.mxu0 0
      %1053 = vmatmul.mubr.bf16.gmra.mrb[0].mxu0 %v585
      %v1054 = vpop.f32.mrb[0].mxu0
      %v1055 = vadd.f32 0.0, %v1054
      %v1056 = vpop.f32.mrb[0].mxu0
      %v1057 = vpop.f32.mrb[0].mxu0
      %v1058 = vadd.f32 0.0, %v1057
      %v1059 = vpop.f32.mrb[0].mxu0
      %1060 = vmatprep.mubr.bf16.mxu0 0
      %1061 = vmatmul.mubr.bf16.gmra.mrb[0].mxu0 %v586
      %v1062 = vpop.f32.mrb[0].mxu0
      %v1063 = vadd.f32 0.0, %v1062
      %v1064 = vpop.f32.mrb[0].mxu0
      %v1065 = vpop.f32.mrb[0].mxu0
      %v1066 = vadd.f32 0.0, %v1065
      %v1067 = vpop.f32.mrb[0].mxu0
      %1068 = vmatprep.mubr.bf16.mxu0 0
      %1069 = vmatmul.mubr.bf16.gmra.mrb[0].mxu0 %v587
      %v1070 = vpop.f32.mrb[0].mxu0
      %v1071 = vadd.f32 0.0, %v1070
      %v1072 = vpop.f32.mrb[0].mxu0
      %v1073 = vpop.f32.mrb[0].mxu0
      %v1074 = vadd.f32 0.0, %v1073
      %v1075 = vpop.f32.mrb[0].mxu0
      %1076 = vmatprep.mubr.bf16.mxu0 0
      %1077 = vmatmul.mubr.bf16.gmra.mrb[0].mxu0 %v588
      %v1078 = vpop.f32.mrb[0].mxu0
      %v1079 = vadd.f32 0.0, %v1078
      %v1080 = vpop.f32.mrb[0].mxu0
      %v1081 = vpop.f32.mrb[0].mxu0
      %v1082 = vadd.f32 0.0, %v1081
      %v1083 = vpop.f32.mrb[0].mxu0
      %1084 = vmatprep.mubr.bf16.mxu0 0
      %1085 = vmatmul.mubr.bf16.gmra.mrb[0].mxu0 %v589
      %v1086 = vpop.f32.mrb[0].mxu0
      %v1087 = vadd.f32 0.0, %v1086
      %v1088 = vpop.f32.mrb[0].mxu0
      %v1089 = vpop.f32.mrb[0].mxu0
      %v1090 = vadd.f32 0.0, %v1089
      %v1091 = vpop.f32.mrb[0].mxu0
      %1092 = vmatprep.mubr.bf16.mxu0 0
      %1093 = vmatmul.mubr.bf16.gmra.mrb[0].mxu0 %v590
      %v1094 = vpop.f32.mrb[0].mxu0
      %v1095 = vadd.f32 0.0, %v1094
      %v1096 = vpop.f32.mrb[0].mxu0
      %v1097 = vpop.f32.mrb[0].mxu0
      %v1098 = vadd.f32 0.0, %v1097
      %v1099 = vpop.f32.mrb[0].mxu0
      %1100 = vmatprep.mubr.bf16.mxu0 0
      %1101 = vmatmul.mubr.bf16.gmra.mrb[0].mxu0 %v591
      %v1102 = vpop.f32.mrb[0].mxu0
      %v1103 = vadd.f32 0.0, %v1102
      %v1104 = vpop.f32.mrb[0].mxu0
      %v1105 = vpop.f32.mrb[0].mxu0
      %v1106 = vadd.f32 0.0, %v1105
      %v1107 = vpop.f32.mrb[0].mxu0
      %1108 = vmatprep.mubr.bf16.mxu0 0
      %1109 = vmatmul.mubr.bf16.gmra.mrb[0].mxu0 %v592
      %v1110 = vpop.f32.mrb[0].mxu0
      %v1111 = vadd.f32 0.0, %v1110
      %v1112 = vpop.f32.mrb[0].mxu0
      %v1113 = vpop.f32.mrb[0].mxu0
      %v1114 = vadd.f32 0.0, %v1113
      %v1115 = vpop.f32.mrb[0].mxu0
      %1116 = vmatprep.mubr.bf16.mxu0 0
      %1117 = vmatmul.mubr.bf16.gmra.mrb[0].mxu0 %v593
      %v1118 = vpop.f32.mrb[0].mxu0
      %v1119 = vadd.f32 0.0, %v1118
      %v1120 = vpop.f32.mrb[0].mxu0
      %v1121 = vpop.f32.mrb[0].mxu0
      %v1122 = vadd.f32 0.0, %v1121
      %v1123 = vpop.f32.mrb[0].mxu0
      %1124 = vmatprep.mubr.bf16.mxu0 0
      %1125 = vmatmul.mubr.bf16.gmra.mrb[0].mxu0 %v594
      %v1126 = vpop.f32.mrb[0].mxu0
      %v1127 = vadd.f32 0.0, %v1126
      %v1128 = vpop.f32.mrb[0].mxu0
      %v1129 = vpop.f32.mrb[0].mxu0
      %v1130 = vadd.f32 0.0, %v1129
      %v1131 = vpop.f32.mrb[0].mxu0
      %1132 = vmatprep.mubr.bf16.mxu0 0
      %1133 = vmatmul.mubr.bf16.gmra.mrb[0].mxu0 %v595
      %v1134 = vpop.f32.mrb[0].mxu0
      %v1135 = vadd.f32 0.0, %v1134
      %v1136 = vpop.f32.mrb[0].mxu0
      %v1137 = vpop.f32.mrb[0].mxu0
      %v1138 = vadd.f32 0.0, %v1137
      %v1139 = vpop.f32.mrb[0].mxu0
      %1140 = vmatprep.mubr.bf16.mxu0 0
      %1141 = vmatmul.mubr.bf16.gmra.mrb[0].mxu0 %v596
      %v1142 = vpop.f32.mrb[0].mxu0
      %v1143 = vadd.f32 0.0, %v1142
      %v1144 = vpop.f32.mrb[0].mxu0
      %v1145 = vpop.f32.mrb[0].mxu0
      %v1146 = vadd.f32 0.0, %v1145
      %v1147 = vpop.f32.mrb[0].mxu0
      %1148 = vmatprep.mubr.bf16.mxu0 0
      %1149 = vmatmul.mubr.bf16.gmra.mrb[0].mxu0 %v597
      %v1150 = vpop.f32.mrb[0].mxu0
      %v1151 = vadd.f32 0.0, %v1150
      %v1152 = vpop.f32.mrb[0].mxu0
      %v1153 = vpop.f32.mrb[0].mxu0
      %v1154 = vadd.f32 0.0, %v1153
      %v1155 = vpop.f32.mrb[0].mxu0
      %1156 = vmatprep.mubr.bf16.mxu0 0
      %1157 = vmatmul.mubr.bf16.gmra.mrb[0].mxu0 %v598
      %v1158 = vpop.f32.mrb[0].mxu0
      %v1159 = vadd.f32 0.0, %v1158
      %v1160 = vpop.f32.mrb[0].mxu0
      %v1161 = vpop.f32.mrb[0].mxu0
      %v1162 = vadd.f32 0.0, %v1161
      %v1163 = vpop.f32.mrb[0].mxu0
      %1164 = vmatprep.mubr.bf16.mxu0 0
      %1165 = vmatmul.mubr.bf16.gmra.mrb[0].mxu0 %v599
      %v1166 = vpop.f32.mrb[0].mxu0
      %v1167 = vadd.f32 0.0, %v1166
      %v1168 = vpop.f32.mrb[0].mxu0
      %v1169 = vpop.f32.mrb[0].mxu0
      %v1170 = vadd.f32 0.0, %v1169
      %v1171 = vpop.f32.mrb[0].mxu0
      %1172 = vmatprep.mubr.bf16.mxu0 0
      %1173 = vmatmul.mubr.bf16.gmra.mrb[0].mxu0 %v600
      %v1174 = vpop.f32.mrb[0].mxu0
      %v1175 = vadd.f32 0.0, %v1174
      %v1176 = vpop.f32.mrb[0].mxu0
      %v1177 = vpop.f32.mrb[0].mxu0
      %v1178 = vadd.f32 0.0, %v1177
      %v1179 = vpop.f32.mrb[0].mxu0
      %1180 = vmatprep.mubr.bf16.mxu0 0
      %1181 = vmatmul.mubr.bf16.gmra.mrb[0].mxu0 %v601
      %v1182 = vpop.f32.mrb[0].mxu0
      %v1183 = vadd.f32 0.0, %v1182
      %v1184 = vpop.f32.mrb[0].mxu0
      %v1185 = vpop.f32.mrb[0].mxu0
      %v1186 = vadd.f32 0.0, %v1185
      %v1187 = vpop.f32.mrb[0].mxu0
      %1188 = vmatprep.mubr.bf16.mxu0 0
      %1189 = vmatmul.mubr.bf16.gmra.mrb[0].mxu0 %v602
      %v1190 = vpop.f32.mrb[0].mxu0
      %v1191 = vadd.f32 0.0, %v1190
      %v1192 = vpop.f32.mrb[0].mxu0
      %v1193 = vpop.f32.mrb[0].mxu0
      %v1194 = vadd.f32 0.0, %v1193
      %v1195 = vpop.f32.mrb[0].mxu0
      %1196 = vmatprep.mubr.bf16.mxu0 0
      %1197 = vmatmul.mubr.bf16.gmra.mrb[0].mxu0 %v603
      %v1198 = vpop.f32.mrb[0].mxu0
      %v1199 = vadd.f32 0.0, %v1198
      %v1200 = vpop.f32.mrb[0].mxu0
      %v1201 = vpop.f32.mrb[0].mxu0
      %v1202 = vadd.f32 0.0, %v1201
      %v1203 = vpop.f32.mrb[0].mxu0
      %1204 = vmatprep.mubr.bf16.mxu0 0
      %1205 = vmatmul.mubr.bf16.gmra.mrb[0].mxu0 %v604
      %v1206 = vpop.f32.mrb[0].mxu0
      %v1207 = vadd.f32 0.0, %v1206
      %v1208 = vpop.f32.mrb[0].mxu0
      %v1209 = vpop.f32.mrb[0].mxu0
      %v1210 = vadd.f32 0.0, %v1209
      %v1211 = vpop.f32.mrb[0].mxu0
      %1212 = vmatprep.mubr.bf16.mxu0 0
      %1213 = vmatmul.mubr.bf16.gmra.mrb[0].mxu0 %v605
      %v1214 = vpop.f32.mrb[0].mxu0
      %v1215 = vadd.f32 0.0, %v1214
      %v1216 = vpop.f32.mrb[0].mxu0
      %v1217 = vpop.f32.mrb[0].mxu0
      %v1218 = vadd.f32 0.0, %v1217
      %v1219 = vpop.f32.mrb[0].mxu0
      %1220 = vmatprep.mubr.bf16.mxu0 0
      %1221 = vmatmul.mubr.bf16.gmra.mrb[0].mxu0 %v606
      %v1222 = vpop.f32.mrb[0].mxu0
      %v1223 = vadd.f32 0.0, %v1222
      %v1224 = vpop.f32.mrb[0].mxu0
      %v1225 = vpop.f32.mrb[0].mxu0
      %v1226 = vadd.f32 0.0, %v1225
      %v1227 = vpop.f32.mrb[0].mxu0
      %1228 = vmatprep.mubr.bf16.mxu0 0
      %1229 = vmatmul.mubr.bf16.gmra.mrb[0].mxu0 %v607
      %v1230 = vpop.f32.mrb[0].mxu0
      %v1231 = vadd.f32 0.0, %v1230
      %v1232 = vpop.f32.mrb[0].mxu0
      %v1233 = vpop.f32.mrb[0].mxu0
      %v1234 = vadd.f32 0.0, %v1233
      %v1235 = vpop.f32.mrb[0].mxu0
      %1236 = vmatprep.mubr.bf16.mxu0 0
      %1237 = vmatmul.mubr.bf16.gmra.mrb[0].mxu0 %v608
      %v1238 = vpop.f32.mrb[0].mxu0
      %v1239 = vadd.f32 0.0, %v1238
      %v1240 = vpop.f32.mrb[0].mxu0
      %v1241 = vpop.f32.mrb[0].mxu0
      %v1242 = vadd.f32 0.0, %v1241
      %v1243 = vpop.f32.mrb[0].mxu0
      %1244 = vmatprep.mubr.bf16.mxu0 0
      %1245 = vmatmul.mubr.bf16.gmra.mrb[0].mxu0 %v609
      %v1246 = vpop.f32.mrb[0].mxu0
      %v1247 = vadd.f32 0.0, %v1246
      %v1248 = vpop.f32.mrb[0].mxu0
      %v1249 = vpop.f32.mrb[0].mxu0
      %v1250 = vadd.f32 0.0, %v1249
      %v1251 = vpop.f32.mrb[0].mxu0
      %1252 = vmatprep.mubr.bf16.mxu0 0
      %1253 = vmatmul.mubr.bf16.gmra.mrb[0].mxu0 %v610
      %v1254 = vpop.f32.mrb[0].mxu0
      %v1255 = vadd.f32 0.0, %v1254
      %v1256 = vpop.f32.mrb[0].mxu0
      %v1257 = vpop.f32.mrb[0].mxu0
      %v1258 = vadd.f32 0.0, %v1257
      %v1259 = vpop.f32.mrb[0].mxu0
      %1260 = vmatprep.mubr.bf16.mxu0 0
      %1261 = vmatmul.mubr.bf16.gmra.mrb[0].mxu0 %v611
      %v1262 = vpop.f32.mrb[0].mxu0
      %v1263 = vadd.f32 0.0, %v1262
      %v1264 = vpop.f32.mrb[0].mxu0
      %v1265 = vpop.f32.mrb[0].mxu0
      %v1266 = vadd.f32 0.0, %v1265
      %v1267 = vpop.f32.mrb[0].mxu0
      %1268 = vdwg.mxu0
      %vm1269 = vcmp.gt.f32.partialorder %v759, 0.0
      %vm1270 = vcmp.gt.f32.partialorder %v762, 0.0
      %vm1271 = vcmp.gt.f32.partialorder %v767, 0.0
      %vm1272 = vcmp.gt.f32.partialorder %v770, 0.0
      %vm1273 = vcmp.gt.f32.partialorder %v775, 0.0
      %vm1274 = vcmp.gt.f32.partialorder %v778, 0.0
      %vm1275 = vcmp.gt.f32.partialorder %v783, 0.0
      %vm1276 = vcmp.gt.f32.partialorder %v786, 0.0
      %vm1277 = vcmp.gt.f32.partialorder %v791, 0.0
      %vm1278 = vcmp.gt.f32.partialorder %v794, 0.0
      %vm1279 = vcmp.gt.f32.partialorder %v799, 0.0
      %vm1280 = vcmp.gt.f32.partialorder %v802, 0.0
      %vm1281 = vcmp.gt.f32.partialorder %v807, 0.0
      %vm1282 = vcmp.gt.f32.partialorder %v810, 0.0
      %vm1283 = vcmp.gt.f32.partialorder %v815, 0.0
      %vm1284 = vcmp.gt.f32.partialorder %v818, 0.0
      %vm1285 = vcmp.gt.f32.partialorder %v823, 0.0
      %vm1286 = vcmp.gt.f32.partialorder %v826, 0.0
      %vm1287 = vcmp.gt.f32.partialorder %v831, 0.0
      %vm1288 = vcmp.gt.f32.partialorder %v834, 0.0
      %vm1289 = vcmp.gt.f32.partialorder %v839, 0.0
      %vm1290 = vcmp.gt.f32.partialorder %v842, 0.0
      %vm1291 = vcmp.gt.f32.partialorder %v847, 0.0
      %vm1292 = vcmp.gt.f32.partialorder %v850, 0.0
      %vm1293 = vcmp.gt.f32.partialorder %v855, 0.0
      %vm1294 = vcmp.gt.f32.partialorder %v858, 0.0
      %vm1295 = vcmp.gt.f32.partialorder %v863, 0.0
      %vm1296 = vcmp.gt.f32.partialorder %v866, 0.0
      %vm1297 = vcmp.gt.f32.partialorder %v871, 0.0
      %vm1298 = vcmp.gt.f32.partialorder %v874, 0.0
      %vm1299 = vcmp.gt.f32.partialorder %v879, 0.0
      %vm1300 = vcmp.gt.f32.partialorder %v882, 0.0
      %vm1301 = vcmp.gt.f32.partialorder %v887, 0.0
      %vm1302 = vcmp.gt.f32.partialorder %v890, 0.0
      %vm1303 = vcmp.gt.f32.partialorder %v895, 0.0
      %vm1304 = vcmp.gt.f32.partialorder %v898, 0.0
      %vm1305 = vcmp.gt.f32.partialorder %v903, 0.0
      %vm1306 = vcmp.gt.f32.partialorder %v906, 0.0
      %vm1307 = vcmp.gt.f32.partialorder %v911, 0.0
      %vm1308 = vcmp.gt.f32.partialorder %v914, 0.0
      %vm1309 = vcmp.gt.f32.partialorder %v919, 0.0
      %vm1310 = vcmp.gt.f32.partialorder %v922, 0.0
      %vm1311 = vcmp.gt.f32.partialorder %v927, 0.0
      %vm1312 = vcmp.gt.f32.partialorder %v930, 0.0
      %vm1313 = vcmp.gt.f32.partialorder %v935, 0.0
      %vm1314 = vcmp.gt.f32.partialorder %v938, 0.0
      %vm1315 = vcmp.gt.f32.partialorder %v943, 0.0
      %vm1316 = vcmp.gt.f32.partialorder %v946, 0.0
      %vm1317 = vcmp.gt.f32.partialorder %v951, 0.0
      %vm1318 = vcmp.gt.f32.partialorder %v954, 0.0
      %vm1319 = vcmp.gt.f32.partialorder %v959, 0.0
      %vm1320 = vcmp.gt.f32.partialorder %v962, 0.0
      %vm1321 = vcmp.gt.f32.partialorder %v967, 0.0
      %vm1322 = vcmp.gt.f32.partialorder %v970, 0.0
      %vm1323 = vcmp.gt.f32.partialorder %v975, 0.0
      %vm1324 = vcmp.gt.f32.partialorder %v978, 0.0
      %vm1325 = vcmp.gt.f32.partialorder %v983, 0.0
      %vm1326 = vcmp.gt.f32.partialorder %v986, 0.0
      %vm1327 = vcmp.gt.f32.partialorder %v991, 0.0
      %vm1328 = vcmp.gt.f32.partialorder %v994, 0.0
      %vm1329 = vcmp.gt.f32.partialorder %v999, 0.0
      %vm1330 = vcmp.gt.f32.partialorder %v1002, 0.0
      %vm1331 = vcmp.gt.f32.partialorder %v1007, 0.0
      %vm1332 = vcmp.gt.f32.partialorder %v1010, 0.0
      %vm1333 = vcmp.gt.f32.partialorder %v1015, 0.0
      %vm1334 = vcmp.gt.f32.partialorder %v1018, 0.0
      %vm1335 = vcmp.gt.f32.partialorder %v1023, 0.0
      %vm1336 = vcmp.gt.f32.partialorder %v1026, 0.0
      %vm1337 = vcmp.gt.f32.partialorder %v1031, 0.0
      %vm1338 = vcmp.gt.f32.partialorder %v1034, 0.0
      %vm1339 = vcmp.gt.f32.partialorder %v1039, 0.0
      %vm1340 = vcmp.gt.f32.partialorder %v1042, 0.0
      %vm1341 = vcmp.gt.f32.partialorder %v1047, 0.0
      %vm1342 = vcmp.gt.f32.partialorder %v1050, 0.0
      %vm1343 = vcmp.gt.f32.partialorder %v1055, 0.0
      %vm1344 = vcmp.gt.f32.partialorder %v1058, 0.0
      %vm1345 = vcmp.gt.f32.partialorder %v1063, 0.0
      %vm1346 = vcmp.gt.f32.partialorder %v1066, 0.0
      %vm1347 = vcmp.gt.f32.partialorder %v1071, 0.0
      %vm1348 = vcmp.gt.f32.partialorder %v1074, 0.0
      %vm1349 = vcmp.gt.f32.partialorder %v1079, 0.0
      %vm1350 = vcmp.gt.f32.partialorder %v1082, 0.0
      %vm1351 = vcmp.gt.f32.partialorder %v1087, 0.0
      %vm1352 = vcmp.gt.f32.partialorder %v1090, 0.0
      %vm1353 = vcmp.gt.f32.partialorder %v1095, 0.0
      %vm1354 = vcmp.gt.f32.partialorder %v1098, 0.0
      %vm1355 = vcmp.gt.f32.partialorder %v1103, 0.0
      %vm1356 = vcmp.gt.f32.partialorder %v1106, 0.0
      %vm1357 = vcmp.gt.f32.partialorder %v1111, 0.0
      %vm1358 = vcmp.gt.f32.partialorder %v1114, 0.0
      %vm1359 = vcmp.gt.f32.partialorder %v1119, 0.0
      %vm1360 = vcmp.gt.f32.partialorder %v1122, 0.0
      %vm1361 = vcmp.gt.f32.partialorder %v1127, 0.0
      %vm1362 = vcmp.gt.f32.partialorder %v1130, 0.0
      %vm1363 = vcmp.gt.f32.partialorder %v1135, 0.0
      %vm1364 = vcmp.gt.f32.partialorder %v1138, 0.0
      %vm1365 = vcmp.gt.f32.partialorder %v1143, 0.0
      %vm1366 = vcmp.gt.f32.partialorder %v1146, 0.0
      %vm1367 = vcmp.gt.f32.partialorder %v1151, 0.0
      %vm1368 = vcmp.gt.f32.partialorder %v1154, 0.0
      %vm1369 = vcmp.gt.f32.partialorder %v1159, 0.0
      %vm1370 = vcmp.gt.f32.partialorder %v1162, 0.0
      %vm1371 = vcmp.gt.f32.partialorder %v1167, 0.0
      %vm1372 = vcmp.gt.f32.partialorder %v1170, 0.0
      %vm1373 = vcmp.gt.f32.partialorder %v1175, 0.0
      %vm1374 = vcmp.gt.f32.partialorder %v1178, 0.0
      %vm1375 = vcmp.gt.f32.partialorder %v1183, 0.0
      %vm1376 = vcmp.gt.f32.partialorder %v1186, 0.0
      %vm1377 = vcmp.gt.f32.partialorder %v1191, 0.0
      %vm1378 = vcmp.gt.f32.partialorder %v1194, 0.0
      %vm1379 = vcmp.gt.f32.partialorder %v1199, 0.0
      %vm1380 = vcmp.gt.f32.partialorder %v1202, 0.0
      %vm1381 = vcmp.gt.f32.partialorder %v1207, 0.0
      %vm1382 = vcmp.gt.f32.partialorder %v1210, 0.0
      %vm1383 = vcmp.gt.f32.partialorder %v1215, 0.0
      %vm1384 = vcmp.gt.f32.partialorder %v1218, 0.0
      %vm1385 = vcmp.gt.f32.partialorder %v1223, 0.0
      %vm1386 = vcmp.gt.f32.partialorder %v1226, 0.0
      %vm1387 = vcmp.gt.f32.partialorder %v1231, 0.0
      %vm1388 = vcmp.gt.f32.partialorder %v1234, 0.0
      %vm1389 = vcmp.gt.f32.partialorder %v1239, 0.0
      %vm1390 = vcmp.gt.f32.partialorder %v1242, 0.0
      %vm1391 = vcmp.gt.f32.partialorder %v1247, 0.0
      %vm1392 = vcmp.gt.f32.partialorder %v1250, 0.0
      %vm1393 = vcmp.gt.f32.partialorder %v1255, 0.0
      %vm1394 = vcmp.gt.f32.partialorder %v1258, 0.0
      %vm1395 = vcmp.gt.f32.partialorder %v1263, 0.0
      %vm1396 = vcmp.gt.f32.partialorder %v1266, 0.0
      %v1397 = vmul.f32 %v759, 0.2
      %v1398 = vmul.f32 %v762, 0.2
      %v1399 = vmul.f32 %v767, 0.2
      %v1400 = vmul.f32 %v770, 0.2
      %v1401 = vmul.f32 %v775, 0.2
      %v1402 = vmul.f32 %v778, 0.2
      %v1403 = vmul.f32 %v783, 0.2
      %v1404 = vmul.f32 %v786, 0.2
      %v1405 = vmul.f32 %v791, 0.2
      %v1406 = vmul.f32 %v794, 0.2
      %v1407 = vmul.f32 %v799, 0.2
      %v1408 = vmul.f32 %v802, 0.2
      %v1409 = vmul.f32 %v807, 0.2
      %v1410 = vmul.f32 %v810, 0.2
      %v1411 = vmul.f32 %v815, 0.2
      %v1412 = vmul.f32 %v818, 0.2
      %v1413 = vmul.f32 %v823, 0.2
      %v1414 = vmul.f32 %v826, 0.2
      %v1415 = vmul.f32 %v831, 0.2
      %v1416 = vmul.f32 %v834, 0.2
      %v1417 = vmul.f32 %v839, 0.2
      %v1418 = vmul.f32 %v842, 0.2
      %v1419 = vmul.f32 %v847, 0.2
      %v1420 = vmul.f32 %v850, 0.2
      %v1421 = vmul.f32 %v855, 0.2
      %v1422 = vmul.f32 %v858, 0.2
      %v1423 = vmul.f32 %v863, 0.2
      %v1424 = vmul.f32 %v866, 0.2
      %v1425 = vmul.f32 %v871, 0.2
      %v1426 = vmul.f32 %v874, 0.2
      %v1427 = vmul.f32 %v879, 0.2
      %v1428 = vmul.f32 %v882, 0.2
      %v1429 = vmul.f32 %v887, 0.2
      %v1430 = vmul.f32 %v890, 0.2
      %v1431 = vmul.f32 %v895, 0.2
      %v1432 = vmul.f32 %v898, 0.2
      %v1433 = vmul.f32 %v903, 0.2
      %v1434 = vmul.f32 %v906, 0.2
      %v1435 = vmul.f32 %v911, 0.2
      %v1436 = vmul.f32 %v914, 0.2
      %v1437 = vmul.f32 %v919, 0.2
      %v1438 = vmul.f32 %v922, 0.2
      %v1439 = vmul.f32 %v927, 0.2
      %v1440 = vmul.f32 %v930, 0.2
      %v1441 = vmul.f32 %v935, 0.2
      %v1442 = vmul.f32 %v938, 0.2
      %v1443 = vmul.f32 %v943, 0.2
      %v1444 = vmul.f32 %v946, 0.2
      %v1445 = vmul.f32 %v951, 0.2
      %v1446 = vmul.f32 %v954, 0.2
      %v1447 = vmul.f32 %v959, 0.2
      %v1448 = vmul.f32 %v962, 0.2
      %v1449 = vmul.f32 %v967, 0.2
      %v1450 = vmul.f32 %v970, 0.2
      %v1451 = vmul.f32 %v975, 0.2
      %v1452 = vmul.f32 %v978, 0.2
      %v1453 = vmul.f32 %v983, 0.2
      %v1454 = vmul.f32 %v986, 0.2
      %v1455 = vmul.f32 %v991, 0.2
      %v1456 = vmul.f32 %v994, 0.2
      %v1457 = vmul.f32 %v999, 0.2
      %v1458 = vmul.f32 %v1002, 0.2
      %v1459 = vmul.f32 %v1007, 0.2
      %v1460 = vmul.f32 %v1010, 0.2
      %v1461 = vmul.f32 %v1015, 0.2
      %v1462 = vmul.f32 %v1018, 0.2
      %v1463 = vmul.f32 %v1023, 0.2
      %v1464 = vmul.f32 %v1026, 0.2
      %v1465 = vmul.f32 %v1031, 0.2
      %v1466 = vmul.f32 %v1034, 0.2
      %v1467 = vmul.f32 %v1039, 0.2
      %v1468 = vmul.f32 %v1042, 0.2
      %v1469 = vmul.f32 %v1047, 0.2
      %v1470 = vmul.f32 %v1050, 0.2
      %v1471 = vmul.f32 %v1055, 0.2
      %v1472 = vmul.f32 %v1058, 0.2
      %v1473 = vmul.f32 %v1063, 0.2
      %v1474 = vmul.f32 %v1066, 0.2
      %v1475 = vmul.f32 %v1071, 0.2
      %v1476 = vmul.f32 %v1074, 0.2
      %v1477 = vmul.f32 %v1079, 0.2
      %v1478 = vmul.f32 %v1082, 0.2
      %v1479 = vmul.f32 %v1087, 0.2
      %v1480 = vmul.f32 %v1090, 0.2
      %v1481 = vmul.f32 %v1095, 0.2
      %v1482 = vmul.f32 %v1098, 0.2
      %v1483 = vmul.f32 %v1103, 0.2
      %v1484 = vmul.f32 %v1106, 0.2
      %v1485 = vmul.f32 %v1111, 0.2
      %v1486 = vmul.f32 %v1114, 0.2
      %v1487 = vmul.f32 %v1119, 0.2
      %v1488 = vmul.f32 %v1122, 0.2
      %v1489 = vmul.f32 %v1127, 0.2
      %v1490 = vmul.f32 %v1130, 0.2
      %v1491 = vmul.f32 %v1135, 0.2
      %v1492 = vmul.f32 %v1138, 0.2
      %v1493 = vmul.f32 %v1143, 0.2
      %v1494 = vmul.f32 %v1146, 0.2
      %v1495 = vmul.f32 %v1151, 0.2
      %v1496 = vmul.f32 %v1154, 0.2
      %v1497 = vmul.f32 %v1159, 0.2
      %v1498 = vmul.f32 %v1162, 0.2
      %v1499 = vmul.f32 %v1167, 0.2
      %v1500 = vmul.f32 %v1170, 0.2
      %v1501 = vmul.f32 %v1175, 0.2
      %v1502 = vmul.f32 %v1178, 0.2
      %v1503 = vmul.f32 %v1183, 0.2
      %v1504 = vmul.f32 %v1186, 0.2
      %v1505 = vmul.f32 %v1191, 0.2
      %v1506 = vmul.f32 %v1194, 0.2
      %v1507 = vmul.f32 %v1199, 0.2
      %v1508 = vmul.f32 %v1202, 0.2
      %v1509 = vmul.f32 %v1207, 0.2
      %v1510 = vmul.f32 %v1210, 0.2
      %v1511 = vmul.f32 %v1215, 0.2
      %v1512 = vmul.f32 %v1218, 0.2
      %v1513 = vmul.f32 %v1223, 0.2
      %v1514 = vmul.f32 %v1226, 0.2
      %v1515 = vmul.f32 %v1231, 0.2
      %v1516 = vmul.f32 %v1234, 0.2
      %v1517 = vmul.f32 %v1239, 0.2
      %v1518 = vmul.f32 %v1242, 0.2
      %v1519 = vmul.f32 %v1247, 0.2
      %v1520 = vmul.f32 %v1250, 0.2
      %v1521 = vmul.f32 %v1255, 0.2
      %v1522 = vmul.f32 %v1258, 0.2
      %v1523 = vmul.f32 %v1263, 0.2
      %v1524 = vmul.f32 %v1266, 0.2
      %v1525 = vsel %vm1269, %v759, %v1397
      %v1526 = vsel %vm1270, %v762, %v1398
      %v1527 = vsel %vm1271, %v767, %v1399
      %v1528 = vsel %vm1272, %v770, %v1400
      %v1529 = vsel %vm1273, %v775, %v1401
      %v1530 = vsel %vm1274, %v778, %v1402
      %v1531 = vsel %vm1275, %v783, %v1403
      %v1532 = vsel %vm1276, %v786, %v1404
      %v1533 = vsel %vm1277, %v791, %v1405
      %v1534 = vsel %vm1278, %v794, %v1406
      %v1535 = vsel %vm1279, %v799, %v1407
      %v1536 = vsel %vm1280, %v802, %v1408
      %v1537 = vsel %vm1281, %v807, %v1409
      %v1538 = vsel %vm1282, %v810, %v1410
      %v1539 = vsel %vm1283, %v815, %v1411
      %v1540 = vsel %vm1284, %v818, %v1412
      %v1541 = vsel %vm1285, %v823, %v1413
      %v1542 = vsel %vm1286, %v826, %v1414
      %v1543 = vsel %vm1287, %v831, %v1415
      %v1544 = vsel %vm1288, %v834, %v1416
      %v1545 = vsel %vm1289, %v839, %v1417
      %v1546 = vsel %vm1290, %v842, %v1418
      %v1547 = vsel %vm1291, %v847, %v1419
      %v1548 = vsel %vm1292, %v850, %v1420
      %v1549 = vsel %vm1293, %v855, %v1421
      %v1550 = vsel %vm1294, %v858, %v1422
      %v1551 = vsel %vm1295, %v863, %v1423
      %v1552 = vsel %vm1296, %v866, %v1424
      %v1553 = vsel %vm1297, %v871, %v1425
      %v1554 = vsel %vm1298, %v874, %v1426
      %v1555 = vsel %vm1299, %v879, %v1427
      %v1556 = vsel %vm1300, %v882, %v1428
      %v1557 = vsel %vm1301, %v887, %v1429
      %v1558 = vsel %vm1302, %v890, %v1430
      %v1559 = vsel %vm1303, %v895, %v1431
      %v1560 = vsel %vm1304, %v898, %v1432
      %v1561 = vsel %vm1305, %v903, %v1433
      %v1562 = vsel %vm1306, %v906, %v1434
      %v1563 = vsel %vm1307, %v911, %v1435
      %v1564 = vsel %vm1308, %v914, %v1436
      %v1565 = vsel %vm1309, %v919, %v1437
      %v1566 = vsel %vm1310, %v922, %v1438
      %v1567 = vsel %vm1311, %v927, %v1439
      %v1568 = vsel %vm1312, %v930, %v1440
      %v1569 = vsel %vm1313, %v935, %v1441
      %v1570 = vsel %vm1314, %v938, %v1442
      %v1571 = vsel %vm1315, %v943, %v1443
      %v1572 = vsel %vm1316, %v946, %v1444
      %v1573 = vsel %vm1317, %v951, %v1445
      %v1574 = vsel %vm1318, %v954, %v1446
      %v1575 = vsel %vm1319, %v959, %v1447
      %v1576 = vsel %vm1320, %v962, %v1448
      %v1577 = vsel %vm1321, %v967, %v1449
      %v1578 = vsel %vm1322, %v970, %v1450
      %v1579 = vsel %vm1323, %v975, %v1451
      %v1580 = vsel %vm1324, %v978, %v1452
      %v1581 = vsel %vm1325, %v983, %v1453
      %v1582 = vsel %vm1326, %v986, %v1454
      %v1583 = vsel %vm1327, %v991, %v1455
      %v1584 = vsel %vm1328, %v994, %v1456
      %v1585 = vsel %vm1329, %v999, %v1457
      %v1586 = vsel %vm1330, %v1002, %v1458
      %v1587 = vsel %vm1331, %v1007, %v1459
      %v1588 = vsel %vm1332, %v1010, %v1460
      %v1589 = vsel %vm1333, %v1015, %v1461
      %v1590 = vsel %vm1334, %v1018, %v1462
      %v1591 = vsel %vm1335, %v1023, %v1463
      %v1592 = vsel %vm1336, %v1026, %v1464
      %v1593 = vsel %vm1337, %v1031, %v1465
      %v1594 = vsel %vm1338, %v1034, %v1466
      %v1595 = vsel %vm1339, %v1039, %v1467
      %v1596 = vsel %vm1340, %v1042, %v1468
      %v1597 = vsel %vm1341, %v1047, %v1469
      %v1598 = vsel %vm1342, %v1050, %v1470
      %v1599 = vsel %vm1343, %v1055, %v1471
      %v1600 = vsel %vm1344, %v1058, %v1472
      %v1601 = vsel %vm1345, %v1063, %v1473
      %v1602 = vsel %vm1346, %v1066, %v1474
      %v1603 = vsel %vm1347, %v1071, %v1475
      %v1604 = vsel %vm1348, %v1074, %v1476
      %v1605 = vsel %vm1349, %v1079, %v1477
      %v1606 = vsel %vm1350, %v1082, %v1478
      %v1607 = vsel %vm1351, %v1087, %v1479
      %v1608 = vsel %vm1352, %v1090, %v1480
      %v1609 = vsel %vm1353, %v1095, %v1481
      %v1610 = vsel %vm1354, %v1098, %v1482
      %v1611 = vsel %vm1355, %v1103, %v1483
      %v1612 = vsel %vm1356, %v1106, %v1484
      %v1613 = vsel %vm1357, %v1111, %v1485
      %v1614 = vsel %vm1358, %v1114, %v1486
      %v1615 = vsel %vm1359, %v1119, %v1487
      %v1616 = vsel %vm1360, %v1122, %v1488
      %v1617 = vsel %vm1361, %v1127, %v1489
      %v1618 = vsel %vm1362, %v1130, %v1490
      %v1619 = vsel %vm1363, %v1135, %v1491
      %v1620 = vsel %vm1364, %v1138, %v1492
      %v1621 = vsel %vm1365, %v1143, %v1493
      %v1622 = vsel %vm1366, %v1146, %v1494
      %v1623 = vsel %vm1367, %v1151, %v1495
      %v1624 = vsel %vm1368, %v1154, %v1496
      %v1625 = vsel %vm1369, %v1159, %v1497
      %v1626 = vsel %vm1370, %v1162, %v1498
      %v1627 = vsel %vm1371, %v1167, %v1499
      %v1628 = vsel %vm1372, %v1170, %v1500
      %v1629 = vsel %vm1373, %v1175, %v1501
      %v1630 = vsel %vm1374, %v1178, %v1502
      %v1631 = vsel %vm1375, %v1183, %v1503
      %v1632 = vsel %vm1376, %v1186, %v1504
      %v1633 = vsel %vm1377, %v1191, %v1505
      %v1634 = vsel %vm1378, %v1194, %v1506
      %v1635 = vsel %vm1379, %v1199, %v1507
      %v1636 = vsel %vm1380, %v1202, %v1508
      %v1637 = vsel %vm1381, %v1207, %v1509
      %v1638 = vsel %vm1382, %v1210, %v1510
      %v1639 = vsel %vm1383, %v1215, %v1511
      %v1640 = vsel %vm1384, %v1218, %v1512
      %v1641 = vsel %vm1385, %v1223, %v1513
      %v1642 = vsel %vm1386, %v1226, %v1514
      %v1643 = vsel %vm1387, %v1231, %v1515
      %v1644 = vsel %vm1388, %v1234, %v1516
      %v1645 = vsel %vm1389, %v1239, %v1517
      %v1646 = vsel %vm1390, %v1242, %v1518
      %v1647 = vsel %vm1391, %v1247, %v1519
      %v1648 = vsel %vm1392, %v1250, %v1520
      %v1649 = vsel %vm1393, %v1255, %v1521
      %v1650 = vsel %vm1394, %v1258, %v1522
      %v1651 = vsel %vm1395, %v1263, %v1523
      %v1652 = vsel %vm1396, %v1266, %v1524
      %v1653 = vpack.c.bf16 %v1526, %v1525
      %v1654 = vpack.c.bf16 %v1528, %v1527
      %v1655 = vpack.c.bf16 %v1530, %v1529
      %v1656 = vpack.c.bf16 %v1532, %v1531
      %v1657 = vpack.c.bf16 %v1534, %v1533
      %v1658 = vpack.c.bf16 %v1536, %v1535
      %v1659 = vpack.c.bf16 %v1538, %v1537
      %v1660 = vpack.c.bf16 %v1540, %v1539
      %v1661 = vpack.c.bf16 %v1542, %v1541
      %v1662 = vpack.c.bf16 %v1544, %v1543
      %v1663 = vpack.c.bf16 %v1546, %v1545
      %v1664 = vpack.c.bf16 %v1548, %v1547
      %v1665 = vpack.c.bf16 %v1550, %v1549
      %v1666 = vpack.c.bf16 %v1552, %v1551
      %v1667 = vpack.c.bf16 %v1554, %v1553
      %v1668 = vpack.c.bf16 %v1556, %v1555
      %v1669 = vpack.c.bf16 %v1558, %v1557
      %v1670 = vpack.c.bf16 %v1560, %v1559
      %v1671 = vpack.c.bf16 %v1562, %v1561
      %v1672 = vpack.c.bf16 %v1564, %v1563
      %v1673 = vpack.c.bf16 %v1566, %v1565
      %v1674 = vpack.c.bf16 %v1568, %v1567
      %v1675 = vpack.c.bf16 %v1570, %v1569
      %v1676 = vpack.c.bf16 %v1572, %v1571
      %v1677 = vpack.c.bf16 %v1574, %v1573
      %v1678 = vpack.c.bf16 %v1576, %v1575
      %v1679 = vpack.c.bf16 %v1578, %v1577
      %v1680 = vpack.c.bf16 %v1580, %v1579
      %v1681 = vpack.c.bf16 %v1582, %v1581
      %v1682 = vpack.c.bf16 %v1584, %v1583
      %v1683 = vpack.c.bf16 %v1586, %v1585
      %v1684 = vpack.c.bf16 %v1588, %v1587
      %v1685 = vpack.c.bf16 %v1590, %v1589
      %v1686 = vpack.c.bf16 %v1592, %v1591
      %v1687 = vpack.c.bf16 %v1594, %v1593
      %v1688 = vpack.c.bf16 %v1596, %v1595
      %v1689 = vpack.c.bf16 %v1598, %v1597
      %v1690 = vpack.c.bf16 %v1600, %v1599
      %v1691 = vpack.c.bf16 %v1602, %v1601
      %v1692 = vpack.c.bf16 %v1604, %v1603
      %v1693 = vpack.c.bf16 %v1606, %v1605
      %v1694 = vpack.c.bf16 %v1608, %v1607
      %v1695 = vpack.c.bf16 %v1610, %v1609
      %v1696 = vpack.c.bf16 %v1612, %v1611
      %v1697 = vpack.c.bf16 %v1614, %v1613
      %v1698 = vpack.c.bf16 %v1616, %v1615
      %v1699 = vpack.c.bf16 %v1618, %v1617
      %v1700 = vpack.c.bf16 %v1620, %v1619
      %v1701 = vpack.c.bf16 %v1622, %v1621
      %v1702 = vpack.c.bf16 %v1624, %v1623
      %v1703 = vpack.c.bf16 %v1626, %v1625
      %v1704 = vpack.c.bf16 %v1628, %v1627
      %v1705 = vpack.c.bf16 %v1630, %v1629
      %v1706 = vpack.c.bf16 %v1632, %v1631
      %v1707 = vpack.c.bf16 %v1634, %v1633
      %v1708 = vpack.c.bf16 %v1636, %v1635
      %v1709 = vpack.c.bf16 %v1638, %v1637
      %v1710 = vpack.c.bf16 %v1640, %v1639
      %v1711 = vpack.c.bf16 %v1642, %v1641
      %v1712 = vpack.c.bf16 %v1644, %v1643
      %v1713 = vpack.c.bf16 %v1646, %v1645
      %v1714 = vpack.c.bf16 %v1648, %v1647
      %v1715 = vpack.c.bf16 %v1650, %v1649
      %v1716 = vpack.c.bf16 %v1652, %v1651
      %v1781 = vunpack.c.l.b16 %v1653
      %v1782 = vunpack.c.h.b16 %v1653
      %v1783 = vunpack.c.l.b16 %v1654
      %v1784 = vunpack.c.h.b16 %v1654
      %v1785 = vunpack.c.l.b16 %v1655
      %v1786 = vunpack.c.h.b16 %v1655
      %v1787 = vunpack.c.l.b16 %v1656
      %v1788 = vunpack.c.h.b16 %v1656
      %v1789 = vunpack.c.l.b16 %v1657
      %v1790 = vunpack.c.h.b16 %v1657
      %v1791 = vunpack.c.l.b16 %v1658
      %v1792 = vunpack.c.h.b16 %v1658
      %v1793 = vunpack.c.l.b16 %v1659
      %v1794 = vunpack.c.h.b16 %v1659
      %v1795 = vunpack.c.l.b16 %v1660
      %v1796 = vunpack.c.h.b16 %v1660
      %v1797 = vunpack.c.l.b16 %v1661
      %v1798 = vunpack.c.h.b16 %v1661
      %v1799 = vunpack.c.l.b16 %v1662
      %v1800 = vunpack.c.h.b16 %v1662
      %v1801 = vunpack.c.l.b16 %v1663
      %v1802 = vunpack.c.h.b16 %v1663
      %v1803 = vunpack.c.l.b16 %v1664
      %v1804 = vunpack.c.h.b16 %v1664
      %v1805 = vunpack.c.l.b16 %v1665
      %v1806 = vunpack.c.h.b16 %v1665
      %v1807 = vunpack.c.l.b16 %v1666
      %v1808 = vunpack.c.h.b16 %v1666
      %v1809 = vunpack.c.l.b16 %v1667
      %v1810 = vunpack.c.h.b16 %v1667
      %v1811 = vunpack.c.l.b16 %v1668
      %v1812 = vunpack.c.h.b16 %v1668
      %v1813 = vunpack.c.l.b16 %v1669
      %v1814 = vunpack.c.h.b16 %v1669
      %v1815 = vunpack.c.l.b16 %v1670
      %v1816 = vunpack.c.h.b16 %v1670
      %v1817 = vunpack.c.l.b16 %v1671
      %v1818 = vunpack.c.h.b16 %v1671
      %v1819 = vunpack.c.l.b16 %v1672
      %v1820 = vunpack.c.h.b16 %v1672
      %v1821 = vunpack.c.l.b16 %v1673
      %v1822 = vunpack.c.h.b16 %v1673
      %v1823 = vunpack.c.l.b16 %v1674
      %v1824 = vunpack.c.h.b16 %v1674
      %v1825 = vunpack.c.l.b16 %v1675
      %v1826 = vunpack.c.h.b16 %v1675
      %v1827 = vunpack.c.l.b16 %v1676
      %v1828 = vunpack.c.h.b16 %v1676
      %v1829 = vunpack.c.l.b16 %v1677
      %v1830 = vunpack.c.h.b16 %v1677
      %v1831 = vunpack.c.l.b16 %v1678
      %v1832 = vunpack.c.h.b16 %v1678
      %v1833 = vunpack.c.l.b16 %v1679
      %v1834 = vunpack.c.h.b16 %v1679
      %v1835 = vunpack.c.l.b16 %v1680
      %v1836 = vunpack.c.h.b16 %v1680
      %v1837 = vunpack.c.l.b16 %v1681
      %v1838 = vunpack.c.h.b16 %v1681
      %v1839 = vunpack.c.l.b16 %v1682
      %v1840 = vunpack.c.h.b16 %v1682
      %v1841 = vunpack.c.l.b16 %v1683
      %v1842 = vunpack.c.h.b16 %v1683
      %v1843 = vunpack.c.l.b16 %v1684
      %v1844 = vunpack.c.h.b16 %v1684
      %v1845 = vunpack.c.l.b16 %v1685
      %v1846 = vunpack.c.h.b16 %v1685
      %v1847 = vunpack.c.l.b16 %v1686
      %v1848 = vunpack.c.h.b16 %v1686
      %v1849 = vunpack.c.l.b16 %v1687
      %v1850 = vunpack.c.h.b16 %v1687
      %v1851 = vunpack.c.l.b16 %v1688
      %v1852 = vunpack.c.h.b16 %v1688
      %v1853 = vunpack.c.l.b16 %v1689
      %v1854 = vunpack.c.h.b16 %v1689
      %v1855 = vunpack.c.l.b16 %v1690
      %v1856 = vunpack.c.h.b16 %v1690
      %v1857 = vunpack.c.l.b16 %v1691
      %v1858 = vunpack.c.h.b16 %v1691
      %v1859 = vunpack.c.l.b16 %v1692
      %v1860 = vunpack.c.h.b16 %v1692
      %v1861 = vunpack.c.l.b16 %v1693
      %v1862 = vunpack.c.h.b16 %v1693
      %v1863 = vunpack.c.l.b16 %v1694
      %v1864 = vunpack.c.h.b16 %v1694
      %v1865 = vunpack.c.l.b16 %v1695
      %v1866 = vunpack.c.h.b16 %v1695
      %v1867 = vunpack.c.l.b16 %v1696
      %v1868 = vunpack.c.h.b16 %v1696
      %v1869 = vunpack.c.l.b16 %v1697
      %v1870 = vunpack.c.h.b16 %v1697
      %v1871 = vunpack.c.l.b16 %v1698
      %v1872 = vunpack.c.h.b16 %v1698
      %v1873 = vunpack.c.l.b16 %v1699
      %v1874 = vunpack.c.h.b16 %v1699
      %v1875 = vunpack.c.l.b16 %v1700
      %v1876 = vunpack.c.h.b16 %v1700
      %v1877 = vunpack.c.l.b16 %v1701
      %v1878 = vunpack.c.h.b16 %v1701
      %v1879 = vunpack.c.l.b16 %v1702
      %v1880 = vunpack.c.h.b16 %v1702
      %v1881 = vunpack.c.l.b16 %v1703
      %v1882 = vunpack.c.h.b16 %v1703
      %v1883 = vunpack.c.l.b16 %v1704
      %v1884 = vunpack.c.h.b16 %v1704
      %v1885 = vunpack.c.l.b16 %v1705
      %v1886 = vunpack.c.h.b16 %v1705
      %v1887 = vunpack.c.l.b16 %v1706
      %v1888 = vunpack.c.h.b16 %v1706
      %v1889 = vunpack.c.l.b16 %v1707
      %v1890 = vunpack.c.h.b16 %v1707
      %v1891 = vunpack.c.l.b16 %v1708
      %v1892 = vunpack.c.h.b16 %v1708
      %v1893 = vunpack.c.l.b16 %v1709
      %v1894 = vunpack.c.h.b16 %v1709
      %v1895 = vunpack.c.l.b16 %v1710
      %v1896 = vunpack.c.h.b16 %v1710
      %v1897 = vunpack.c.l.b16 %v1711
      %v1898 = vunpack.c.h.b16 %v1711
      %v1899 = vunpack.c.l.b16 %v1712
      %v1900 = vunpack.c.h.b16 %v1712
      %v1901 = vunpack.c.l.b16 %v1713
      %v1902 = vunpack.c.h.b16 %v1713
      %v1903 = vunpack.c.l.b16 %v1714
      %v1904 = vunpack.c.h.b16 %v1714
      %v1905 = vunpack.c.l.b16 %v1715
      %v1906 = vunpack.c.h.b16 %v1715
      %v1907 = vunpack.c.l.b16 %v1716
      %v1908 = vunpack.c.h.b16 %v1716
      %v1909 = vpack.c.b16 %v1781, %v1781
      %v1910 = vpack.c.b16 %v1782, %v1782
      %v1911 = vpack.c.b16 %v1783, %v1783
      %v1912 = vpack.c.b16 %v1784, %v1784
      %v1913 = vpack.c.b16 %v1785, %v1785
      %v1914 = vpack.c.b16 %v1786, %v1786
      %v1915 = vpack.c.b16 %v1787, %v1787
      %v1916 = vpack.c.b16 %v1788, %v1788
      %v1917 = vpack.c.b16 %v1789, %v1789
      %v1918 = vpack.c.b16 %v1790, %v1790
      %v1919 = vpack.c.b16 %v1791, %v1791
      %v1920 = vpack.c.b16 %v1792, %v1792
      %v1921 = vpack.c.b16 %v1793, %v1793
      %v1922 = vpack.c.b16 %v1794, %v1794
      %v1923 = vpack.c.b16 %v1795, %v1795
      %v1924 = vpack.c.b16 %v1796, %v1796
      %v1925 = vpack.c.b16 %v1797, %v1797
      %v1926 = vpack.c.b16 %v1798, %v1798
      %v1927 = vpack.c.b16 %v1799, %v1799
      %v1928 = vpack.c.b16 %v1800, %v1800
      %v1929 = vpack.c.b16 %v1801, %v1801
      %v1930 = vpack.c.b16 %v1802, %v1802
      %v1931 = vpack.c.b16 %v1803, %v1803
      %v1932 = vpack.c.b16 %v1804, %v1804
      %v1933 = vpack.c.b16 %v1805, %v1805
      %v1934 = vpack.c.b16 %v1806, %v1806
      %v1935 = vpack.c.b16 %v1807, %v1807
      %v1936 = vpack.c.b16 %v1808, %v1808
      %v1937 = vpack.c.b16 %v1809, %v1809
      %v1938 = vpack.c.b16 %v1810, %v1810
      %v1939 = vpack.c.b16 %v1811, %v1811
      %v1940 = vpack.c.b16 %v1812, %v1812
      %v1941 = vpack.c.b16 %v1813, %v1813
      %v1942 = vpack.c.b16 %v1814, %v1814
      %v1943 = vpack.c.b16 %v1815, %v1815
      %v1944 = vpack.c.b16 %v1816, %v1816
      %v1945 = vpack.c.b16 %v1817, %v1817
      %v1946 = vpack.c.b16 %v1818, %v1818
      %v1947 = vpack.c.b16 %v1819, %v1819
      %v1948 = vpack.c.b16 %v1820, %v1820
      %v1949 = vpack.c.b16 %v1821, %v1821
      %v1950 = vpack.c.b16 %v1822, %v1822
      %v1951 = vpack.c.b16 %v1823, %v1823
      %v1952 = vpack.c.b16 %v1824, %v1824
      %v1953 = vpack.c.b16 %v1825, %v1825
      %v1954 = vpack.c.b16 %v1826, %v1826
      %v1955 = vpack.c.b16 %v1827, %v1827
      %v1956 = vpack.c.b16 %v1828, %v1828
      %v1957 = vpack.c.b16 %v1829, %v1829
      %v1958 = vpack.c.b16 %v1830, %v1830
      %v1959 = vpack.c.b16 %v1831, %v1831
      %v1960 = vpack.c.b16 %v1832, %v1832
      %v1961 = vpack.c.b16 %v1833, %v1833
      %v1962 = vpack.c.b16 %v1834, %v1834
      %v1963 = vpack.c.b16 %v1835, %v1835
      %v1964 = vpack.c.b16 %v1836, %v1836
      %v1965 = vpack.c.b16 %v1837, %v1837
      %v1966 = vpack.c.b16 %v1838, %v1838
      %v1967 = vpack.c.b16 %v1839, %v1839
      %v1968 = vpack.c.b16 %v1840, %v1840
      %v1969 = vpack.c.b16 %v1841, %v1841
      %v1970 = vpack.c.b16 %v1842, %v1842
      %v1971 = vpack.c.b16 %v1843, %v1843
      %v1972 = vpack.c.b16 %v1844, %v1844
      %v1973 = vpack.c.b16 %v1845, %v1845
      %v1974 = vpack.c.b16 %v1846, %v1846
      %v1975 = vpack.c.b16 %v1847, %v1847
      %v1976 = vpack.c.b16 %v1848, %v1848
      %v1977 = vpack.c.b16 %v1849, %v1849
      %v1978 = vpack.c.b16 %v1850, %v1850
      %v1979 = vpack.c.b16 %v1851, %v1851
      %v1980 = vpack.c.b16 %v1852, %v1852
      %v1981 = vpack.c.b16 %v1853, %v1853
      %v1982 = vpack.c.b16 %v1854, %v1854
      %v1983 = vpack.c.b16 %v1855, %v1855
      %v1984 = vpack.c.b16 %v1856, %v1856
      %v1985 = vpack.c.b16 %v1857, %v1857
      %v1986 = vpack.c.b16 %v1858, %v1858
      %v1987 = vpack.c.b16 %v1859, %v1859
      %v1988 = vpack.c.b16 %v1860, %v1860
      %v1989 = vpack.c.b16 %v1861, %v1861
      %v1990 = vpack.c.b16 %v1862, %v1862
      %v1991 = vpack.c.b16 %v1863, %v1863
      %v1992 = vpack.c.b16 %v1864, %v1864
      %v1993 = vpack.c.b16 %v1865, %v1865
      %v1994 = vpack.c.b16 %v1866, %v1866
      %v1995 = vpack.c.b16 %v1867, %v1867
      %v1996 = vpack.c.b16 %v1868, %v1868
      %v1997 = vpack.c.b16 %v1869, %v1869
      %v1998 = vpack.c.b16 %v1870, %v1870
      %v1999 = vpack.c.b16 %v1871, %v1871
      %v2000 = vpack.c.b16 %v1872, %v1872
      %v2001 = vpack.c.b16 %v1873, %v1873
      %v2002 = vpack.c.b16 %v1874, %v1874
      %v2003 = vpack.c.b16 %v1875, %v1875
      %v2004 = vpack.c.b16 %v1876, %v1876
      %v2005 = vpack.c.b16 %v1877, %v1877
      %v2006 = vpack.c.b16 %v1878, %v1878
      %v2007 = vpack.c.b16 %v1879, %v1879
      %v2008 = vpack.c.b16 %v1880, %v1880
      %v2009 = vpack.c.b16 %v1881, %v1881
      %v2010 = vpack.c.b16 %v1882, %v1882
      %v2011 = vpack.c.b16 %v1883, %v1883
      %v2012 = vpack.c.b16 %v1884, %v1884
      %v2013 = vpack.c.b16 %v1885, %v1885
      %v2014 = vpack.c.b16 %v1886, %v1886
      %v2015 = vpack.c.b16 %v1887, %v1887
      %v2016 = vpack.c.b16 %v1888, %v1888
      %v2017 = vpack.c.b16 %v1889, %v1889
      %v2018 = vpack.c.b16 %v1890, %v1890
      %v2019 = vpack.c.b16 %v1891, %v1891
      %v2020 = vpack.c.b16 %v1892, %v1892
      %v2021 = vpack.c.b16 %v1893, %v1893
      %v2022 = vpack.c.b16 %v1894, %v1894
      %v2023 = vpack.c.b16 %v1895, %v1895
      %v2024 = vpack.c.b16 %v1896, %v1896
      %v2025 = vpack.c.b16 %v1897, %v1897
      %v2026 = vpack.c.b16 %v1898, %v1898
      %v2027 = vpack.c.b16 %v1899, %v1899
      %v2028 = vpack.c.b16 %v1900, %v1900
      %v2029 = vpack.c.b16 %v1901, %v1901
      %v2030 = vpack.c.b16 %v1902, %v1902
      %v2031 = vpack.c.b16 %v1903, %v1903
      %v2032 = vpack.c.b16 %v1904, %v1904
      %v2033 = vpack.c.b16 %v1905, %v1905
      %v2034 = vpack.c.b16 %v1906, %v1906
      %v2035 = vpack.c.b16 %v1907, %v1907
      %v2036 = vpack.c.b16 %v1908, %v1908
      %2165 = vst [vmem:[%s145] sm:$0xf] %v1909
      %2166 = vst [vmem:[%s145 + $0x4] sm:$0xf] %v1910
      %2167 = vst [vmem:[%s145 + $0x8] sm:$0xf] %v1911
      %2168 = vst [vmem:[%s145 + $0xc] sm:$0xf] %v1912
      %2169 = vst [vmem:[%s145 + $0x10] sm:$0xf] %v1913
      %2170 = vst [vmem:[%s145 + $0x14] sm:$0xf] %v1914
      %2171 = vst [vmem:[%s145 + $0x18] sm:$0xf] %v1915
      %2172 = vst [vmem:[%s145 + $0x1c] sm:$0xf] %v1916
      %2173 = vst [vmem:[%s145 + $0x20] sm:$0xf] %v1917
      %2174 = vst [vmem:[%s145 + $0x24] sm:$0xf] %v1918
      %2175 = vst [vmem:[%s145 + $0x28] sm:$0xf] %v1919
      %2176 = vst [vmem:[%s145 + $0x2c] sm:$0xf] %v1920
      %2177 = vst [vmem:[%s145 + $0x30] sm:$0xf] %v1921
      %2178 = vst [vmem:[%s145 + $0x34] sm:$0xf] %v1922
      %2179 = vst [vmem:[%s145 + $0x38] sm:$0xf] %v1923
      %2180 = vst [vmem:[%s145 + $0x3c] sm:$0xf] %v1924
      %2181 = vst [vmem:[%s145 + $0x40] sm:$0xf] %v1925
      %2182 = vst [vmem:[%s145 + $0x44] sm:$0xf] %v1926
      %2183 = vst [vmem:[%s145 + $0x48] sm:$0xf] %v1927
      %2184 = vst [vmem:[%s145 + $0x4c] sm:$0xf] %v1928
      %2185 = vst [vmem:[%s145 + $0x50] sm:$0xf] %v1929
      %2186 = vst [vmem:[%s145 + $0x54] sm:$0xf] %v1930
      %2187 = vst [vmem:[%s145 + $0x58] sm:$0xf] %v1931
      %2188 = vst [vmem:[%s145 + $0x5c] sm:$0xf] %v1932
      %2189 = vst [vmem:[%s145 + $0x60] sm:$0xf] %v1933
      %2190 = vst [vmem:[%s145 + $0x64] sm:$0xf] %v1934
      %2191 = vst [vmem:[%s145 + $0x68] sm:$0xf] %v1935
      %2192 = vst [vmem:[%s145 + $0x6c] sm:$0xf] %v1936
      %2193 = vst [vmem:[%s145 + $0x70] sm:$0xf] %v1937
      %2194 = vst [vmem:[%s145 + $0x74] sm:$0xf] %v1938
      %2195 = vst [vmem:[%s145 + $0x78] sm:$0xf] %v1939
      %2196 = vst [vmem:[%s145 + $0x7c] sm:$0xf] %v1940
      %2197 = vst [vmem:[%s145 + $0x80] sm:$0xf] %v1941
      %2198 = vst [vmem:[%s145 + $0x84] sm:$0xf] %v1942
      %2199 = vst [vmem:[%s145 + $0x88] sm:$0xf] %v1943
      %2200 = vst [vmem:[%s145 + $0x8c] sm:$0xf] %v1944
      %2201 = vst [vmem:[%s145 + $0x90] sm:$0xf] %v1945
      %2202 = vst [vmem:[%s145 + $0x94] sm:$0xf] %v1946
      %2203 = vst [vmem:[%s145 + $0x98] sm:$0xf] %v1947
      %2204 = vst [vmem:[%s145 + $0x9c] sm:$0xf] %v1948
      %2205 = vst [vmem:[%s145 + $0xa0] sm:$0xf] %v1949
      %2206 = vst [vmem:[%s145 + $0xa4] sm:$0xf] %v1950
      %2207 = vst [vmem:[%s145 + $0xa8] sm:$0xf] %v1951
      %2208 = vst [vmem:[%s145 + $0xac] sm:$0xf] %v1952
      %2209 = vst [vmem:[%s145 + $0xb0] sm:$0xf] %v1953
      %2210 = vst [vmem:[%s145 + $0xb4] sm:$0xf] %v1954
      %2211 = vst [vmem:[%s145 + $0xb8] sm:$0xf] %v1955
      %2212 = vst [vmem:[%s145 + $0xbc] sm:$0xf] %v1956
      %2213 = vst [vmem:[%s145 + $0xc0] sm:$0xf] %v1957
      %2214 = vst [vmem:[%s145 + $0xc4] sm:$0xf] %v1958
      %2215 = vst [vmem:[%s145 + $0xc8] sm:$0xf] %v1959
      %2216 = vst [vmem:[%s145 + $0xcc] sm:$0xf] %v1960
      %2217 = vst [vmem:[%s145 + $0xd0] sm:$0xf] %v1961
      %2218 = vst [vmem:[%s145 + $0xd4] sm:$0xf] %v1962
      %2219 = vst [vmem:[%s145 + $0xd8] sm:$0xf] %v1963
      %2220 = vst [vmem:[%s145 + $0xdc] sm:$0xf] %v1964
      %2221 = vst [vmem:[%s145 + $0xe0] sm:$0xf] %v1965
      %2222 = vst [vmem:[%s145 + $0xe4] sm:$0xf] %v1966
      %2223 = vst [vmem:[%s145 + $0xe8] sm:$0xf] %v1967
      %2224 = vst [vmem:[%s145 + $0xec] sm:$0xf] %v1968
      %2225 = vst [vmem:[%s145 + $0xf0] sm:$0xf] %v1969
      %2226 = vst [vmem:[%s145 + $0xf4] sm:$0xf] %v1970
      %2227 = vst [vmem:[%s145 + $0xf8] sm:$0xf] %v1971
      %2228 = vst [vmem:[%s145 + $0xfc] sm:$0xf] %v1972
      %2229 = vst [vmem:[%s145 + $0x100] sm:$0xf] %v1973
      %2230 = vst [vmem:[%s145 + $0x104] sm:$0xf] %v1974
      %2231 = vst [vmem:[%s145 + $0x108] sm:$0xf] %v1975
      %2232 = vst [vmem:[%s145 + $0x10c] sm:$0xf] %v1976
      %2233 = vst [vmem:[%s145 + $0x110] sm:$0xf] %v1977
      %2234 = vst [vmem:[%s145 + $0x114] sm:$0xf] %v1978
      %2235 = vst [vmem:[%s145 + $0x118] sm:$0xf] %v1979
      %2236 = vst [vmem:[%s145 + $0x11c] sm:$0xf] %v1980
      %2237 = vst [vmem:[%s145 + $0x120] sm:$0xf] %v1981
      %2238 = vst [vmem:[%s145 + $0x124] sm:$0xf] %v1982
      %2239 = vst [vmem:[%s145 + $0x128] sm:$0xf] %v1983
      %2240 = vst [vmem:[%s145 + $0x12c] sm:$0xf] %v1984
      %2241 = vst [vmem:[%s145 + $0x130] sm:$0xf] %v1985
      %2242 = vst [vmem:[%s145 + $0x134] sm:$0xf] %v1986
      %2243 = vst [vmem:[%s145 + $0x138] sm:$0xf] %v1987
      %2244 = vst [vmem:[%s145 + $0x13c] sm:$0xf] %v1988
      %2245 = vst [vmem:[%s145 + $0x140] sm:$0xf] %v1989
      %2246 = vst [vmem:[%s145 + $0x144] sm:$0xf] %v1990
      %2247 = vst [vmem:[%s145 + $0x148] sm:$0xf] %v1991
      %2248 = vst [vmem:[%s145 + $0x14c] sm:$0xf] %v1992
      %2249 = vst [vmem:[%s145 + $0x150] sm:$0xf] %v1993
      %2250 = vst [vmem:[%s145 + $0x154] sm:$0xf] %v1994
      %2251 = vst [vmem:[%s145 + $0x158] sm:$0xf] %v1995
      %2252 = vst [vmem:[%s145 + $0x15c] sm:$0xf] %v1996
      %2253 = vst [vmem:[%s145 + $0x160] sm:$0xf] %v1997
      %2254 = vst [vmem:[%s145 + $0x164] sm:$0xf] %v1998
      %2255 = vst [vmem:[%s145 + $0x168] sm:$0xf] %v1999
      %2256 = vst [vmem:[%s145 + $0x16c] sm:$0xf] %v2000
      %2257 = vst [vmem:[%s145 + $0x170] sm:$0xf] %v2001
      %2258 = vst [vmem:[%s145 + $0x174] sm:$0xf] %v2002
      %2259 = vst [vmem:[%s145 + $0x178] sm:$0xf] %v2003
      %2260 = vst [vmem:[%s145 + $0x17c] sm:$0xf] %v2004
      %2261 = vst [vmem:[%s145 + $0x180] sm:$0xf] %v2005
      %2262 = vst [vmem:[%s145 + $0x184] sm:$0xf] %v2006
      %2263 = vst [vmem:[%s145 + $0x188] sm:$0xf] %v2007
      %2264 = vst [vmem:[%s145 + $0x18c] sm:$0xf] %v2008
      %2265 = vst [vmem:[%s145 + $0x190] sm:$0xf] %v2009
      %2266 = vst [vmem:[%s145 + $0x194] sm:$0xf] %v2010
      %2267 = vst [vmem:[%s145 + $0x198] sm:$0xf] %v2011
      %2268 = vst [vmem:[%s145 + $0x19c] sm:$0xf] %v2012
      %2269 = vst [vmem:[%s145 + $0x1a0] sm:$0xf] %v2013
      %2270 = vst [vmem:[%s145 + $0x1a4] sm:$0xf] %v2014
      %2271 = vst [vmem:[%s145 + $0x1a8] sm:$0xf] %v2015
      %2272 = vst [vmem:[%s145 + $0x1ac] sm:$0xf] %v2016
      %2273 = vst [vmem:[%s145 + $0x1b0] sm:$0xf] %v2017
      %2274 = vst [vmem:[%s145 + $0x1b4] sm:$0xf] %v2018
      %2275 = vst [vmem:[%s145 + $0x1b8] sm:$0xf] %v2019
      %2276 = vst [vmem:[%s145 + $0x1bc] sm:$0xf] %v2020
      %2277 = vst [vmem:[%s145 + $0x1c0] sm:$0xf] %v2021
      %2278 = vst [vmem:[%s145 + $0x1c4] sm:$0xf] %v2022
      %2279 = vst [vmem:[%s145 + $0x1c8] sm:$0xf] %v2023
      %2280 = vst [vmem:[%s145 + $0x1cc] sm:$0xf] %v2024
      %2281 = vst [vmem:[%s145 + $0x1d0] sm:$0xf] %v2025
      %2282 = vst [vmem:[%s145 + $0x1d4] sm:$0xf] %v2026
      %2283 = vst [vmem:[%s145 + $0x1d8] sm:$0xf] %v2027
      %2284 = vst [vmem:[%s145 + $0x1dc] sm:$0xf] %v2028
      %2285 = vst [vmem:[%s145 + $0x1e0] sm:$0xf] %v2029
      %2286 = vst [vmem:[%s145 + $0x1e4] sm:$0xf] %v2030
      %2287 = vst [vmem:[%s145 + $0x1e8] sm:$0xf] %v2031
      %2288 = vst [vmem:[%s145 + $0x1ec] sm:$0xf] %v2032
      %2289 = vst [vmem:[%s145 + $0x1f0] sm:$0xf] %v2033
      %2290 = vst [vmem:[%s145 + $0x1f4] sm:$0xf] %v2034
      %2291 = vst [vmem:[%s145 + $0x1f8] sm:$0xf] %v2035
      %2292 = vst [vmem:[%s145 + $0x1fc] sm:$0xf] %v2036
      %s2293 = smul.u32 128, %s13
      %p2294 = scmp.lt.s32.totalorder %s2293, 255
      %s2295 = scalar_select %p2294, %s2293, 255
      %s2296 = smul.addr %s2295, 4
      %s2297 = scalar_lea.vmem %s2, %s2296
      // Predicated region
      $region29: #{_lambda_.4} parent=27 // pred_check
        %p2298 = pneg %p78
      $region30: #{_lambda_.4} parent=27 // pred_check_branch
        %2300 = sbr.rel (%p2298) target = $region32
      $region31: #{_lambda_.4} parent=27 // pred_region
        %s2301 = smul.u32 128, %s13
      $region32: #{_lambda_.4} parent=27 // pred_fallthru
        _
    $region28: #{_lambda_.4} parent=5 // pred_fallthru
      _
    %p2302 = scmp.le.s32.totalorder 2, %s8
    // Predicated region
    $region33: #{_lambda_.4} parent=5 // pred_check
      %p2303 = pneg %p2302
    $region34: #{_lambda_.4} parent=5 // pred_check_branch
      %2305 = sbr.rel (%p2303) target = $region36
    $region35: #{_lambda_.4} parent=5 // pred_region
      %s2306 = ssub.s32 %s8, 2
      // Predicated region
      $region37: #{_lambda_.4} parent=35 // pred_check
        %p2307 = pneg %p84
      $region38: #{_lambda_.4} parent=35 // pred_check_branch
        %2309 = sbr.rel (%p2307) target = $region40
      $region39: #{_lambda_.4} parent=35 // pred_region
        %s2310 = smul.u32 128, %s14
        %p2311 = scmp.lt.s32.totalorder %s2310, 255
        %s2312 = scalar_select %p2311, %s2310, 255
        %s2313 = smul.addr %s2312, 4
        %s2314 = scalar_lea.vmem %s2, %s2313
      $region40: #{_lambda_.4} parent=35 // pred_fallthru
        _
    $region36: #{_lambda_.4} parent=5 // pred_fallthru
      _
  $region6: #{_lambda_.4} parent=0 // loop_footer
    %s12 = sadd.s32 1, %s8
  $region7: #{_lambda_.4} parent=0 // loop_footer_branch
    %7 = sbr.rel target = $region3
  $region8: #{_lambda_.4} parent=0 // loop_exit
    _

// kernel: _lambda_.5
$region0: #{_lambda_.5}
  #allocation0 [shape = 'u32[]', space=smem, size = 0x4, offset = 0x4, fixed_abs, tag = 'smem constant byte address 0x4 - core index']
  #allocation1 [shape = 'u32[144,128]{1,0:T(1,128)}', space=vmem, size = 0x12000, scoped, tag = 'internal scratch']
  #allocation2 [shape = 'f32[512,128]{1,0:T(8,128)}', space=vmem, size = 0x40000, scoped, tag = 'scratch operand']
  %s0 = inlined_call_operand.vmem [shape: bf16[512,128], index: 0, kind: input, shape index: {}]
  %s1 = inlined_call_operand.vmem [shape: bf16[128,128], index: 1, kind: input, shape index: {}]
  %s2 = inlined_call_operand.vmem [shape: bf16[512,128], index: 2, kind: output, shape index: {}]
  %s3 = sld [smem:[#allocation0]]
  $region26: #{_lambda_.5} parent=0
    _
  %s5 = ssub.s32 1, %s3
  %s6 = scalar_select 0, %s5, %s3
  // Predicated region
  $region2: #{_lambda_.5} parent=0 // pred_check
    _
  $region3: #{_lambda_.5} parent=0 // pred_check_branch
    %8 = sbr.rel (0) target = $region5
  $region4: #{_lambda_.5} parent=0 // pred_region
    _
  $region5: #{_lambda_.5} parent=0 // pred_fallthru
    _
  // Predicated region
  $region6: #{_lambda_.5} parent=0 // pred_check
    _
  $region7: #{_lambda_.5} parent=0 // pred_check_branch
    %10 = sbr.rel (0) target = $region9
  $region8: #{_lambda_.5} parent=0 // pred_region
    _
  $region9: #{_lambda_.5} parent=0 // pred_fallthru
    _
  %p12 = scmp.eq.s32.totalorder 0, 0
  // Predicated region
  $region10: #{_lambda_.5} parent=0 // pred_check
    %p13 = pneg %p12
  $region11: #{_lambda_.5} parent=0 // pred_check_branch
    %15 = sbr.rel (%p13) target = $region13
  $region12: #{_lambda_.5} parent=0 // pred_region
    %16 = vst [vmem:[#allocation2] sm:$0xff] 0.0
    %17 = vst [vmem:[#allocation2 + $0x8] sm:$0xff] 0.0
    %18 = vst [vmem:[#allocation2 + $0x10] sm:$0xff] 0.0
    %19 = vst [vmem:[#allocation2 + $0x18] sm:$0xff] 0.0
    %20 = vst [vmem:[#allocation2 + $0x20] sm:$0xff] 0.0
    %21 = vst [vmem:[#allocation2 + $0x28] sm:$0xff] 0.0
    %22 = vst [vmem:[#allocation2 + $0x30] sm:$0xff] 0.0
    %23 = vst [vmem:[#allocation2 + $0x38] sm:$0xff] 0.0
    %24 = vst [vmem:[#allocation2 + $0x40] sm:$0xff] 0.0
    %25 = vst [vmem:[#allocation2 + $0x48] sm:$0xff] 0.0
    %26 = vst [vmem:[#allocation2 + $0x50] sm:$0xff] 0.0
    %27 = vst [vmem:[#allocation2 + $0x58] sm:$0xff] 0.0
    %28 = vst [vmem:[#allocation2 + $0x60] sm:$0xff] 0.0
    %29 = vst [vmem:[#allocation2 + $0x68] sm:$0xff] 0.0
    %30 = vst [vmem:[#allocation2 + $0x70] sm:$0xff] 0.0
    %31 = vst [vmem:[#allocation2 + $0x78] sm:$0xff] 0.0
    %32 = vst [vmem:[#allocation2 + $0x80] sm:$0xff] 0.0
    %33 = vst [vmem:[#allocation2 + $0x88] sm:$0xff] 0.0
    %34 = vst [vmem:[#allocation2 + $0x90] sm:$0xff] 0.0
    %35 = vst [vmem:[#allocation2 + $0x98] sm:$0xff] 0.0
    %36 = vst [vmem:[#allocation2 + $0xa0] sm:$0xff] 0.0
    %37 = vst [vmem:[#allocation2 + $0xa8] sm:$0xff] 0.0
    %38 = vst [vmem:[#allocation2 + $0xb0] sm:$0xff] 0.0
    %39 = vst [vmem:[#allocation2 + $0xb8] sm:$0xff] 0.0
    %40 = vst [vmem:[#allocation2 + $0xc0] sm:$0xff] 0.0
    %41 = vst [vmem:[#allocation2 + $0xc8] sm:$0xff] 0.0
    %42 = vst [vmem:[#allocation2 + $0xd0] sm:$0xff] 0.0
    %43 = vst [vmem:[#allocation2 + $0xd8] sm:$0xff] 0.0
    %44 = vst [vmem:[#allocation2 + $0xe0] sm:$0xff] 0.0
    %45 = vst [vmem:[#allocation2 + $0xe8] sm:$0xff] 0.0
    %46 = vst [vmem:[#allocation2 + $0xf0] sm:$0xff] 0.0
    %47 = vst [vmem:[#allocation2 + $0xf8] sm:$0xff] 0.0
    %48 = vst [vmem:[#allocation2 + $0x100] sm:$0xff] 0.0
    %49 = vst [vmem:[#allocation2 + $0x108] sm:$0xff] 0.0
    %50 = vst [vmem:[#allocation2 + $0x110] sm:$0xff] 0.0
    %51 = vst [vmem:[#allocation2 + $0x118] sm:$0xff] 0.0
    %52 = vst [vmem:[#allocation2 + $0x120] sm:$0xff] 0.0
    %53 = vst [vmem:[#allocation2 + $0x128] sm:$0xff] 0.0
    %54 = vst [vmem:[#allocation2 + $0x130] sm:$0xff] 0.0
    %55 = vst [vmem:[#allocation2 + $0x138] sm:$0xff] 0.0
    %56 = vst [vmem:[#allocation2 + $0x140] sm:$0xff] 0.0
    %57 = vst [vmem:[#allocation2 + $0x148] sm:$0xff] 0.0
    %58 = vst [vmem:[#allocation2 + $0x150] sm:$0xff] 0.0
    %59 = vst [vmem:[#allocation2 + $0x158] sm:$0xff] 0.0
    %60 = vst [vmem:[#allocation2 + $0x160] sm:$0xff] 0.0
    %61 = vst [vmem:[#allocation2 + $0x168] sm:$0xff] 0.0
    %62 = vst [vmem:[#allocation2 + $0x170] sm:$0xff] 0.0
    %63 = vst [vmem:[#allocation2 + $0x178] sm:$0xff] 0.0
    %64 = vst [vmem:[#allocation2 + $0x180] sm:$0xff] 0.0
    %65 = vst [vmem:[#allocation2 + $0x188] sm:$0xff] 0.0
    %66 = vst [vmem:[#allocation2 + $0x190] sm:$0xff] 0.0
    %67 = vst [vmem:[#allocation2 + $0x198] sm:$0xff] 0.0
    %68 = vst [vmem:[#allocation2 + $0x1a0] sm:$0xff] 0.0
    %69 = vst [vmem:[#allocation2 + $0x1a8] sm:$0xff] 0.0
    %70 = vst [vmem:[#allocation2 + $0x1b0] sm:$0xff] 0.0
    %71 = vst [vmem:[#allocation2 + $0x1b8] sm:$0xff] 0.0
    %72 = vst [vmem:[#allocation2 + $0x1c0] sm:$0xff] 0.0
    %73 = vst [vmem:[#allocation2 + $0x1c8] sm:$0xff] 0.0
    %74 = vst [vmem:[#allocation2 + $0x1d0] sm:$0xff] 0.0
    %75 = vst [vmem:[#allocation2 + $0x1d8] sm:$0xff] 0.0
    %76 = vst [vmem:[#allocation2 + $0x1e0] sm:$0xff] 0.0
    %77 = vst [vmem:[#allocation2 + $0x1e8] sm:$0xff] 0.0
    %78 = vst [vmem:[#allocation2 + $0x1f0] sm:$0xff] 0.0
    %79 = vst [vmem:[#allocation2 + $0x1f8] sm:$0xff] 0.0
  $region13: #{_lambda_.5} parent=0 // pred_fallthru
    _
  %v80 = vld [vmem:[#allocation2] sm:$0xff]
  %v81 = vld [vmem:[#allocation2 + $0x8] sm:$0xff]
  %v82 = vld [vmem:[#allocation2 + $0x10] sm:$0xff]
  %v83 = vld [vmem:[#allocation2 + $0x18] sm:$0xff]
  %v84 = vld [vmem:[#allocation2 + $0x20] sm:$0xff]
  %v85 = vld [vmem:[#allocation2 + $0x28] sm:$0xff]
  %v86 = vld [vmem:[#allocation2 + $0x30] sm:$0xff]
  %v87 = vld [vmem:[#allocation2 + $0x38] sm:$0xff]
  %v88 = vld [vmem:[#allocation2 + $0x40] sm:$0xff]
  %v89 = vld [vmem:[#allocation2 + $0x48] sm:$0xff]
  %v90 = vld [vmem:[#allocation2 + $0x50] sm:$0xff]
  %v91 = vld [vmem:[#allocation2 + $0x58] sm:$0xff]
  %v92 = vld [vmem:[#allocation2 + $0x60] sm:$0xff]
  %v93 = vld [vmem:[#allocation2 + $0x68] sm:$0xff]
  %v94 = vld [vmem:[#allocation2 + $0x70] sm:$0xff]
  %v95 = vld [vmem:[#allocation2 + $0x78] sm:$0xff]
  %v96 = vld [vmem:[#allocation2 + $0x80] sm:$0xff]
  %v97 = vld [vmem:[#allocation2 + $0x88] sm:$0xff]
  %v98 = vld [vmem:[#allocation2 + $0x90] sm:$0xff]
  %v99 = vld [vmem:[#allocation2 + $0x98] sm:$0xff]
  %v100 = vld [vmem:[#allocation2 + $0xa0] sm:$0xff]
  %v101 = vld [vmem:[#allocation2 + $0xa8] sm:$0xff]
  %v102 = vld [vmem:[#allocation2 + $0xb0] sm:$0xff]
  %v103 = vld [vmem:[#allocation2 + $0xb8] sm:$0xff]
  %v104 = vld [vmem:[#allocation2 + $0xc0] sm:$0xff]
  %v105 = vld [vmem:[#allocation2 + $0xc8] sm:$0xff]
  %v106 = vld [vmem:[#allocation2 + $0xd0] sm:$0xff]
  %v107 = vld [vmem:[#allocation2 + $0xd8] sm:$0xff]
  %v108 = vld [vmem:[#allocation2 + $0xe0] sm:$0xff]
  %v109 = vld [vmem:[#allocation2 + $0xe8] sm:$0xff]
  %v110 = vld [vmem:[#allocation2 + $0xf0] sm:$0xff]
  %v111 = vld [vmem:[#allocation2 + $0xf8] sm:$0xff]
  %v112 = vld [vmem:[#allocation2 + $0x100] sm:$0xff]
  %v113 = vld [vmem:[#allocation2 + $0x108] sm:$0xff]
  %v114 = vld [vmem:[#allocation2 + $0x110] sm:$0xff]
  %v115 = vld [vmem:[#allocation2 + $0x118] sm:$0xff]
  %v116 = vld [vmem:[#allocation2 + $0x120] sm:$0xff]
  %v117 = vld [vmem:[#allocation2 + $0x128] sm:$0xff]
  %v118 = vld [vmem:[#allocation2 + $0x130] sm:$0xff]
  %v119 = vld [vmem:[#allocation2 + $0x138] sm:$0xff]
  %v120 = vld [vmem:[#allocation2 + $0x140] sm:$0xff]
  %v121 = vld [vmem:[#allocation2 + $0x148] sm:$0xff]
  %v122 = vld [vmem:[#allocation2 + $0x150] sm:$0xff]
  %v123 = vld [vmem:[#allocation2 + $0x158] sm:$0xff]
  %v124 = vld [vmem:[#allocation2 + $0x160] sm:$0xff]
  %v125 = vld [vmem:[#allocation2 + $0x168] sm:$0xff]
  %v126 = vld [vmem:[#allocation2 + $0x170] sm:$0xff]
  %v127 = vld [vmem:[#allocation2 + $0x178] sm:$0xff]
  %v128 = vld [vmem:[#allocation2 + $0x180] sm:$0xff]
  %v129 = vld [vmem:[#allocation2 + $0x188] sm:$0xff]
  %v130 = vld [vmem:[#allocation2 + $0x190] sm:$0xff]
  %v131 = vld [vmem:[#allocation2 + $0x198] sm:$0xff]
  %v132 = vld [vmem:[#allocation2 + $0x1a0] sm:$0xff]
  %v133 = vld [vmem:[#allocation2 + $0x1a8] sm:$0xff]
  %v134 = vld [vmem:[#allocation2 + $0x1b0] sm:$0xff]
  %v135 = vld [vmem:[#allocation2 + $0x1b8] sm:$0xff]
  %v136 = vld [vmem:[#allocation2 + $0x1c0] sm:$0xff]
  %v137 = vld [vmem:[#allocation2 + $0x1c8] sm:$0xff]
  %v138 = vld [vmem:[#allocation2 + $0x1d0] sm:$0xff]
  %v139 = vld [vmem:[#allocation2 + $0x1d8] sm:$0xff]
  %v140 = vld [vmem:[#allocation2 + $0x1e0] sm:$0xff]
  %v141 = vld [vmem:[#allocation2 + $0x1e8] sm:$0xff]
  %v142 = vld [vmem:[#allocation2 + $0x1f0] sm:$0xff]
  %v143 = vld [vmem:[#allocation2 + $0x1f8] sm:$0xff]
  %v144 = vld [vmem:[%s0] sm:$0xf]
  %v145 = vld [vmem:[%s0 + $0x4] sm:$0xf]
  %v146 = vld [vmem:[%s0 + $0x8] sm:$0xf]
  %v147 = vld [vmem:[%s0 + $0xc] sm:$0xf]
  %v148 = vld [vmem:[%s0 + $0x10] sm:$0xf]
  %v149 = vld [vmem:[%s0 + $0x14] sm:$0xf]
  %v150 = vld [vmem:[%s0 + $0x18] sm:$0xf]
  %v151 = vld [vmem:[%s0 + $0x1c] sm:$0xf]
  %v152 = vld [vmem:[%s0 + $0x20] sm:$0xf]
  %v153 = vld [vmem:[%s0 + $0x24] sm:$0xf]
  %v154 = vld [vmem:[%s0 + $0x28] sm:$0xf]
  %v155 = vld [vmem:[%s0 + $0x2c] sm:$0xf]
  %v156 = vld [vmem:[%s0 + $0x30] sm:$0xf]
  %v157 = vld [vmem:[%s0 + $0x34] sm:$0xf]
  %v158 = vld [vmem:[%s0 + $0x38] sm:$0xf]
  %v159 = vld [vmem:[%s0 + $0x3c] sm:$0xf]
  %v160 = vld [vmem:[%s0 + $0x40] sm:$0xf]
  %v161 = vld [vmem:[%s0 + $0x44] sm:$0xf]
  %v162 = vld [vmem:[%s0 + $0x48] sm:$0xf]
  %v163 = vld [vmem:[%s0 + $0x4c] sm:$0xf]
  %v164 = vld [vmem:[%s0 + $0x50] sm:$0xf]
  %v165 = vld [vmem:[%s0 + $0x54] sm:$0xf]
  %v166 = vld [vmem:[%s0 + $0x58] sm:$0xf]
  %v167 = vld [vmem:[%s0 + $0x5c] sm:$0xf]
  %v168 = vld [vmem:[%s0 + $0x60] sm:$0xf]
  %v169 = vld [vmem:[%s0 + $0x64] sm:$0xf]
  %v170 = vld [vmem:[%s0 + $0x68] sm:$0xf]
  %v171 = vld [vmem:[%s0 + $0x6c] sm:$0xf]
  %v172 = vld [vmem:[%s0 + $0x70] sm:$0xf]
  %v173 = vld [vmem:[%s0 + $0x74] sm:$0xf]
  %v174 = vld [vmem:[%s0 + $0x78] sm:$0xf]
  %v175 = vld [vmem:[%s0 + $0x7c] sm:$0xf]
  %v176 = vld [vmem:[%s0 + $0x80] sm:$0xf]
  %v177 = vld [vmem:[%s0 + $0x84] sm:$0xf]
  %v178 = vld [vmem:[%s0 + $0x88] sm:$0xf]
  %v179 = vld [vmem:[%s0 + $0x8c] sm:$0xf]
  %v180 = vld [vmem:[%s0 + $0x90] sm:$0xf]
  %v181 = vld [vmem:[%s0 + $0x94] sm:$0xf]
  %v182 = vld [vmem:[%s0 + $0x98] sm:$0xf]
  %v183 = vld [vmem:[%s0 + $0x9c] sm:$0xf]
  %v184 = vld [vmem:[%s0 + $0xa0] sm:$0xf]
  %v185 = vld [vmem:[%s0 + $0xa4] sm:$0xf]
  %v186 = vld [vmem:[%s0 + $0xa8] sm:$0xf]
  %v187 = vld [vmem:[%s0 + $0xac] sm:$0xf]
  %v188 = vld [vmem:[%s0 + $0xb0] sm:$0xf]
  %v189 = vld [vmem:[%s0 + $0xb4] sm:$0xf]
  %v190 = vld [vmem:[%s0 + $0xb8] sm:$0xf]
  %v191 = vld [vmem:[%s0 + $0xbc] sm:$0xf]
  %v192 = vld [vmem:[%s0 + $0xc0] sm:$0xf]
  %v193 = vld [vmem:[%s0 + $0xc4] sm:$0xf]
  %v194 = vld [vmem:[%s0 + $0xc8] sm:$0xf]
  %v195 = vld [vmem:[%s0 + $0xcc] sm:$0xf]
  %v196 = vld [vmem:[%s0 + $0xd0] sm:$0xf]
  %v197 = vld [vmem:[%s0 + $0xd4] sm:$0xf]
  %v198 = vld [vmem:[%s0 + $0xd8] sm:$0xf]
  %v199 = vld [vmem:[%s0 + $0xdc] sm:$0xf]
  %v200 = vld [vmem:[%s0 + $0xe0] sm:$0xf]
  %v201 = vld [vmem:[%s0 + $0xe4] sm:$0xf]
  %v202 = vld [vmem:[%s0 + $0xe8] sm:$0xf]
  %v203 = vld [vmem:[%s0 + $0xec] sm:$0xf]
  %v204 = vld [vmem:[%s0 + $0xf0] sm:$0xf]
  %v205 = vld [vmem:[%s0 + $0xf4] sm:$0xf]
  %v206 = vld [vmem:[%s0 + $0xf8] sm:$0xf]
  %v207 = vld [vmem:[%s0 + $0xfc] sm:$0xf]
  %v208 = vld [vmem:[%s1] sm:$0xf]
  %v209 = vld [vmem:[%s1 + $0x4] sm:$0xf]
  %v210 = vld [vmem:[%s1 + $0x8] sm:$0xf]
  %v211 = vld [vmem:[%s1 + $0xc] sm:$0xf]
  %v212 = vld [vmem:[%s1 + $0x10] sm:$0xf]
  %v213 = vld [vmem:[%s1 + $0x14] sm:$0xf]
  %v214 = vld [vmem:[%s1 + $0x18] sm:$0xf]
  %v215 = vld [vmem:[%s1 + $0x1c] sm:$0xf]
  %v216 = vld [vmem:[%s1 + $0x20] sm:$0xf]
  %v217 = vld [vmem:[%s1 + $0x24] sm:$0xf]
  %v218 = vld [vmem:[%s1 + $0x28] sm:$0xf]
  %v219 = vld [vmem:[%s1 + $0x2c] sm:$0xf]
  %v220 = vld [vmem:[%s1 + $0x30] sm:$0xf]
  %v221 = vld [vmem:[%s1 + $0x34] sm:$0xf]
  %v222 = vld [vmem:[%s1 + $0x38] sm:$0xf]
  %v223 = vld [vmem:[%s1 + $0x3c] sm:$0xf]
  %v288 = vunpack.c.l.b16 %v144
  %v289 = vunpack.c.l.b16 %v145
  %v290 = vunpack.c.l.b16 %v146
  %v291 = vunpack.c.l.b16 %v147
  %v292 = vunpack.c.l.b16 %v148
  %v293 = vunpack.c.l.b16 %v149
  %v294 = vunpack.c.l.b16 %v150
  %v295 = vunpack.c.l.b16 %v151
  %v296 = vunpack.c.l.b16 %v152
  %v297 = vunpack.c.l.b16 %v153
  %v298 = vunpack.c.l.b16 %v154
  %v299 = vunpack.c.l.b16 %v155
  %v300 = vunpack.c.l.b16 %v156
  %v301 = vunpack.c.l.b16 %v157
  %v302 = vunpack.c.l.b16 %v158
  %v303 = vunpack.c.l.b16 %v159
  %v304 = vunpack.c.l.b16 %v160
  %v305 = vunpack.c.l.b16 %v161
  %v306 = vunpack.c.l.b16 %v162
  %v307 = vunpack.c.l.b16 %v163
  %v308 = vunpack.c.l.b16 %v164
  %v309 = vunpack.c.l.b16 %v165
  %v310 = vunpack.c.l.b16 %v166
  %v311 = vunpack.c.l.b16 %v167
  %v312 = vunpack.c.l.b16 %v168
  %v313 = vunpack.c.l.b16 %v169
  %v314 = vunpack.c.l.b16 %v170
  %v315 = vunpack.c.l.b16 %v171
  %v316 = vunpack.c.l.b16 %v172
  %v317 = vunpack.c.l.b16 %v173
  %v318 = vunpack.c.l.b16 %v174
  %v319 = vunpack.c.l.b16 %v175
  %v320 = vunpack.c.l.b16 %v176
  %v321 = vunpack.c.l.b16 %v177
  %v322 = vunpack.c.l.b16 %v178
  %v323 = vunpack.c.l.b16 %v179
  %v324 = vunpack.c.l.b16 %v180
  %v325 = vunpack.c.l.b16 %v181
  %v326 = vunpack.c.l.b16 %v182
  %v327 = vunpack.c.l.b16 %v183
  %v328 = vunpack.c.l.b16 %v184
  %v329 = vunpack.c.l.b16 %v185
  %v330 = vunpack.c.l.b16 %v186
  %v331 = vunpack.c.l.b16 %v187
  %v332 = vunpack.c.l.b16 %v188
  %v333 = vunpack.c.l.b16 %v189
  %v334 = vunpack.c.l.b16 %v190
  %v335 = vunpack.c.l.b16 %v191
  %v336 = vunpack.c.l.b16 %v192
  %v337 = vunpack.c.l.b16 %v193
  %v338 = vunpack.c.l.b16 %v194
  %v339 = vunpack.c.l.b16 %v195
  %v340 = vunpack.c.l.b16 %v196
  %v341 = vunpack.c.l.b16 %v197
  %v342 = vunpack.c.l.b16 %v198
  %v343 = vunpack.c.l.b16 %v199
  %v344 = vunpack.c.l.b16 %v200
  %v345 = vunpack.c.l.b16 %v201
  %v346 = vunpack.c.l.b16 %v202
  %v347 = vunpack.c.l.b16 %v203
  %v348 = vunpack.c.l.b16 %v204
  %v349 = vunpack.c.l.b16 %v205
  %v350 = vunpack.c.l.b16 %v206
  %v351 = vunpack.c.l.b16 %v207
  %v352 = vpack.c.b16 %v289, %v288
  %v353 = vpack.c.b16 %v291, %v290
  %v354 = vpack.c.b16 %v293, %v292
  %v355 = vpack.c.b16 %v295, %v294
  %v356 = vpack.c.b16 %v297, %v296
  %v357 = vpack.c.b16 %v299, %v298
  %v358 = vpack.c.b16 %v301, %v300
  %v359 = vpack.c.b16 %v303, %v302
  %v360 = vpack.c.b16 %v305, %v304
  %v361 = vpack.c.b16 %v307, %v306
  %v362 = vpack.c.b16 %v309, %v308
  %v363 = vpack.c.b16 %v311, %v310
  %v364 = vpack.c.b16 %v313, %v312
  %v365 = vpack.c.b16 %v315, %v314
  %v366 = vpack.c.b16 %v317, %v316
  %v367 = vpack.c.b16 %v319, %v318
  %v368 = vpack.c.b16 %v321, %v320
  %v369 = vpack.c.b16 %v323, %v322
  %v370 = vpack.c.b16 %v325, %v324
  %v371 = vpack.c.b16 %v327, %v326
  %v372 = vpack.c.b16 %v329, %v328
  %v373 = vpack.c.b16 %v331, %v330
  %v374 = vpack.c.b16 %v333, %v332
  %v375 = vpack.c.b16 %v335, %v334
  %v376 = vpack.c.b16 %v337, %v336
  %v377 = vpack.c.b16 %v339, %v338
  %v378 = vpack.c.b16 %v341, %v340
  %v379 = vpack.c.b16 %v343, %v342
  %v380 = vpack.c.b16 %v345, %v344
  %v381 = vpack.c.b16 %v347, %v346
  %v382 = vpack.c.b16 %v349, %v348
  %v383 = vpack.c.b16 %v351, %v350
  %v432 = vunpack.c.l.b16 %v208
  %v433 = vunpack.c.l.b16 %v209
  %v434 = vunpack.c.l.b16 %v210
  %v435 = vunpack.c.l.b16 %v211
  %v436 = vunpack.c.l.b16 %v212
  %v437 = vunpack.c.l.b16 %v213
  %v438 = vunpack.c.l.b16 %v214
  %v439 = vunpack.c.l.b16 %v215
  %v440 = vunpack.c.l.b16 %v216
  %v441 = vunpack.c.l.b16 %v217
  %v442 = vunpack.c.l.b16 %v218
  %v443 = vunpack.c.l.b16 %v219
  %v444 = vunpack.c.l.b16 %v220
  %v445 = vunpack.c.l.b16 %v221
  %v446 = vunpack.c.l.b16 %v222
  %v447 = vunpack.c.l.b16 %v223
  %v448 = vpack.c.b16 %v433, %v432
  %v449 = vpack.c.b16 %v435, %v434
  %v450 = vpack.c.b16 %v437, %v436
  %v451 = vpack.c.b16 %v439, %v438
  %v452 = vpack.c.b16 %v441, %v440
  %v453 = vpack.c.b16 %v443, %v442
  %v454 = vpack.c.b16 %v445, %v444
  %v455 = vpack.c.b16 %v447, %v446
  %464 = vmatprep.subr.bf16.mxu0 0
  %465 = vmatpush1.bf16.msra.mxu0 %v448
  %466 = vmatprep.subr.bf16.mxu0 0
  %467 = vmatpush1.bf16.msra.mxu0 %v449
  %468 = vmatprep.subr.bf16.mxu0 0
  %469 = vmatpush1.bf16.msra.mxu0 %v450
  %470 = vmatprep.subr.bf16.mxu0 0
  %471 = vmatpush1.bf16.msra.mxu0 %v451
  %472 = vmatprep.subr.bf16.mxu0 0
  %473 = vmatpush1.bf16.msra.mxu0 %v452
  %474 = vmatprep.subr.bf16.mxu0 0
  %475 = vmatpush1.bf16.msra.mxu0 %v453
  %476 = vmatprep.subr.bf16.mxu0 0
  %477 = vmatpush1.bf16.msra.mxu0 %v454
  %478 = vmatprep.subr.bf16.mxu0 0
  %479 = vmatpush1.bf16.msra.mxu0 %v455
  %480 = vmatprep.subr.bf16.mxu0 0
  %481 = vmatpush1.bf16.msra.mxu0 0
  %482 = vmatprep.subr.bf16.mxu0 0
  %483 = vmatpush1.bf16.msra.mxu0 0
  %484 = vmatprep.subr.bf16.mxu0 0
  %485 = vmatpush1.bf16.msra.mxu0 0
  %486 = vmatprep.subr.bf16.mxu0 0
  %487 = vmatpush1.bf16.msra.mxu0 0
  %488 = vmatprep.subr.bf16.mxu0 0
  %489 = vmatpush1.bf16.msra.mxu0 0
  %490 = vmatprep.subr.bf16.mxu0 0
  %491 = vmatpush1.bf16.msra.mxu0 0
  %492 = vmatprep.subr.bf16.mxu0 0
  %493 = vmatpush1.bf16.msra.mxu0 0
  %494 = vmatprep.subr.bf16.mxu0 0
  %495 = vmatpush1.bf16.msra.mxu0 0
  %496 = vmatprep.mubr.bf16.mxu0 0
  %497 = vmatmul.mubr.bf16.gmra.mrb[0].mxu0 %v352
  %v498 = vpop.f32.mrb[0].mxu0
  %v499 = vadd.f32 0.0, %v498
  %v500 = vpop.f32.mrb[0].mxu0
  %v501 = vpop.f32.mrb[0].mxu0
  %v502 = vadd.f32 0.0, %v501
  %v503 = vpop.f32.mrb[0].mxu0
  %504 = vmatprep.mubr.bf16.mxu0 0
  %505 = vmatmul.mubr.bf16.gmra.mrb[0].mxu0 %v353
  %v506 = vpop.f32.mrb[0].mxu0
  %v507 = vadd.f32 0.0, %v506
  %v508 = vpop.f32.mrb[0].mxu0
  %v509 = vpop.f32.mrb[0].mxu0
  %v510 = vadd.f32 0.0, %v509
  %v511 = vpop.f32.mrb[0].mxu0
  %512 = vmatprep.mubr.bf16.mxu0 0
  %513 = vmatmul.mubr.bf16.gmra.mrb[0].mxu0 %v354
  %v514 = vpop.f32.mrb[0].mxu0
  %v515 = vadd.f32 0.0, %v514
  %v516 = vpop.f32.mrb[0].mxu0
  %v517 = vpop.f32.mrb[0].mxu0
  %v518 = vadd.f32 0.0, %v517
  %v519 = vpop.f32.mrb[0].mxu0
  %520 = vmatprep.mubr.bf16.mxu0 0
  %521 = vmatmul.mubr.bf16.gmra.mrb[0].mxu0 %v355
  %v522 = vpop.f32.mrb[0].mxu0
  %v523 = vadd.f32 0.0, %v522
  %v524 = vpop.f32.mrb[0].mxu0
  %v525 = vpop.f32.mrb[0].mxu0
  %v526 = vadd.f32 0.0, %v525
  %v527 = vpop.f32.mrb[0].mxu0
  %528 = vmatprep.mubr.bf16.mxu0 0
  %529 = vmatmul.mubr.bf16.gmra.mrb[0].mxu0 %v356
  %v530 = vpop.f32.mrb[0].mxu0
  %v531 = vadd.f32 0.0, %v530
  %v532 = vpop.f32.mrb[0].mxu0
  %v533 = vpop.f32.mrb[0].mxu0
  %v534 = vadd.f32 0.0, %v533
  %v535 = vpop.f32.mrb[0].mxu0
  %536 = vmatprep.mubr.bf16.mxu0 0
  %537 = vmatmul.mubr.bf16.gmra.mrb[0].mxu0 %v357
  %v538 = vpop.f32.mrb[0].mxu0
  %v539 = vadd.f32 0.0, %v538
  %v540 = vpop.f32.mrb[0].mxu0
  %v541 = vpop.f32.mrb[0].mxu0
  %v542 = vadd.f32 0.0, %v541
  %v543 = vpop.f32.mrb[0].mxu0
  %544 = vmatprep.mubr.bf16.mxu0 0
  %545 = vmatmul.mubr.bf16.gmra.mrb[0].mxu0 %v358
  %v546 = vpop.f32.mrb[0].mxu0
  %v547 = vadd.f32 0.0, %v546
  %v548 = vpop.f32.mrb[0].mxu0
  %v549 = vpop.f32.mrb[0].mxu0
  %v550 = vadd.f32 0.0, %v549
  %v551 = vpop.f32.mrb[0].mxu0
  %552 = vmatprep.mubr.bf16.mxu0 0
  %553 = vmatmul.mubr.bf16.gmra.mrb[0].mxu0 %v359
  %v554 = vpop.f32.mrb[0].mxu0
  %v555 = vadd.f32 0.0, %v554
  %v556 = vpop.f32.mrb[0].mxu0
  %v557 = vpop.f32.mrb[0].mxu0
  %v558 = vadd.f32 0.0, %v557
  %v559 = vpop.f32.mrb[0].mxu0
  %560 = vmatprep.mubr.bf16.mxu0 0
  %561 = vmatmul.mubr.bf16.gmra.mrb[0].mxu0 %v360
  %v562 = vpop.f32.mrb[0].mxu0
  %v563 = vadd.f32 0.0, %v562
  %v564 = vpop.f32.mrb[0].mxu0
  %v565 = vpop.f32.mrb[0].mxu0
  %v566 = vadd.f32 0.0, %v565
  %v567 = vpop.f32.mrb[0].mxu0
  %568 = vmatprep.mubr.bf16.mxu0 0
  %569 = vmatmul.mubr.bf16.gmra.mrb[0].mxu0 %v361
  %v570 = vpop.f32.mrb[0].mxu0
  %v571 = vadd.f32 0.0, %v570
  %v572 = vpop.f32.mrb[0].mxu0
  %v573 = vpop.f32.mrb[0].mxu0
  %v574 = vadd.f32 0.0, %v573
  %v575 = vpop.f32.mrb[0].mxu0
  %576 = vmatprep.mubr.bf16.mxu0 0
  %577 = vmatmul.mubr.bf16.gmra.mrb[0].mxu0 %v362
  %v578 = vpop.f32.mrb[0].mxu0
  %v579 = vadd.f32 0.0, %v578
  %v580 = vpop.f32.mrb[0].mxu0
  %v581 = vpop.f32.mrb[0].mxu0
  %v582 = vadd.f32 0.0, %v581
  %v583 = vpop.f32.mrb[0].mxu0
  %584 = vmatprep.mubr.bf16.mxu0 0
  %585 = vmatmul.mubr.bf16.gmra.mrb[0].mxu0 %v363
  %v586 = vpop.f32.mrb[0].mxu0
  %v587 = vadd.f32 0.0, %v586
  %v588 = vpop.f32.mrb[0].mxu0
  %v589 = vpop.f32.mrb[0].mxu0
  %v590 = vadd.f32 0.0, %v589
  %v591 = vpop.f32.mrb[0].mxu0
  %592 = vmatprep.mubr.bf16.mxu0 0
  %593 = vmatmul.mubr.bf16.gmra.mrb[0].mxu0 %v364
  %v594 = vpop.f32.mrb[0].mxu0
  %v595 = vadd.f32 0.0, %v594
  %v596 = vpop.f32.mrb[0].mxu0
  %v597 = vpop.f32.mrb[0].mxu0
  %v598 = vadd.f32 0.0, %v597
  %v599 = vpop.f32.mrb[0].mxu0
  %600 = vmatprep.mubr.bf16.mxu0 0
  %601 = vmatmul.mubr.bf16.gmra.mrb[0].mxu0 %v365
  %v602 = vpop.f32.mrb[0].mxu0
  %v603 = vadd.f32 0.0, %v602
  %v604 = vpop.f32.mrb[0].mxu0
  %v605 = vpop.f32.mrb[0].mxu0
  %v606 = vadd.f32 0.0, %v605
  %v607 = vpop.f32.mrb[0].mxu0
  %608 = vmatprep.mubr.bf16.mxu0 0
  %609 = vmatmul.mubr.bf16.gmra.mrb[0].mxu0 %v366
  %v610 = vpop.f32.mrb[0].mxu0
  %v611 = vadd.f32 0.0, %v610
  %v612 = vpop.f32.mrb[0].mxu0
  %v613 = vpop.f32.mrb[0].mxu0
  %v614 = vadd.f32 0.0, %v613
  %v615 = vpop.f32.mrb[0].mxu0
  %616 = vmatprep.mubr.bf16.mxu0 0
  %617 = vmatmul.mubr.bf16.gmra.mrb[0].mxu0 %v367
  %v618 = vpop.f32.mrb[0].mxu0
  %v619 = vadd.f32 0.0, %v618
  %v620 = vpop.f32.mrb[0].mxu0
  %v621 = vpop.f32.mrb[0].mxu0
  %v622 = vadd.f32 0.0, %v621
  %v623 = vpop.f32.mrb[0].mxu0
  %624 = vmatprep.mubr.bf16.mxu0 0
  %625 = vmatmul.mubr.bf16.gmra.mrb[0].mxu0 %v368
  %v626 = vpop.f32.mrb[0].mxu0
  %v627 = vadd.f32 0.0, %v626
  %v628 = vpop.f32.mrb[0].mxu0
  %v629 = vpop.f32.mrb[0].mxu0
  %v630 = vadd.f32 0.0, %v629
  %v631 = vpop.f32.mrb[0].mxu0
  %632 = vmatprep.mubr.bf16.mxu0 0
  %633 = vmatmul.mubr.bf16.gmra.mrb[0].mxu0 %v369
  %v634 = vpop.f32.mrb[0].mxu0
  %v635 = vadd.f32 0.0, %v634
  %v636 = vpop.f32.mrb[0].mxu0
  %v637 = vpop.f32.mrb[0].mxu0
  %v638 = vadd.f32 0.0, %v637
  %v639 = vpop.f32.mrb[0].mxu0
  %640 = vmatprep.mubr.bf16.mxu0 0
  %641 = vmatmul.mubr.bf16.gmra.mrb[0].mxu0 %v370
  %v642 = vpop.f32.mrb[0].mxu0
  %v643 = vadd.f32 0.0, %v642
  %v644 = vpop.f32.mrb[0].mxu0
  %v645 = vpop.f32.mrb[0].mxu0
  %v646 = vadd.f32 0.0, %v645
  %v647 = vpop.f32.mrb[0].mxu0
  %648 = vmatprep.mubr.bf16.mxu0 0
  %649 = vmatmul.mubr.bf16.gmra.mrb[0].mxu0 %v371
  %v650 = vpop.f32.mrb[0].mxu0
  %v651 = vadd.f32 0.0, %v650
  %v652 = vpop.f32.mrb[0].mxu0
  %v653 = vpop.f32.mrb[0].mxu0
  %v654 = vadd.f32 0.0, %v653
  %v655 = vpop.f32.mrb[0].mxu0
  %656 = vmatprep.mubr.bf16.mxu0 0
  %657 = vmatmul.mubr.bf16.gmra.mrb[0].mxu0 %v372
  %v658 = vpop.f32.mrb[0].mxu0
  %v659 = vadd.f32 0.0, %v658
  %v660 = vpop.f32.mrb[0].mxu0
  %v661 = vpop.f32.mrb[0].mxu0
  %v662 = vadd.f32 0.0, %v661
  %v663 = vpop.f32.mrb[0].mxu0
  %664 = vmatprep.mubr.bf16.mxu0 0
  %665 = vmatmul.mubr.bf16.gmra.mrb[0].mxu0 %v373
  %v666 = vpop.f32.mrb[0].mxu0
  %v667 = vadd.f32 0.0, %v666
  %v668 = vpop.f32.mrb[0].mxu0
  %v669 = vpop.f32.mrb[0].mxu0
  %v670 = vadd.f32 0.0, %v669
  %v671 = vpop.f32.mrb[0].mxu0
  %672 = vmatprep.mubr.bf16.mxu0 0
  %673 = vmatmul.mubr.bf16.gmra.mrb[0].mxu0 %v374
  %v674 = vpop.f32.mrb[0].mxu0
  %v675 = vadd.f32 0.0, %v674
  %v676 = vpop.f32.mrb[0].mxu0
  %v677 = vpop.f32.mrb[0].mxu0
  %v678 = vadd.f32 0.0, %v677
  %v679 = vpop.f32.mrb[0].mxu0
  %680 = vmatprep.mubr.bf16.mxu0 0
  %681 = vmatmul.mubr.bf16.gmra.mrb[0].mxu0 %v375
  %v682 = vpop.f32.mrb[0].mxu0
  %v683 = vadd.f32 0.0, %v682
  %v684 = vpop.f32.mrb[0].mxu0
  %v685 = vpop.f32.mrb[0].mxu0
  %v686 = vadd.f32 0.0, %v685
  %v687 = vpop.f32.mrb[0].mxu0
  %688 = vmatprep.mubr.bf16.mxu0 0
  %689 = vmatmul.mubr.bf16.gmra.mrb[0].mxu0 %v376
  %v690 = vpop.f32.mrb[0].mxu0
  %v691 = vadd.f32 0.0, %v690
  %v692 = vpop.f32.mrb[0].mxu0
  %v693 = vpop.f32.mrb[0].mxu0
  %v694 = vadd.f32 0.0, %v693
  %v695 = vpop.f32.mrb[0].mxu0
  %696 = vmatprep.mubr.bf16.mxu0 0
  %697 = vmatmul.mubr.bf16.gmra.mrb[0].mxu0 %v377
  %v698 = vpop.f32.mrb[0].mxu0
  %v699 = vadd.f32 0.0, %v698
  %v700 = vpop.f32.mrb[0].mxu0
  %v701 = vpop.f32.mrb[0].mxu0
  %v702 = vadd.f32 0.0, %v701
  %v703 = vpop.f32.mrb[0].mxu0
  %704 = vmatprep.mubr.bf16.mxu0 0
  %705 = vmatmul.mubr.bf16.gmra.mrb[0].mxu0 %v378
  %v706 = vpop.f32.mrb[0].mxu0
  %v707 = vadd.f32 0.0, %v706
  %v708 = vpop.f32.mrb[0].mxu0
  %v709 = vpop.f32.mrb[0].mxu0
  %v710 = vadd.f32 0.0, %v709
  %v711 = vpop.f32.mrb[0].mxu0
  %712 = vmatprep.mubr.bf16.mxu0 0
  %713 = vmatmul.mubr.bf16.gmra.mrb[0].mxu0 %v379
  %v714 = vpop.f32.mrb[0].mxu0
  %v715 = vadd.f32 0.0, %v714
  %v716 = vpop.f32.mrb[0].mxu0
  %v717 = vpop.f32.mrb[0].mxu0
  %v718 = vadd.f32 0.0, %v717
  %v719 = vpop.f32.mrb[0].mxu0
  %720 = vmatprep.mubr.bf16.mxu0 0
  %721 = vmatmul.mubr.bf16.gmra.mrb[0].mxu0 %v380
  %v722 = vpop.f32.mrb[0].mxu0
  %v723 = vadd.f32 0.0, %v722
  %v724 = vpop.f32.mrb[0].mxu0
  %v725 = vpop.f32.mrb[0].mxu0
  %v726 = vadd.f32 0.0, %v725
  %v727 = vpop.f32.mrb[0].mxu0
  %728 = vmatprep.mubr.bf16.mxu0 0
  %729 = vmatmul.mubr.bf16.gmra.mrb[0].mxu0 %v381
  %v730 = vpop.f32.mrb[0].mxu0
  %v731 = vadd.f32 0.0, %v730
  %v732 = vpop.f32.mrb[0].mxu0
  %v733 = vpop.f32.mrb[0].mxu0
  %v734 = vadd.f32 0.0, %v733
  %v735 = vpop.f32.mrb[0].mxu0
  %736 = vmatprep.mubr.bf16.mxu0 0
  %737 = vmatmul.mubr.bf16.gmra.mrb[0].mxu0 %v382
  %v738 = vpop.f32.mrb[0].mxu0
  %v739 = vadd.f32 0.0, %v738
  %v740 = vpop.f32.mrb[0].mxu0
  %v741 = vpop.f32.mrb[0].mxu0
  %v742 = vadd.f32 0.0, %v741
  %v743 = vpop.f32.mrb[0].mxu0
  %744 = vmatprep.mubr.bf16.mxu0 0
  %745 = vmatmul.mubr.bf16.gmra.mrb[0].mxu0 %v383
  %v746 = vpop.f32.mrb[0].mxu0
  %v747 = vadd.f32 0.0, %v746
  %v748 = vpop.f32.mrb[0].mxu0
  %v749 = vpop.f32.mrb[0].mxu0
  %v750 = vadd.f32 0.0, %v749
  %v751 = vpop.f32.mrb[0].mxu0
  %752 = vdwg.mxu0
  %v753 = vadd.f32 %v80, %v499
  %v754 = vadd.f32 %v81, %v502
  %v755 = vadd.f32 %v82, %v507
  %v756 = vadd.f32 %v83, %v510
  %v757 = vadd.f32 %v84, %v515
  %v758 = vadd.f32 %v85, %v518
  %v759 = vadd.f32 %v86, %v523
  %v760 = vadd.f32 %v87, %v526
  %v761 = vadd.f32 %v88, %v531
  %v762 = vadd.f32 %v89, %v534
  %v763 = vadd.f32 %v90, %v539
  %v764 = vadd.f32 %v91, %v542
  %v765 = vadd.f32 %v92, %v547
  %v766 = vadd.f32 %v93, %v550
  %v767 = vadd.f32 %v94, %v555
  %v768 = vadd.f32 %v95, %v558
  %v769 = vadd.f32 %v96, %v563
  %v770 = vadd.f32 %v97, %v566
  %v771 = vadd.f32 %v98, %v571
  %v772 = vadd.f32 %v99, %v574
  %v773 = vadd.f32 %v100, %v579
  %v774 = vadd.f32 %v101, %v582
  %v775 = vadd.f32 %v102, %v587
  %v776 = vadd.f32 %v103, %v590
  %v777 = vadd.f32 %v104, %v595
  %v778 = vadd.f32 %v105, %v598
  %v779 = vadd.f32 %v106, %v603
  %v780 = vadd.f32 %v107, %v606
  %v781 = vadd.f32 %v108, %v611
  %v782 = vadd.f32 %v109, %v614
  %v783 = vadd.f32 %v110, %v619
  %v784 = vadd.f32 %v111, %v622
  %v785 = vadd.f32 %v112, %v627
  %v786 = vadd.f32 %v113, %v630
  %v787 = vadd.f32 %v114, %v635
  %v788 = vadd.f32 %v115, %v638
  %v789 = vadd.f32 %v116, %v643
  %v790 = vadd.f32 %v117, %v646
  %v791 = vadd.f32 %v118, %v651
  %v792 = vadd.f32 %v119, %v654
  %v793 = vadd.f32 %v120, %v659
  %v794 = vadd.f32 %v121, %v662
  %v795 = vadd.f32 %v122, %v667
  %v796 = vadd.f32 %v123, %v670
  %v797 = vadd.f32 %v124, %v675
  %v798 = vadd.f32 %v125, %v678
  %v799 = vadd.f32 %v126, %v683
  %v800 = vadd.f32 %v127, %v686
  %v801 = vadd.f32 %v128, %v691
  %v802 = vadd.f32 %v129, %v694
  %v803 = vadd.f32 %v130, %v699
  %v804 = vadd.f32 %v131, %v702
  %v805 = vadd.f32 %v132, %v707
  %v806 = vadd.f32 %v133, %v710
  %v807 = vadd.f32 %v134, %v715
  %v808 = vadd.f32 %v135, %v718
  %v809 = vadd.f32 %v136, %v723
  %v810 = vadd.f32 %v137, %v726
  %v811 = vadd.f32 %v138, %v731
  %v812 = vadd.f32 %v139, %v734
  %v813 = vadd.f32 %v140, %v739
  %v814 = vadd.f32 %v141, %v742
  %v815 = vadd.f32 %v142, %v747
  %v816 = vadd.f32 %v143, %v750
  %817 = vst [vmem:[#allocation2] sm:$0xff] %v753
  %818 = vst [vmem:[#allocation2 + $0x8] sm:$0xff] %v754
  %819 = vst [vmem:[#allocation2 + $0x10] sm:$0xff] %v755
  %820 = vst [vmem:[#allocation2 + $0x18] sm:$0xff] %v756
  %821 = vst [vmem:[#allocation2 + $0x20] sm:$0xff] %v757
  %822 = vst [vmem:[#allocation2 + $0x28] sm:$0xff] %v758
  %823 = vst [vmem:[#allocation2 + $0x30] sm:$0xff] %v759
  %824 = vst [vmem:[#allocation2 + $0x38] sm:$0xff] %v760
  %825 = vst [vmem:[#allocation2 + $0x40] sm:$0xff] %v761
  %826 = vst [vmem:[#allocation2 + $0x48] sm:$0xff] %v762
  %827 = vst [vmem:[#allocation2 + $0x50] sm:$0xff] %v763
  %828 = vst [vmem:[#allocation2 + $0x58] sm:$0xff] %v764
  %829 = vst [vmem:[#allocation2 + $0x60] sm:$0xff] %v765
  %830 = vst [vmem:[#allocation2 + $0x68] sm:$0xff] %v766
  %831 = vst [vmem:[#allocation2 + $0x70] sm:$0xff] %v767
  %832 = vst [vmem:[#allocation2 + $0x78] sm:$0xff] %v768
  %833 = vst [vmem:[#allocation2 + $0x80] sm:$0xff] %v769
  %834 = vst [vmem:[#allocation2 + $0x88] sm:$0xff] %v770
  %835 = vst [vmem:[#allocation2 + $0x90] sm:$0xff] %v771
  %836 = vst [vmem:[#allocation2 + $0x98] sm:$0xff] %v772
  %837 = vst [vmem:[#allocation2 + $0xa0] sm:$0xff] %v773
  %838 = vst [vmem:[#allocation2 + $0xa8] sm:$0xff] %v774
  %839 = vst [vmem:[#allocation2 + $0xb0] sm:$0xff] %v775
  %840 = vst [vmem:[#allocation2 + $0xb8] sm:$0xff] %v776
  %841 = vst [vmem:[#allocation2 + $0xc0] sm:$0xff] %v777
  %842 = vst [vmem:[#allocation2 + $0xc8] sm:$0xff] %v778
  %843 = vst [vmem:[#allocation2 + $0xd0] sm:$0xff] %v779
  %844 = vst [vmem:[#allocation2 + $0xd8] sm:$0xff] %v780
  %845 = vst [vmem:[#allocation2 + $0xe0] sm:$0xff] %v781
  %846 = vst [vmem:[#allocation2 + $0xe8] sm:$0xff] %v782
  %847 = vst [vmem:[#allocation2 + $0xf0] sm:$0xff] %v783
  %848 = vst [vmem:[#allocation2 + $0xf8] sm:$0xff] %v784
  %849 = vst [vmem:[#allocation2 + $0x100] sm:$0xff] %v785
  %850 = vst [vmem:[#allocation2 + $0x108] sm:$0xff] %v786
  %851 = vst [vmem:[#allocation2 + $0x110] sm:$0xff] %v787
  %852 = vst [vmem:[#allocation2 + $0x118] sm:$0xff] %v788
  %853 = vst [vmem:[#allocation2 + $0x120] sm:$0xff] %v789
  %854 = vst [vmem:[#allocation2 + $0x128] sm:$0xff] %v790
  %855 = vst [vmem:[#allocation2 + $0x130] sm:$0xff] %v791
  %856 = vst [vmem:[#allocation2 + $0x138] sm:$0xff] %v792
  %857 = vst [vmem:[#allocation2 + $0x140] sm:$0xff] %v793
  %858 = vst [vmem:[#allocation2 + $0x148] sm:$0xff] %v794
  %859 = vst [vmem:[#allocation2 + $0x150] sm:$0xff] %v795
  %860 = vst [vmem:[#allocation2 + $0x158] sm:$0xff] %v796
  %861 = vst [vmem:[#allocation2 + $0x160] sm:$0xff] %v797
  %862 = vst [vmem:[#allocation2 + $0x168] sm:$0xff] %v798
  %863 = vst [vmem:[#allocation2 + $0x170] sm:$0xff] %v799
  %864 = vst [vmem:[#allocation2 + $0x178] sm:$0xff] %v800
  %865 = vst [vmem:[#allocation2 + $0x180] sm:$0xff] %v801
  %866 = vst [vmem:[#allocation2 + $0x188] sm:$0xff] %v802
  %867 = vst [vmem:[#allocation2 + $0x190] sm:$0xff] %v803
  %868 = vst [vmem:[#allocation2 + $0x198] sm:$0xff] %v804
  %869 = vst [vmem:[#allocation2 + $0x1a0] sm:$0xff] %v805
  %870 = vst [vmem:[#allocation2 + $0x1a8] sm:$0xff] %v806
  %871 = vst [vmem:[#allocation2 + $0x1b0] sm:$0xff] %v807
  %872 = vst [vmem:[#allocation2 + $0x1b8] sm:$0xff] %v808
  %873 = vst [vmem:[#allocation2 + $0x1c0] sm:$0xff] %v809
  %874 = vst [vmem:[#allocation2 + $0x1c8] sm:$0xff] %v810
  %875 = vst [vmem:[#allocation2 + $0x1d0] sm:$0xff] %v811
  %876 = vst [vmem:[#allocation2 + $0x1d8] sm:$0xff] %v812
  %877 = vst [vmem:[#allocation2 + $0x1e0] sm:$0xff] %v813
  %878 = vst [vmem:[#allocation2 + $0x1e8] sm:$0xff] %v814
  %879 = vst [vmem:[#allocation2 + $0x1f0] sm:$0xff] %v815
  %880 = vst [vmem:[#allocation2 + $0x1f8] sm:$0xff] %v816
  // Predicated region
  $region14: #{_lambda_.5} parent=0 // pred_check
    %p881 = pneg %p12
  $region15: #{_lambda_.5} parent=0 // pred_check_branch
    %883 = sbr.rel (%p881) target = $region17
  $region16: #{_lambda_.5} parent=0 // pred_region
    %v884 = vld [vmem:[#allocation2] sm:$0xff]
    %v885 = vld [vmem:[#allocation2 + $0x8] sm:$0xff]
    %v886 = vld [vmem:[#allocation2 + $0x10] sm:$0xff]
    %v887 = vld [vmem:[#allocation2 + $0x18] sm:$0xff]
    %v888 = vld [vmem:[#allocation2 + $0x20] sm:$0xff]
    %v889 = vld [vmem:[#allocation2 + $0x28] sm:$0xff]
    %v890 = vld [vmem:[#allocation2 + $0x30] sm:$0xff]
    %v891 = vld [vmem:[#allocation2 + $0x38] sm:$0xff]
    %v892 = vld [vmem:[#allocation2 + $0x40] sm:$0xff]
    %v893 = vld [vmem:[#allocation2 + $0x48] sm:$0xff]
    %v894 = vld [vmem:[#allocation2 + $0x50] sm:$0xff]
    %v895 = vld [vmem:[#allocation2 + $0x58] sm:$0xff]
    %v896 = vld [vmem:[#allocation2 + $0x60] sm:$0xff]
    %v897 = vld [vmem:[#allocation2 + $0x68] sm:$0xff]
    %v898 = vld [vmem:[#allocation2 + $0x70] sm:$0xff]
    %v899 = vld [vmem:[#allocation2 + $0x78] sm:$0xff]
    %v900 = vld [vmem:[#allocation2 + $0x80] sm:$0xff]
    %v901 = vld [vmem:[#allocation2 + $0x88] sm:$0xff]
    %v902 = vld [vmem:[#allocation2 + $0x90] sm:$0xff]
    %v903 = vld [vmem:[#allocation2 + $0x98] sm:$0xff]
    %v904 = vld [vmem:[#allocation2 + $0xa0] sm:$0xff]
    %v905 = vld [vmem:[#allocation2 + $0xa8] sm:$0xff]
    %v906 = vld [vmem:[#allocation2 + $0xb0] sm:$0xff]
    %v907 = vld [vmem:[#allocation2 + $0xb8] sm:$0xff]
    %v908 = vld [vmem:[#allocation2 + $0xc0] sm:$0xff]
    %v909 = vld [vmem:[#allocation2 + $0xc8] sm:$0xff]
    %v910 = vld [vmem:[#allocation2 + $0xd0] sm:$0xff]
    %v911 = vld [vmem:[#allocation2 + $0xd8] sm:$0xff]
    %v912 = vld [vmem:[#allocation2 + $0xe0] sm:$0xff]
    %v913 = vld [vmem:[#allocation2 + $0xe8] sm:$0xff]
    %v914 = vld [vmem:[#allocation2 + $0xf0] sm:$0xff]
    %v915 = vld [vmem:[#allocation2 + $0xf8] sm:$0xff]
    %v916 = vld [vmem:[#allocation2 + $0x100] sm:$0xff]
    %v917 = vld [vmem:[#allocation2 + $0x108] sm:$0xff]
    %v918 = vld [vmem:[#allocation2 + $0x110] sm:$0xff]
    %v919 = vld [vmem:[#allocation2 + $0x118] sm:$0xff]
    %v920 = vld [vmem:[#allocation2 + $0x120] sm:$0xff]
    %v921 = vld [vmem:[#allocation2 + $0x128] sm:$0xff]
    %v922 = vld [vmem:[#allocation2 + $0x130] sm:$0xff]
    %v923 = vld [vmem:[#allocation2 + $0x138] sm:$0xff]
    %v924 = vld [vmem:[#allocation2 + $0x140] sm:$0xff]
    %v925 = vld [vmem:[#allocation2 + $0x148] sm:$0xff]
    %v926 = vld [vmem:[#allocation2 + $0x150] sm:$0xff]
    %v927 = vld [vmem:[#allocation2 + $0x158] sm:$0xff]
    %v928 = vld [vmem:[#allocation2 + $0x160] sm:$0xff]
    %v929 = vld [vmem:[#allocation2 + $0x168] sm:$0xff]
    %v930 = vld [vmem:[#allocation2 + $0x170] sm:$0xff]
    %v931 = vld [vmem:[#allocation2 + $0x178] sm:$0xff]
    %v932 = vld [vmem:[#allocation2 + $0x180] sm:$0xff]
    %v933 = vld [vmem:[#allocation2 + $0x188] sm:$0xff]
    %v934 = vld [vmem:[#allocation2 + $0x190] sm:$0xff]
    %v935 = vld [vmem:[#allocation2 + $0x198] sm:$0xff]
    %v936 = vld [vmem:[#allocation2 + $0x1a0] sm:$0xff]
    %v937 = vld [vmem:[#allocation2 + $0x1a8] sm:$0xff]
    %v938 = vld [vmem:[#allocation2 + $0x1b0] sm:$0xff]
    %v939 = vld [vmem:[#allocation2 + $0x1b8] sm:$0xff]
    %v940 = vld [vmem:[#allocation2 + $0x1c0] sm:$0xff]
    %v941 = vld [vmem:[#allocation2 + $0x1c8] sm:$0xff]
    %v942 = vld [vmem:[#allocation2 + $0x1d0] sm:$0xff]
    %v943 = vld [vmem:[#allocation2 + $0x1d8] sm:$0xff]
    %v944 = vld [vmem:[#allocation2 + $0x1e0] sm:$0xff]
    %v945 = vld [vmem:[#allocation2 + $0x1e8] sm:$0xff]
    %v946 = vld [vmem:[#allocation2 + $0x1f0] sm:$0xff]
    %v947 = vld [vmem:[#allocation2 + $0x1f8] sm:$0xff]
    %v948 = vadd.f32 %v884, %v885
    %v949 = vadd.f32 %v948, %v886
    %v950 = vadd.f32 %v949, %v887
    %v951 = vadd.f32 %v950, %v888
    %v952 = vadd.f32 %v951, %v889
    %v953 = vadd.f32 %v952, %v890
    %v954 = vadd.f32 %v953, %v891
    %v955 = vadd.f32 %v954, %v892
    %v956 = vadd.f32 %v955, %v893
    %v957 = vadd.f32 %v956, %v894
    %v958 = vadd.f32 %v957, %v895
    %v959 = vadd.f32 %v958, %v896
    %v960 = vadd.f32 %v959, %v897
    %v961 = vadd.f32 %v960, %v898
    %v962 = vadd.f32 %v961, %v899
    %v963 = vadd.f32 %v962, %v900
    %v964 = vadd.f32 %v963, %v901
    %v965 = vadd.f32 %v964, %v902
    %v966 = vadd.f32 %v965, %v903
    %v967 = vadd.f32 %v966, %v904
    %v968 = vadd.f32 %v967, %v905
    %v969 = vadd.f32 %v968, %v906
    %v970 = vadd.f32 %v969, %v907
    %v971 = vadd.f32 %v970, %v908
    %v972 = vadd.f32 %v971, %v909
    %v973 = vadd.f32 %v972, %v910
    %v974 = vadd.f32 %v973, %v911
    %v975 = vadd.f32 %v974, %v912
    %v976 = vadd.f32 %v975, %v913
    %v977 = vadd.f32 %v976, %v914
    %v978 = vadd.f32 %v977, %v915
    %v979 = vadd.f32 %v978, %v916
    %v980 = vadd.f32 %v979, %v917
    %v981 = vadd.f32 %v980, %v918
    %v982 = vadd.f32 %v981, %v919
    %v983 = vadd.f32 %v982, %v920
    %v984 = vadd.f32 %v983, %v921
    %v985 = vadd.f32 %v984, %v922
    %v986 = vadd.f32 %v985, %v923
    %v987 = vadd.f32 %v986, %v924
    %v988 = vadd.f32 %v987, %v925
    %v989 = vadd.f32 %v988, %v926
    %v990 = vadd.f32 %v989, %v927
    %v991 = vadd.f32 %v990, %v928
    %v992 = vadd.f32 %v991, %v929
    %v993 = vadd.f32 %v992, %v930
    %v994 = vadd.f32 %v993, %v931
    %v995 = vadd.f32 %v994, %v932
    %v996 = vadd.f32 %v995, %v933
    %v997 = vadd.f32 %v996, %v934
    %v998 = vadd.f32 %v997, %v935
    %v999 = vadd.f32 %v998, %v936
    %v1000 = vadd.f32 %v999, %v937
    %v1001 = vadd.f32 %v1000, %v938
    %v1002 = vadd.f32 %v1001, %v939
    %v1003 = vadd.f32 %v1002, %v940
    %v1004 = vadd.f32 %v1003, %v941
    %v1005 = vadd.f32 %v1004, %v942
    %v1006 = vadd.f32 %v1005, %v943
    %v1007 = vadd.f32 %v1006, %v944
    %v1008 = vadd.f32 %v1007, %v945
    %v1009 = vadd.f32 %v1008, %v946
    %v1010 = vadd.f32 %v1009, %v947
    %v1011 = vrot.slane %v1010, 4
    %v1012 = vadd.f32 %v1010, %v1011
    %v1013 = vrot.slane %v1012, 2
    %v1014 = vadd.f32 %v1012, %v1013
    %v1015 = vrot.slane %v1014, 1
    %v1016 = vadd.f32 %v1014, %v1015
    %v1017 = vmul.f32 %v884, %v884
    %v1018 = vmul.f32 %v885, %v885
    %v1019 = vmul.f32 %v886, %v886
    %v1020 = vmul.f32 %v887, %v887
    %v1021 = vmul.f32 %v888, %v888
    %v1022 = vmul.f32 %v889, %v889
    %v1023 = vmul.f32 %v890, %v890
    %v1024 = vmul.f32 %v891, %v891
    %v1025 = vmul.f32 %v892, %v892
    %v1026 = vmul.f32 %v893, %v893
    %v1027 = vmul.f32 %v894, %v894
    %v1028 = vmul.f32 %v895, %v895
    %v1029 = vmul.f32 %v896, %v896
    %v1030 = vmul.f32 %v897, %v897
    %v1031 = vmul.f32 %v898, %v898
    %v1032 = vmul.f32 %v899, %v899
    %v1033 = vmul.f32 %v900, %v900
    %v1034 = vmul.f32 %v901, %v901
    %v1035 = vmul.f32 %v902, %v902
    %v1036 = vmul.f32 %v903, %v903
    %v1037 = vmul.f32 %v904, %v904
    %v1038 = vmul.f32 %v905, %v905
    %v1039 = vmul.f32 %v906, %v906
    %v1040 = vmul.f32 %v907, %v907
    %v1041 = vmul.f32 %v908, %v908
    %v1042 = vmul.f32 %v909, %v909
    %v1043 = vmul.f32 %v910, %v910
    %v1044 = vmul.f32 %v911, %v911
    %v1045 = vmul.f32 %v912, %v912
    %v1046 = vmul.f32 %v913, %v913
    %v1047 = vmul.f32 %v914, %v914
    %v1048 = vmul.f32 %v915, %v915
    %v1049 = vmul.f32 %v916, %v916
    %v1050 = vmul.f32 %v917, %v917
    %v1051 = vmul.f32 %v918, %v918
    %v1052 = vmul.f32 %v919, %v919
    %v1053 = vmul.f32 %v920, %v920
    %v1054 = vmul.f32 %v921, %v921
    %v1055 = vmul.f32 %v922, %v922
    %v1056 = vmul.f32 %v923, %v923
    %v1057 = vmul.f32 %v924, %v924
    %v1058 = vmul.f32 %v925, %v925
    %v1059 = vmul.f32 %v926, %v926
    %v1060 = vmul.f32 %v927, %v927
    %v1061 = vmul.f32 %v928, %v928
    %v1062 = vmul.f32 %v929, %v929
    %v1063 = vmul.f32 %v930, %v930
    %v1064 = vmul.f32 %v931, %v931
    %v1065 = vmul.f32 %v932, %v932
    %v1066 = vmul.f32 %v933, %v933
    %v1067 = vmul.f32 %v934, %v934
    %v1068 = vmul.f32 %v935, %v935
    %v1069 = vmul.f32 %v936, %v936
    %v1070 = vmul.f32 %v937, %v937
    %v1071 = vmul.f32 %v938, %v938
    %v1072 = vmul.f32 %v939, %v939
    %v1073 = vmul.f32 %v940, %v940
    %v1074 = vmul.f32 %v941, %v941
    %v1075 = vmul.f32 %v942, %v942
    %v1076 = vmul.f32 %v943, %v943
    %v1077 = vmul.f32 %v944, %v944
    %v1078 = vmul.f32 %v945, %v945
    %v1079 = vmul.f32 %v946, %v946
    %v1080 = vmul.f32 %v947, %v947
    %v1081 = vadd.f32 %v1017, %v1018
    %v1082 = vadd.f32 %v1081, %v1019
    %v1083 = vadd.f32 %v1082, %v1020
    %v1084 = vadd.f32 %v1083, %v1021
    %v1085 = vadd.f32 %v1084, %v1022
    %v1086 = vadd.f32 %v1085, %v1023
    %v1087 = vadd.f32 %v1086, %v1024
    %v1088 = vadd.f32 %v1087, %v1025
    %v1089 = vadd.f32 %v1088, %v1026
    %v1090 = vadd.f32 %v1089, %v1027
    %v1091 = vadd.f32 %v1090, %v1028
    %v1092 = vadd.f32 %v1091, %v1029
    %v1093 = vadd.f32 %v1092, %v1030
    %v1094 = vadd.f32 %v1093, %v1031
    %v1095 = vadd.f32 %v1094, %v1032
    %v1096 = vadd.f32 %v1095, %v1033
    %v1097 = vadd.f32 %v1096, %v1034
    %v1098 = vadd.f32 %v1097, %v1035
    %v1099 = vadd.f32 %v1098, %v1036
    %v1100 = vadd.f32 %v1099, %v1037
    %v1101 = vadd.f32 %v1100, %v1038
    %v1102 = vadd.f32 %v1101, %v1039
    %v1103 = vadd.f32 %v1102, %v1040
    %v1104 = vadd.f32 %v1103, %v1041
    %v1105 = vadd.f32 %v1104, %v1042
    %v1106 = vadd.f32 %v1105, %v1043
    %v1107 = vadd.f32 %v1106, %v1044
    %v1108 = vadd.f32 %v1107, %v1045
    %v1109 = vadd.f32 %v1108, %v1046
    %v1110 = vadd.f32 %v1109, %v1047
    %v1111 = vadd.f32 %v1110, %v1048
    %v1112 = vadd.f32 %v1111, %v1049
    %v1113 = vadd.f32 %v1112, %v1050
    %v1114 = vadd.f32 %v1113, %v1051
    %v1115 = vadd.f32 %v1114, %v1052
    %v1116 = vadd.f32 %v1115, %v1053
    %v1117 = vadd.f32 %v1116, %v1054
    %v1118 = vadd.f32 %v1117, %v1055
    %v1119 = vadd.f32 %v1118, %v1056
    %v1120 = vadd.f32 %v1119, %v1057
    %v1121 = vadd.f32 %v1120, %v1058
    %v1122 = vadd.f32 %v1121, %v1059
    %v1123 = vadd.f32 %v1122, %v1060
    %v1124 = vadd.f32 %v1123, %v1061
    %v1125 = vadd.f32 %v1124, %v1062
    %v1126 = vadd.f32 %v1125, %v1063
    %v1127 = vadd.f32 %v1126, %v1064
    %v1128 = vadd.f32 %v1127, %v1065
    %v1129 = vadd.f32 %v1128, %v1066
    %v1130 = vadd.f32 %v1129, %v1067
    %v1131 = vadd.f32 %v1130, %v1068
    %v1132 = vadd.f32 %v1131, %v1069
    %v1133 = vadd.f32 %v1132, %v1070
    %v1134 = vadd.f32 %v1133, %v1071
    %v1135 = vadd.f32 %v1134, %v1072
    %v1136 = vadd.f32 %v1135, %v1073
    %v1137 = vadd.f32 %v1136, %v1074
    %v1138 = vadd.f32 %v1137, %v1075
    %v1139 = vadd.f32 %v1138, %v1076
    %v1140 = vadd.f32 %v1139, %v1077
    %v1141 = vadd.f32 %v1140, %v1078
    %v1142 = vadd.f32 %v1141, %v1079
    %v1143 = vadd.f32 %v1142, %v1080
    %v1144 = vrot.slane %v1143, 4
    %v1145 = vadd.f32 %v1143, %v1144
    %v1146 = vrot.slane %v1145, 2
    %v1147 = vadd.f32 %v1145, %v1146
    %v1148 = vrot.slane %v1147, 1
    %v1149 = vadd.f32 %v1147, %v1148
    %v1150 = vmul.f32 %v1016, 0.001953125
    %v1151 = vmul.f32 %v1149, 0.001953125
    %v1152 = vmul.f32 %v1150, %v1150
    %v1153 = vsub.f32 %v1151, %v1152
    %v1154 = vsub.f32 %v884, %v1150
    %v1155 = vsub.f32 %v885, %v1150
    %v1156 = vsub.f32 %v886, %v1150
    %v1157 = vsub.f32 %v887, %v1150
    %v1158 = vsub.f32 %v888, %v1150
    %v1159 = vsub.f32 %v889, %v1150
    %v1160 = vsub.f32 %v890, %v1150
    %v1161 = vsub.f32 %v891, %v1150
    %v1162 = vsub.f32 %v892, %v1150
    %v1163 = vsub.f32 %v893, %v1150
    %v1164 = vsub.f32 %v894, %v1150
    %v1165 = vsub.f32 %v895, %v1150
    %v1166 = vsub.f32 %v896, %v1150
    %v1167 = vsub.f32 %v897, %v1150
    %v1168 = vsub.f32 %v898, %v1150
    %v1169 = vsub.f32 %v899, %v1150
    %v1170 = vsub.f32 %v900, %v1150
    %v1171 = vsub.f32 %v901, %v1150
    %v1172 = vsub.f32 %v902, %v1150
    %v1173 = vsub.f32 %v903, %v1150
    %v1174 = vsub.f32 %v904, %v1150
    %v1175 = vsub.f32 %v905, %v1150
    %v1176 = vsub.f32 %v906, %v1150
    %v1177 = vsub.f32 %v907, %v1150
    %v1178 = vsub.f32 %v908, %v1150
    %v1179 = vsub.f32 %v909, %v1150
    %v1180 = vsub.f32 %v910, %v1150
    %v1181 = vsub.f32 %v911, %v1150
    %v1182 = vsub.f32 %v912, %v1150
    %v1183 = vsub.f32 %v913, %v1150
    %v1184 = vsub.f32 %v914, %v1150
    %v1185 = vsub.f32 %v915, %v1150
    %v1186 = vsub.f32 %v916, %v1150
    %v1187 = vsub.f32 %v917, %v1150
    %v1188 = vsub.f32 %v918, %v1150
    %v1189 = vsub.f32 %v919, %v1150
    %v1190 = vsub.f32 %v920, %v1150
    %v1191 = vsub.f32 %v921, %v1150
    %v1192 = vsub.f32 %v922, %v1150
    %v1193 = vsub.f32 %v923, %v1150
    %v1194 = vsub.f32 %v924, %v1150
    %v1195 = vsub.f32 %v925, %v1150
    %v1196 = vsub.f32 %v926, %v1150
    %v1197 = vsub.f32 %v927, %v1150
    %v1198 = vsub.f32 %v928, %v1150
    %v1199 = vsub.f32 %v929, %v1150
    %v1200 = vsub.f32 %v930, %v1150
    %v1201 = vsub.f32 %v931, %v1150
    %v1202 = vsub.f32 %v932, %v1150
    %v1203 = vsub.f32 %v933, %v1150
    %v1204 = vsub.f32 %v934, %v1150
    %v1205 = vsub.f32 %v935, %v1150
    %v1206 = vsub.f32 %v936, %v1150
    %v1207 = vsub.f32 %v937, %v1150
    %v1208 = vsub.f32 %v938, %v1150
    %v1209 = vsub.f32 %v939, %v1150
    %v1210 = vsub.f32 %v940, %v1150
    %v1211 = vsub.f32 %v941, %v1150
    %v1212 = vsub.f32 %v942, %v1150
    %v1213 = vsub.f32 %v943, %v1150
    %v1214 = vsub.f32 %v944, %v1150
    %v1215 = vsub.f32 %v945, %v1150
    %v1216 = vsub.f32 %v946, %v1150
    %v1217 = vsub.f32 %v947, %v1150
    %v1218 = vadd.f32 %v1153, 1e-05
    %v1219 = vrsqrt.pop %v1218
    %v1220 = vmul.f32 %v1154, %v1219
    %v1221 = vmul.f32 %v1155, %v1219
    %v1222 = vmul.f32 %v1156, %v1219
    %v1223 = vmul.f32 %v1157, %v1219
    %v1224 = vmul.f32 %v1158, %v1219
    %v1225 = vmul.f32 %v1159, %v1219
    %v1226 = vmul.f32 %v1160, %v1219
    %v1227 = vmul.f32 %v1161, %v1219
    %v1228 = vmul.f32 %v1162, %v1219
    %v1229 = vmul.f32 %v1163, %v1219
    %v1230 = vmul.f32 %v1164, %v1219
    %v1231 = vmul.f32 %v1165, %v1219
    %v1232 = vmul.f32 %v1166, %v1219
    %v1233 = vmul.f32 %v1167, %v1219
    %v1234 = vmul.f32 %v1168, %v1219
    %v1235 = vmul.f32 %v1169, %v1219
    %v1236 = vmul.f32 %v1170, %v1219
    %v1237 = vmul.f32 %v1171, %v1219
    %v1238 = vmul.f32 %v1172, %v1219
    %v1239 = vmul.f32 %v1173, %v1219
    %v1240 = vmul.f32 %v1174, %v1219
    %v1241 = vmul.f32 %v1175, %v1219
    %v1242 = vmul.f32 %v1176, %v1219
    %v1243 = vmul.f32 %v1177, %v1219
    %v1244 = vmul.f32 %v1178, %v1219
    %v1245 = vmul.f32 %v1179, %v1219
    %v1246 = vmul.f32 %v1180, %v1219
    %v1247 = vmul.f32 %v1181, %v1219
    %v1248 = vmul.f32 %v1182, %v1219
    %v1249 = vmul.f32 %v1183, %v1219
    %v1250 = vmul.f32 %v1184, %v1219
    %v1251 = vmul.f32 %v1185, %v1219
    %v1252 = vmul.f32 %v1186, %v1219
    %v1253 = vmul.f32 %v1187, %v1219
    %v1254 = vmul.f32 %v1188, %v1219
    %v1255 = vmul.f32 %v1189, %v1219
    %v1256 = vmul.f32 %v1190, %v1219
    %v1257 = vmul.f32 %v1191, %v1219
    %v1258 = vmul.f32 %v1192, %v1219
    %v1259 = vmul.f32 %v1193, %v1219
    %v1260 = vmul.f32 %v1194, %v1219
    %v1261 = vmul.f32 %v1195, %v1219
    %v1262 = vmul.f32 %v1196, %v1219
    %v1263 = vmul.f32 %v1197, %v1219
    %v1264 = vmul.f32 %v1198, %v1219
    %v1265 = vmul.f32 %v1199, %v1219
    %v1266 = vmul.f32 %v1200, %v1219
    %v1267 = vmul.f32 %v1201, %v1219
    %v1268 = vmul.f32 %v1202, %v1219
    %v1269 = vmul.f32 %v1203, %v1219
    %v1270 = vmul.f32 %v1204, %v1219
    %v1271 = vmul.f32 %v1205, %v1219
    %v1272 = vmul.f32 %v1206, %v1219
    %v1273 = vmul.f32 %v1207, %v1219
    %v1274 = vmul.f32 %v1208, %v1219
    %v1275 = vmul.f32 %v1209, %v1219
    %v1276 = vmul.f32 %v1210, %v1219
    %v1277 = vmul.f32 %v1211, %v1219
    %v1278 = vmul.f32 %v1212, %v1219
    %v1279 = vmul.f32 %v1213, %v1219
    %v1280 = vmul.f32 %v1214, %v1219
    %v1281 = vmul.f32 %v1215, %v1219
    %v1282 = vmul.f32 %v1216, %v1219
    %v1283 = vmul.f32 %v1217, %v1219
    %vm1284 = vcmp.gt.f32.partialorder %v1220, 0.0
    %vm1285 = vcmp.gt.f32.partialorder %v1221, 0.0
    %vm1286 = vcmp.gt.f32.partialorder %v1222, 0.0
    %vm1287 = vcmp.gt.f32.partialorder %v1223, 0.0
    %vm1288 = vcmp.gt.f32.partialorder %v1224, 0.0
    %vm1289 = vcmp.gt.f32.partialorder %v1225, 0.0
    %vm1290 = vcmp.gt.f32.partialorder %v1226, 0.0
    %vm1291 = vcmp.gt.f32.partialorder %v1227, 0.0
    %vm1292 = vcmp.gt.f32.partialorder %v1228, 0.0
    %vm1293 = vcmp.gt.f32.partialorder %v1229, 0.0
    %vm1294 = vcmp.gt.f32.partialorder %v1230, 0.0
    %vm1295 = vcmp.gt.f32.partialorder %v1231, 0.0
    %vm1296 = vcmp.gt.f32.partialorder %v1232, 0.0
    %vm1297 = vcmp.gt.f32.partialorder %v1233, 0.0
    %vm1298 = vcmp.gt.f32.partialorder %v1234, 0.0
    %vm1299 = vcmp.gt.f32.partialorder %v1235, 0.0
    %vm1300 = vcmp.gt.f32.partialorder %v1236, 0.0
    %vm1301 = vcmp.gt.f32.partialorder %v1237, 0.0
    %vm1302 = vcmp.gt.f32.partialorder %v1238, 0.0
    %vm1303 = vcmp.gt.f32.partialorder %v1239, 0.0
    %vm1304 = vcmp.gt.f32.partialorder %v1240, 0.0
    %vm1305 = vcmp.gt.f32.partialorder %v1241, 0.0
    %vm1306 = vcmp.gt.f32.partialorder %v1242, 0.0
    %vm1307 = vcmp.gt.f32.partialorder %v1243, 0.0
    %vm1308 = vcmp.gt.f32.partialorder %v1244, 0.0
    %vm1309 = vcmp.gt.f32.partialorder %v1245, 0.0
    %vm1310 = vcmp.gt.f32.partialorder %v1246, 0.0
    %vm1311 = vcmp.gt.f32.partialorder %v1247, 0.0
    %vm1312 = vcmp.gt.f32.partialorder %v1248, 0.0
    %vm1313 = vcmp.gt.f32.partialorder %v1249, 0.0
    %vm1314 = vcmp.gt.f32.partialorder %v1250, 0.0
    %vm1315 = vcmp.gt.f32.partialorder %v1251, 0.0
    %vm1316 = vcmp.gt.f32.partialorder %v1252, 0.0
    %vm1317 = vcmp.gt.f32.partialorder %v1253, 0.0
    %vm1318 = vcmp.gt.f32.partialorder %v1254, 0.0
    %vm1319 = vcmp.gt.f32.partialorder %v1255, 0.0
    %vm1320 = vcmp.gt.f32.partialorder %v1256, 0.0
    %vm1321 = vcmp.gt.f32.partialorder %v1257, 0.0
    %vm1322 = vcmp.gt.f32.partialorder %v1258, 0.0
    %vm1323 = vcmp.gt.f32.partialorder %v1259, 0.0
    %vm1324 = vcmp.gt.f32.partialorder %v1260, 0.0
    %vm1325 = vcmp.gt.f32.partialorder %v1261, 0.0
    %vm1326 = vcmp.gt.f32.partialorder %v1262, 0.0
    %vm1327 = vcmp.gt.f32.partialorder %v1263, 0.0
    %vm1328 = vcmp.gt.f32.partialorder %v1264, 0.0
    %vm1329 = vcmp.gt.f32.partialorder %v1265, 0.0
    %vm1330 = vcmp.gt.f32.partialorder %v1266, 0.0
    %vm1331 = vcmp.gt.f32.partialorder %v1267, 0.0
    %vm1332 = vcmp.gt.f32.partialorder %v1268, 0.0
    %vm1333 = vcmp.gt.f32.partialorder %v1269, 0.0
    %vm1334 = vcmp.gt.f32.partialorder %v1270, 0.0
    %vm1335 = vcmp.gt.f32.partialorder %v1271, 0.0
    %vm1336 = vcmp.gt.f32.partialorder %v1272, 0.0
    %vm1337 = vcmp.gt.f32.partialorder %v1273, 0.0
    %vm1338 = vcmp.gt.f32.partialorder %v1274, 0.0
    %vm1339 = vcmp.gt.f32.partialorder %v1275, 0.0
    %vm1340 = vcmp.gt.f32.partialorder %v1276, 0.0
    %vm1341 = vcmp.gt.f32.partialorder %v1277, 0.0
    %vm1342 = vcmp.gt.f32.partialorder %v1278, 0.0
    %vm1343 = vcmp.gt.f32.partialorder %v1279, 0.0
    %vm1344 = vcmp.gt.f32.partialorder %v1280, 0.0
    %vm1345 = vcmp.gt.f32.partialorder %v1281, 0.0
    %vm1346 = vcmp.gt.f32.partialorder %v1282, 0.0
    %vm1347 = vcmp.gt.f32.partialorder %v1283, 0.0
    %v1348 = vmul.f32 %v1220, 0.2
    %v1349 = vmul.f32 %v1221, 0.2
    %v1350 = vmul.f32 %v1222, 0.2
    %v1351 = vmul.f32 %v1223, 0.2
    %v1352 = vmul.f32 %v1224, 0.2
    %v1353 = vmul.f32 %v1225, 0.2
    %v1354 = vmul.f32 %v1226, 0.2
    %v1355 = vmul.f32 %v1227, 0.2
    %v1356 = vmul.f32 %v1228, 0.2
    %v1357 = vmul.f32 %v1229, 0.2
    %v1358 = vmul.f32 %v1230, 0.2
    %v1359 = vmul.f32 %v1231, 0.2
    %v1360 = vmul.f32 %v1232, 0.2
    %v1361 = vmul.f32 %v1233, 0.2
    %v1362 = vmul.f32 %v1234, 0.2
    %v1363 = vmul.f32 %v1235, 0.2
    %v1364 = vmul.f32 %v1236, 0.2
    %v1365 = vmul.f32 %v1237, 0.2
    %v1366 = vmul.f32 %v1238, 0.2
    %v1367 = vmul.f32 %v1239, 0.2
    %v1368 = vmul.f32 %v1240, 0.2
    %v1369 = vmul.f32 %v1241, 0.2
    %v1370 = vmul.f32 %v1242, 0.2
    %v1371 = vmul.f32 %v1243, 0.2
    %v1372 = vmul.f32 %v1244, 0.2
    %v1373 = vmul.f32 %v1245, 0.2
    %v1374 = vmul.f32 %v1246, 0.2
    %v1375 = vmul.f32 %v1247, 0.2
    %v1376 = vmul.f32 %v1248, 0.2
    %v1377 = vmul.f32 %v1249, 0.2
    %v1378 = vmul.f32 %v1250, 0.2
    %v1379 = vmul.f32 %v1251, 0.2
    %v1380 = vmul.f32 %v1252, 0.2
    %v1381 = vmul.f32 %v1253, 0.2
    %v1382 = vmul.f32 %v1254, 0.2
    %v1383 = vmul.f32 %v1255, 0.2
    %v1384 = vmul.f32 %v1256, 0.2
    %v1385 = vmul.f32 %v1257, 0.2
    %v1386 = vmul.f32 %v1258, 0.2
    %v1387 = vmul.f32 %v1259, 0.2
    %v1388 = vmul.f32 %v1260, 0.2
    %v1389 = vmul.f32 %v1261, 0.2
    %v1390 = vmul.f32 %v1262, 0.2
    %v1391 = vmul.f32 %v1263, 0.2
    %v1392 = vmul.f32 %v1264, 0.2
    %v1393 = vmul.f32 %v1265, 0.2
    %v1394 = vmul.f32 %v1266, 0.2
    %v1395 = vmul.f32 %v1267, 0.2
    %v1396 = vmul.f32 %v1268, 0.2
    %v1397 = vmul.f32 %v1269, 0.2
    %v1398 = vmul.f32 %v1270, 0.2
    %v1399 = vmul.f32 %v1271, 0.2
    %v1400 = vmul.f32 %v1272, 0.2
    %v1401 = vmul.f32 %v1273, 0.2
    %v1402 = vmul.f32 %v1274, 0.2
    %v1403 = vmul.f32 %v1275, 0.2
    %v1404 = vmul.f32 %v1276, 0.2
    %v1405 = vmul.f32 %v1277, 0.2
    %v1406 = vmul.f32 %v1278, 0.2
    %v1407 = vmul.f32 %v1279, 0.2
    %v1408 = vmul.f32 %v1280, 0.2
    %v1409 = vmul.f32 %v1281, 0.2
    %v1410 = vmul.f32 %v1282, 0.2
    %v1411 = vmul.f32 %v1283, 0.2
    %v1412 = vsel %vm1284, %v1220, %v1348
    %v1413 = vsel %vm1285, %v1221, %v1349
    %v1414 = vsel %vm1286, %v1222, %v1350
    %v1415 = vsel %vm1287, %v1223, %v1351
    %v1416 = vsel %vm1288, %v1224, %v1352
    %v1417 = vsel %vm1289, %v1225, %v1353
    %v1418 = vsel %vm1290, %v1226, %v1354
    %v1419 = vsel %vm1291, %v1227, %v1355
    %v1420 = vsel %vm1292, %v1228, %v1356
    %v1421 = vsel %vm1293, %v1229, %v1357
    %v1422 = vsel %vm1294, %v1230, %v1358
    %v1423 = vsel %vm1295, %v1231, %v1359
    %v1424 = vsel %vm1296, %v1232, %v1360
    %v1425 = vsel %vm1297, %v1233, %v1361
    %v1426 = vsel %vm1298, %v1234, %v1362
    %v1427 = vsel %vm1299, %v1235, %v1363
    %v1428 = vsel %vm1300, %v1236, %v1364
    %v1429 = vsel %vm1301, %v1237, %v1365
    %v1430 = vsel %vm1302, %v1238, %v1366
    %v1431 = vsel %vm1303, %v1239, %v1367
    %v1432 = vsel %vm1304, %v1240, %v1368
    %v1433 = vsel %vm1305, %v1241, %v1369
    %v1434 = vsel %vm1306, %v1242, %v1370
    %v1435 = vsel %vm1307, %v1243, %v1371
    %v1436 = vsel %vm1308, %v1244, %v1372
    %v1437 = vsel %vm1309, %v1245, %v1373
    %v1438 = vsel %vm1310, %v1246, %v1374
    %v1439 = vsel %vm1311, %v1247, %v1375
    %v1440 = vsel %vm1312, %v1248, %v1376
    %v1441 = vsel %vm1313, %v1249, %v1377
    %v1442 = vsel %vm1314, %v1250, %v1378
    %v1443 = vsel %vm1315, %v1251, %v1379
    %v1444 = vsel %vm1316, %v1252, %v1380
    %v1445 = vsel %vm1317, %v1253, %v1381
    %v1446 = vsel %vm1318, %v1254, %v1382
    %v1447 = vsel %vm1319, %v1255, %v1383
    %v1448 = vsel %vm1320, %v1256, %v1384
    %v1449 = vsel %vm1321, %v1257, %v1385
    %v1450 = vsel %vm1322, %v1258, %v1386
    %v1451 = vsel %vm1323, %v1259, %v1387
    %v1452 = vsel %vm1324, %v1260, %v1388
    %v1453 = vsel %vm1325, %v1261, %v1389
    %v1454 = vsel %vm1326, %v1262, %v1390
    %v1455 = vsel %vm1327, %v1263, %v1391
    %v1456 = vsel %vm1328, %v1264, %v1392
    %v1457 = vsel %vm1329, %v1265, %v1393
    %v1458 = vsel %vm1330, %v1266, %v1394
    %v1459 = vsel %vm1331, %v1267, %v1395
    %v1460 = vsel %vm1332, %v1268, %v1396
    %v1461 = vsel %vm1333, %v1269, %v1397
    %v1462 = vsel %vm1334, %v1270, %v1398
    %v1463 = vsel %vm1335, %v1271, %v1399
    %v1464 = vsel %vm1336, %v1272, %v1400
    %v1465 = vsel %vm1337, %v1273, %v1401
    %v1466 = vsel %vm1338, %v1274, %v1402
    %v1467 = vsel %vm1339, %v1275, %v1403
    %v1468 = vsel %vm1340, %v1276, %v1404
    %v1469 = vsel %vm1341, %v1277, %v1405
    %v1470 = vsel %vm1342, %v1278, %v1406
    %v1471 = vsel %vm1343, %v1279, %v1407
    %v1472 = vsel %vm1344, %v1280, %v1408
    %v1473 = vsel %vm1345, %v1281, %v1409
    %v1474 = vsel %vm1346, %v1282, %v1410
    %v1475 = vsel %vm1347, %v1283, %v1411
    %v1476 = vpack.c.bf16 %v1413, %v1412
    %v1477 = vpack.c.bf16 %v1415, %v1414
    %v1478 = vpack.c.bf16 %v1417, %v1416
    %v1479 = vpack.c.bf16 %v1419, %v1418
    %v1480 = vpack.c.bf16 %v1421, %v1420
    %v1481 = vpack.c.bf16 %v1423, %v1422
    %v1482 = vpack.c.bf16 %v1425, %v1424
    %v1483 = vpack.c.bf16 %v1427, %v1426
    %v1484 = vpack.c.bf16 %v1429, %v1428
    %v1485 = vpack.c.bf16 %v1431, %v1430
    %v1486 = vpack.c.bf16 %v1433, %v1432
    %v1487 = vpack.c.bf16 %v1435, %v1434
    %v1488 = vpack.c.bf16 %v1437, %v1436
    %v1489 = vpack.c.bf16 %v1439, %v1438
    %v1490 = vpack.c.bf16 %v1441, %v1440
    %v1491 = vpack.c.bf16 %v1443, %v1442
    %v1492 = vpack.c.bf16 %v1445, %v1444
    %v1493 = vpack.c.bf16 %v1447, %v1446
    %v1494 = vpack.c.bf16 %v1449, %v1448
    %v1495 = vpack.c.bf16 %v1451, %v1450
    %v1496 = vpack.c.bf16 %v1453, %v1452
    %v1497 = vpack.c.bf16 %v1455, %v1454
    %v1498 = vpack.c.bf16 %v1457, %v1456
    %v1499 = vpack.c.bf16 %v1459, %v1458
    %v1500 = vpack.c.bf16 %v1461, %v1460
    %v1501 = vpack.c.bf16 %v1463, %v1462
    %v1502 = vpack.c.bf16 %v1465, %v1464
    %v1503 = vpack.c.bf16 %v1467, %v1466
    %v1504 = vpack.c.bf16 %v1469, %v1468
    %v1505 = vpack.c.bf16 %v1471, %v1470
    %v1506 = vpack.c.bf16 %v1473, %v1472
    %v1507 = vpack.c.bf16 %v1475, %v1474
    %v1540 = vunpack.c.l.b16 %v1476
    %v1541 = vunpack.c.h.b16 %v1476
    %v1542 = vunpack.c.l.b16 %v1477
    %v1543 = vunpack.c.h.b16 %v1477
    %v1544 = vunpack.c.l.b16 %v1478
    %v1545 = vunpack.c.h.b16 %v1478
    %v1546 = vunpack.c.l.b16 %v1479
    %v1547 = vunpack.c.h.b16 %v1479
    %v1548 = vunpack.c.l.b16 %v1480
    %v1549 = vunpack.c.h.b16 %v1480
    %v1550 = vunpack.c.l.b16 %v1481
    %v1551 = vunpack.c.h.b16 %v1481
    %v1552 = vunpack.c.l.b16 %v1482
    %v1553 = vunpack.c.h.b16 %v1482
    %v1554 = vunpack.c.l.b16 %v1483
    %v1555 = vunpack.c.h.b16 %v1483
    %v1556 = vunpack.c.l.b16 %v1484
    %v1557 = vunpack.c.h.b16 %v1484
    %v1558 = vunpack.c.l.b16 %v1485
    %v1559 = vunpack.c.h.b16 %v1485
    %v1560 = vunpack.c.l.b16 %v1486
    %v1561 = vunpack.c.h.b16 %v1486
    %v1562 = vunpack.c.l.b16 %v1487
    %v1563 = vunpack.c.h.b16 %v1487
    %v1564 = vunpack.c.l.b16 %v1488
    %v1565 = vunpack.c.h.b16 %v1488
    %v1566 = vunpack.c.l.b16 %v1489
    %v1567 = vunpack.c.h.b16 %v1489
    %v1568 = vunpack.c.l.b16 %v1490
    %v1569 = vunpack.c.h.b16 %v1490
    %v1570 = vunpack.c.l.b16 %v1491
    %v1571 = vunpack.c.h.b16 %v1491
    %v1572 = vunpack.c.l.b16 %v1492
    %v1573 = vunpack.c.h.b16 %v1492
    %v1574 = vunpack.c.l.b16 %v1493
    %v1575 = vunpack.c.h.b16 %v1493
    %v1576 = vunpack.c.l.b16 %v1494
    %v1577 = vunpack.c.h.b16 %v1494
    %v1578 = vunpack.c.l.b16 %v1495
    %v1579 = vunpack.c.h.b16 %v1495
    %v1580 = vunpack.c.l.b16 %v1496
    %v1581 = vunpack.c.h.b16 %v1496
    %v1582 = vunpack.c.l.b16 %v1497
    %v1583 = vunpack.c.h.b16 %v1497
    %v1584 = vunpack.c.l.b16 %v1498
    %v1585 = vunpack.c.h.b16 %v1498
    %v1586 = vunpack.c.l.b16 %v1499
    %v1587 = vunpack.c.h.b16 %v1499
    %v1588 = vunpack.c.l.b16 %v1500
    %v1589 = vunpack.c.h.b16 %v1500
    %v1590 = vunpack.c.l.b16 %v1501
    %v1591 = vunpack.c.h.b16 %v1501
    %v1592 = vunpack.c.l.b16 %v1502
    %v1593 = vunpack.c.h.b16 %v1502
    %v1594 = vunpack.c.l.b16 %v1503
    %v1595 = vunpack.c.h.b16 %v1503
    %v1596 = vunpack.c.l.b16 %v1504
    %v1597 = vunpack.c.h.b16 %v1504
    %v1598 = vunpack.c.l.b16 %v1505
    %v1599 = vunpack.c.h.b16 %v1505
    %v1600 = vunpack.c.l.b16 %v1506
    %v1601 = vunpack.c.h.b16 %v1506
    %v1602 = vunpack.c.l.b16 %v1507
    %v1603 = vunpack.c.h.b16 %v1507
    %v1604 = vpack.c.b16 %v1540, %v1540
    %v1605 = vpack.c.b16 %v1541, %v1541
    %v1606 = vpack.c.b16 %v1542, %v1542
    %v1607 = vpack.c.b16 %v1543, %v1543
    %v1608 = vpack.c.b16 %v1544, %v1544
    %v1609 = vpack.c.b16 %v1545, %v1545
    %v1610 = vpack.c.b16 %v1546, %v1546
    %v1611 = vpack.c.b16 %v1547, %v1547
    %v1612 = vpack.c.b16 %v1548, %v1548
    %v1613 = vpack.c.b16 %v1549, %v1549
    %v1614 = vpack.c.b16 %v1550, %v1550
    %v1615 = vpack.c.b16 %v1551, %v1551
    %v1616 = vpack.c.b16 %v1552, %v1552
    %v1617 = vpack.c.b16 %v1553, %v1553
    %v1618 = vpack.c.b16 %v1554, %v1554
    %v1619 = vpack.c.b16 %v1555, %v1555
    %v1620 = vpack.c.b16 %v1556, %v1556
    %v1621 = vpack.c.b16 %v1557, %v1557
    %v1622 = vpack.c.b16 %v1558, %v1558
    %v1623 = vpack.c.b16 %v1559, %v1559
    %v1624 = vpack.c.b16 %v1560, %v1560
    %v1625 = vpack.c.b16 %v1561, %v1561
    %v1626 = vpack.c.b16 %v1562, %v1562
    %v1627 = vpack.c.b16 %v1563, %v1563
    %v1628 = vpack.c.b16 %v1564, %v1564
    %v1629 = vpack.c.b16 %v1565, %v1565
    %v1630 = vpack.c.b16 %v1566, %v1566
    %v1631 = vpack.c.b16 %v1567, %v1567
    %v1632 = vpack.c.b16 %v1568, %v1568
    %v1633 = vpack.c.b16 %v1569, %v1569
    %v1634 = vpack.c.b16 %v1570, %v1570
    %v1635 = vpack.c.b16 %v1571, %v1571
    %v1636 = vpack.c.b16 %v1572, %v1572
    %v1637 = vpack.c.b16 %v1573, %v1573
    %v1638 = vpack.c.b16 %v1574, %v1574
    %v1639 = vpack.c.b16 %v1575, %v1575
    %v1640 = vpack.c.b16 %v1576, %v1576
    %v1641 = vpack.c.b16 %v1577, %v1577
    %v1642 = vpack.c.b16 %v1578, %v1578
    %v1643 = vpack.c.b16 %v1579, %v1579
    %v1644 = vpack.c.b16 %v1580, %v1580
    %v1645 = vpack.c.b16 %v1581, %v1581
    %v1646 = vpack.c.b16 %v1582, %v1582
    %v1647 = vpack.c.b16 %v1583, %v1583
    %v1648 = vpack.c.b16 %v1584, %v1584
    %v1649 = vpack.c.b16 %v1585, %v1585
    %v1650 = vpack.c.b16 %v1586, %v1586
    %v1651 = vpack.c.b16 %v1587, %v1587
    %v1652 = vpack.c.b16 %v1588, %v1588
    %v1653 = vpack.c.b16 %v1589, %v1589
    %v1654 = vpack.c.b16 %v1590, %v1590
    %v1655 = vpack.c.b16 %v1591, %v1591
    %v1656 = vpack.c.b16 %v1592, %v1592
    %v1657 = vpack.c.b16 %v1593, %v1593
    %v1658 = vpack.c.b16 %v1594, %v1594
    %v1659 = vpack.c.b16 %v1595, %v1595
    %v1660 = vpack.c.b16 %v1596, %v1596
    %v1661 = vpack.c.b16 %v1597, %v1597
    %v1662 = vpack.c.b16 %v1598, %v1598
    %v1663 = vpack.c.b16 %v1599, %v1599
    %v1664 = vpack.c.b16 %v1600, %v1600
    %v1665 = vpack.c.b16 %v1601, %v1601
    %v1666 = vpack.c.b16 %v1602, %v1602
    %v1667 = vpack.c.b16 %v1603, %v1603
    %1732 = vst [vmem:[%s2] sm:$0xf] %v1604
    %1733 = vst [vmem:[%s2 + $0x4] sm:$0xf] %v1605
    %1734 = vst [vmem:[%s2 + $0x8] sm:$0xf] %v1606
    %1735 = vst [vmem:[%s2 + $0xc] sm:$0xf] %v1607
    %1736 = vst [vmem:[%s2 + $0x10] sm:$0xf] %v1608
    %1737 = vst [vmem:[%s2 + $0x14] sm:$0xf] %v1609
    %1738 = vst [vmem:[%s2 + $0x18] sm:$0xf] %v1610
    %1739 = vst [vmem:[%s2 + $0x1c] sm:$0xf] %v1611
    %1740 = vst [vmem:[%s2 + $0x20] sm:$0xf] %v1612
    %1741 = vst [vmem:[%s2 + $0x24] sm:$0xf] %v1613
    %1742 = vst [vmem:[%s2 + $0x28] sm:$0xf] %v1614
    %1743 = vst [vmem:[%s2 + $0x2c] sm:$0xf] %v1615
    %1744 = vst [vmem:[%s2 + $0x30] sm:$0xf] %v1616
    %1745 = vst [vmem:[%s2 + $0x34] sm:$0xf] %v1617
    %1746 = vst [vmem:[%s2 + $0x38] sm:$0xf] %v1618
    %1747 = vst [vmem:[%s2 + $0x3c] sm:$0xf] %v1619
    %1748 = vst [vmem:[%s2 + $0x40] sm:$0xf] %v1620
    %1749 = vst [vmem:[%s2 + $0x44] sm:$0xf] %v1621
    %1750 = vst [vmem:[%s2 + $0x48] sm:$0xf] %v1622
    %1751 = vst [vmem:[%s2 + $0x4c] sm:$0xf] %v1623
    %1752 = vst [vmem:[%s2 + $0x50] sm:$0xf] %v1624
    %1753 = vst [vmem:[%s2 + $0x54] sm:$0xf] %v1625
    %1754 = vst [vmem:[%s2 + $0x58] sm:$0xf] %v1626
    %1755 = vst [vmem:[%s2 + $0x5c] sm:$0xf] %v1627
    %1756 = vst [vmem:[%s2 + $0x60] sm:$0xf] %v1628
    %1757 = vst [vmem:[%s2 + $0x64] sm:$0xf] %v1629
    %1758 = vst [vmem:[%s2 + $0x68] sm:$0xf] %v1630
    %1759 = vst [vmem:[%s2 + $0x6c] sm:$0xf] %v1631
    %1760 = vst [vmem:[%s2 + $0x70] sm:$0xf] %v1632
    %1761 = vst [vmem:[%s2 + $0x74] sm:$0xf] %v1633
    %1762 = vst [vmem:[%s2 + $0x78] sm:$0xf] %v1634
    %1763 = vst [vmem:[%s2 + $0x7c] sm:$0xf] %v1635
    %1764 = vst [vmem:[%s2 + $0x80] sm:$0xf] %v1636
    %1765 = vst [vmem:[%s2 + $0x84] sm:$0xf] %v1637
    %1766 = vst [vmem:[%s2 + $0x88] sm:$0xf] %v1638
    %1767 = vst [vmem:[%s2 + $0x8c] sm:$0xf] %v1639
    %1768 = vst [vmem:[%s2 + $0x90] sm:$0xf] %v1640
    %1769 = vst [vmem:[%s2 + $0x94] sm:$0xf] %v1641
    %1770 = vst [vmem:[%s2 + $0x98] sm:$0xf] %v1642
    %1771 = vst [vmem:[%s2 + $0x9c] sm:$0xf] %v1643
    %1772 = vst [vmem:[%s2 + $0xa0] sm:$0xf] %v1644
    %1773 = vst [vmem:[%s2 + $0xa4] sm:$0xf] %v1645
    %1774 = vst [vmem:[%s2 + $0xa8] sm:$0xf] %v1646
    %1775 = vst [vmem:[%s2 + $0xac] sm:$0xf] %v1647
    %1776 = vst [vmem:[%s2 + $0xb0] sm:$0xf] %v1648
    %1777 = vst [vmem:[%s2 + $0xb4] sm:$0xf] %v1649
    %1778 = vst [vmem:[%s2 + $0xb8] sm:$0xf] %v1650
    %1779 = vst [vmem:[%s2 + $0xbc] sm:$0xf] %v1651
    %1780 = vst [vmem:[%s2 + $0xc0] sm:$0xf] %v1652
    %1781 = vst [vmem:[%s2 + $0xc4] sm:$0xf] %v1653
    %1782 = vst [vmem:[%s2 + $0xc8] sm:$0xf] %v1654
    %1783 = vst [vmem:[%s2 + $0xcc] sm:$0xf] %v1655
    %1784 = vst [vmem:[%s2 + $0xd0] sm:$0xf] %v1656
    %1785 = vst [vmem:[%s2 + $0xd4] sm:$0xf] %v1657
    %1786 = vst [vmem:[%s2 + $0xd8] sm:$0xf] %v1658
    %1787 = vst [vmem:[%s2 + $0xdc] sm:$0xf] %v1659
    %1788 = vst [vmem:[%s2 + $0xe0] sm:$0xf] %v1660
    %1789 = vst [vmem:[%s2 + $0xe4] sm:$0xf] %v1661
    %1790 = vst [vmem:[%s2 + $0xe8] sm:$0xf] %v1662
    %1791 = vst [vmem:[%s2 + $0xec] sm:$0xf] %v1663
    %1792 = vst [vmem:[%s2 + $0xf0] sm:$0xf] %v1664
    %1793 = vst [vmem:[%s2 + $0xf4] sm:$0xf] %v1665
    %1794 = vst [vmem:[%s2 + $0xf8] sm:$0xf] %v1666
    %1795 = vst [vmem:[%s2 + $0xfc] sm:$0xf] %v1667
  $region17: #{_lambda_.5} parent=0 // pred_fallthru
    _
  // Predicated region
  $region18: #{_lambda_.5} parent=0 // pred_check
    _
  $region19: #{_lambda_.5} parent=0 // pred_check_branch
    %1797 = sbr.rel (0) target = $region21
  $region20: #{_lambda_.5} parent=0 // pred_region
    _
  $region21: #{_lambda_.5} parent=0 // pred_fallthru
    _
  // Predicated region
  $region22: #{_lambda_.5} parent=0 // pred_check
    _
  $region23: #{_lambda_.5} parent=0 // pred_check_branch
    %1799 = sbr.rel (0) target = $region25
  $region24: #{_lambda_.5} parent=0 // pred_region
    _
  $region25: #{_lambda_.5} parent=0 // pred_fallthru
    _

// kernel: _lambda_.6
$region0: #{_lambda_.6}
  #allocation0 [shape = 'u32[]', space=smem, size = 0x4, offset = 0x4, fixed_abs, tag = 'smem constant byte address 0x4 - core index']
  #allocation1 [shape = 'u32[144,128]{1,0:T(1,128)}', space=vmem, size = 0x12000, scoped, tag = 'internal scratch']
  #allocation2 [shape = 'f32[128,128]{1,0:T(8,128)}', space=vmem, size = 0x10000, scoped, tag = 'scratch operand']
  %s0 = inlined_call_operand.vmem [shape: bf16[128,256], index: 0, kind: input, shape index: {}]
  %s1 = inlined_call_operand.vmem [shape: bf16[256,128], index: 1, kind: input, shape index: {}]
  %s2 = inlined_call_operand.vmem [shape: bf16[128,128], index: 2, kind: output, shape index: {}]
  %s3 = sld [smem:[#allocation0]]
  $region26: #{_lambda_.6} parent=0
    _
  %s5 = ssub.s32 1, %s3
  %s6 = scalar_select 0, %s5, %s3
  // Predicated region
  $region2: #{_lambda_.6} parent=0 // pred_check
    _
  $region3: #{_lambda_.6} parent=0 // pred_check_branch
    %8 = sbr.rel (0) target = $region5
  $region4: #{_lambda_.6} parent=0 // pred_region
    _
  $region5: #{_lambda_.6} parent=0 // pred_fallthru
    _
  // Predicated region
  $region6: #{_lambda_.6} parent=0 // pred_check
    _
  $region7: #{_lambda_.6} parent=0 // pred_check_branch
    %10 = sbr.rel (0) target = $region9
  $region8: #{_lambda_.6} parent=0 // pred_region
    _
  $region9: #{_lambda_.6} parent=0 // pred_fallthru
    _
  %p12 = scmp.eq.s32.totalorder 0, 0
  // Predicated region
  $region10: #{_lambda_.6} parent=0 // pred_check
    %p13 = pneg %p12
  $region11: #{_lambda_.6} parent=0 // pred_check_branch
    %15 = sbr.rel (%p13) target = $region13
  $region12: #{_lambda_.6} parent=0 // pred_region
    %16 = vst [vmem:[#allocation2] sm:$0xff] 0.0
    %17 = vst [vmem:[#allocation2 + $0x8] sm:$0xff] 0.0
    %18 = vst [vmem:[#allocation2 + $0x10] sm:$0xff] 0.0
    %19 = vst [vmem:[#allocation2 + $0x18] sm:$0xff] 0.0
    %20 = vst [vmem:[#allocation2 + $0x20] sm:$0xff] 0.0
    %21 = vst [vmem:[#allocation2 + $0x28] sm:$0xff] 0.0
    %22 = vst [vmem:[#allocation2 + $0x30] sm:$0xff] 0.0
    %23 = vst [vmem:[#allocation2 + $0x38] sm:$0xff] 0.0
    %24 = vst [vmem:[#allocation2 + $0x40] sm:$0xff] 0.0
    %25 = vst [vmem:[#allocation2 + $0x48] sm:$0xff] 0.0
    %26 = vst [vmem:[#allocation2 + $0x50] sm:$0xff] 0.0
    %27 = vst [vmem:[#allocation2 + $0x58] sm:$0xff] 0.0
    %28 = vst [vmem:[#allocation2 + $0x60] sm:$0xff] 0.0
    %29 = vst [vmem:[#allocation2 + $0x68] sm:$0xff] 0.0
    %30 = vst [vmem:[#allocation2 + $0x70] sm:$0xff] 0.0
    %31 = vst [vmem:[#allocation2 + $0x78] sm:$0xff] 0.0
  $region13: #{_lambda_.6} parent=0 // pred_fallthru
    _
  %v32 = vld [vmem:[#allocation2] sm:$0xff]
  %v33 = vld [vmem:[#allocation2 + $0x8] sm:$0xff]
  %v34 = vld [vmem:[#allocation2 + $0x10] sm:$0xff]
  %v35 = vld [vmem:[#allocation2 + $0x18] sm:$0xff]
  %v36 = vld [vmem:[#allocation2 + $0x20] sm:$0xff]
  %v37 = vld [vmem:[#allocation2 + $0x28] sm:$0xff]
  %v38 = vld [vmem:[#allocation2 + $0x30] sm:$0xff]
  %v39 = vld [vmem:[#allocation2 + $0x38] sm:$0xff]
  %v40 = vld [vmem:[#allocation2 + $0x40] sm:$0xff]
  %v41 = vld [vmem:[#allocation2 + $0x48] sm:$0xff]
  %v42 = vld [vmem:[#allocation2 + $0x50] sm:$0xff]
  %v43 = vld [vmem:[#allocation2 + $0x58] sm:$0xff]
  %v44 = vld [vmem:[#allocation2 + $0x60] sm:$0xff]
  %v45 = vld [vmem:[#allocation2 + $0x68] sm:$0xff]
  %v46 = vld [vmem:[#allocation2 + $0x70] sm:$0xff]
  %v47 = vld [vmem:[#allocation2 + $0x78] sm:$0xff]
  %v48 = vld [vmem:[%s0] sm:$0xff]
  %v49 = vld [vmem:[%s0 + $0x8] sm:$0xff]
  %v50 = vld [vmem:[%s0 + $0x10] sm:$0xff]
  %v51 = vld [vmem:[%s0 + $0x18] sm:$0xff]
  %v52 = vld [vmem:[%s0 + $0x20] sm:$0xff]
  %v53 = vld [vmem:[%s0 + $0x28] sm:$0xff]
  %v54 = vld [vmem:[%s0 + $0x30] sm:$0xff]
  %v55 = vld [vmem:[%s0 + $0x38] sm:$0xff]
  %v56 = vld [vmem:[%s0 + $0x40] sm:$0xff]
  %v57 = vld [vmem:[%s0 + $0x48] sm:$0xff]
  %v58 = vld [vmem:[%s0 + $0x50] sm:$0xff]
  %v59 = vld [vmem:[%s0 + $0x58] sm:$0xff]
  %v60 = vld [vmem:[%s0 + $0x60] sm:$0xff]
  %v61 = vld [vmem:[%s0 + $0x68] sm:$0xff]
  %v62 = vld [vmem:[%s0 + $0x70] sm:$0xff]
  %v63 = vld [vmem:[%s0 + $0x78] sm:$0xff]
  %v64 = vld [vmem:[%s1] sm:$0xf]
  %v65 = vld [vmem:[%s1 + $0x4] sm:$0xf]
  %v66 = vld [vmem:[%s1 + $0x8] sm:$0xf]
  %v67 = vld [vmem:[%s1 + $0xc] sm:$0xf]
  %v68 = vld [vmem:[%s1 + $0x10] sm:$0xf]
  %v69 = vld [vmem:[%s1 + $0x14] sm:$0xf]
  %v70 = vld [vmem:[%s1 + $0x18] sm:$0xf]
  %v71 = vld [vmem:[%s1 + $0x1c] sm:$0xf]
  %v72 = vld [vmem:[%s1 + $0x20] sm:$0xf]
  %v73 = vld [vmem:[%s1 + $0x24] sm:$0xf]
  %v74 = vld [vmem:[%s1 + $0x28] sm:$0xf]
  %v75 = vld [vmem:[%s1 + $0x2c] sm:$0xf]
  %v76 = vld [vmem:[%s1 + $0x30] sm:$0xf]
  %v77 = vld [vmem:[%s1 + $0x34] sm:$0xf]
  %v78 = vld [vmem:[%s1 + $0x38] sm:$0xf]
  %v79 = vld [vmem:[%s1 + $0x3c] sm:$0xf]
  %v80 = vld [vmem:[%s1 + $0x40] sm:$0xf]
  %v81 = vld [vmem:[%s1 + $0x44] sm:$0xf]
  %v82 = vld [vmem:[%s1 + $0x48] sm:$0xf]
  %v83 = vld [vmem:[%s1 + $0x4c] sm:$0xf]
  %v84 = vld [vmem:[%s1 + $0x50] sm:$0xf]
  %v85 = vld [vmem:[%s1 + $0x54] sm:$0xf]
  %v86 = vld [vmem:[%s1 + $0x58] sm:$0xf]
  %v87 = vld [vmem:[%s1 + $0x5c] sm:$0xf]
  %v88 = vld [vmem:[%s1 + $0x60] sm:$0xf]
  %v89 = vld [vmem:[%s1 + $0x64] sm:$0xf]
  %v90 = vld [vmem:[%s1 + $0x68] sm:$0xf]
  %v91 = vld [vmem:[%s1 + $0x6c] sm:$0xf]
  %v92 = vld [vmem:[%s1 + $0x70] sm:$0xf]
  %v93 = vld [vmem:[%s1 + $0x74] sm:$0xf]
  %v94 = vld [vmem:[%s1 + $0x78] sm:$0xf]
  %v95 = vld [vmem:[%s1 + $0x7c] sm:$0xf]
  %v112 = vunpack.c.l.b16 %v48
  %v113 = vunpack.c.h.b16 %v48
  %v114 = vunpack.c.l.b16 %v49
  %v115 = vunpack.c.h.b16 %v49
  %v116 = vunpack.c.l.b16 %v50
  %v117 = vunpack.c.h.b16 %v50
  %v118 = vunpack.c.l.b16 %v51
  %v119 = vunpack.c.h.b16 %v51
  %v120 = vunpack.c.l.b16 %v52
  %v121 = vunpack.c.h.b16 %v52
  %v122 = vunpack.c.l.b16 %v53
  %v123 = vunpack.c.h.b16 %v53
  %v124 = vunpack.c.l.b16 %v54
  %v125 = vunpack.c.h.b16 %v54
  %v126 = vunpack.c.l.b16 %v55
  %v127 = vunpack.c.h.b16 %v55
  %v128 = vunpack.c.l.b16 %v56
  %v129 = vunpack.c.h.b16 %v56
  %v130 = vunpack.c.l.b16 %v57
  %v131 = vunpack.c.h.b16 %v57
  %v132 = vunpack.c.l.b16 %v58
  %v133 = vunpack.c.h.b16 %v58
  %v134 = vunpack.c.l.b16 %v59
  %v135 = vunpack.c.h.b16 %v59
  %v136 = vunpack.c.l.b16 %v60
  %v137 = vunpack.c.h.b16 %v60
  %v138 = vunpack.c.l.b16 %v61
  %v139 = vunpack.c.h.b16 %v61
  %v140 = vunpack.c.l.b16 %v62
  %v141 = vunpack.c.h.b16 %v62
  %v142 = vunpack.c.l.b16 %v63
  %v143 = vunpack.c.h.b16 %v63
  %v144 = vpack.c.b16 %v114, %v112
  %v145 = vpack.c.b16 %v115, %v113
  %v146 = vpack.c.b16 %v118, %v116
  %v147 = vpack.c.b16 %v119, %v117
  %v148 = vpack.c.b16 %v122, %v120
  %v149 = vpack.c.b16 %v123, %v121
  %v150 = vpack.c.b16 %v126, %v124
  %v151 = vpack.c.b16 %v127, %v125
  %v152 = vpack.c.b16 %v130, %v128
  %v153 = vpack.c.b16 %v131, %v129
  %v154 = vpack.c.b16 %v134, %v132
  %v155 = vpack.c.b16 %v135, %v133
  %v156 = vpack.c.b16 %v138, %v136
  %v157 = vpack.c.b16 %v139, %v137
  %v158 = vpack.c.b16 %v142, %v140
  %v159 = vpack.c.b16 %v143, %v141
  %v208 = vunpack.c.l.b16 %v64
  %v209 = vunpack.c.l.b16 %v65
  %v210 = vunpack.c.l.b16 %v66
  %v211 = vunpack.c.l.b16 %v67
  %v212 = vunpack.c.l.b16 %v68
  %v213 = vunpack.c.l.b16 %v69
  %v214 = vunpack.c.l.b16 %v70
  %v215 = vunpack.c.l.b16 %v71
  %v216 = vunpack.c.l.b16 %v72
  %v217 = vunpack.c.l.b16 %v73
  %v218 = vunpack.c.l.b16 %v74
  %v219 = vunpack.c.l.b16 %v75
  %v220 = vunpack.c.l.b16 %v76
  %v221 = vunpack.c.l.b16 %v77
  %v222 = vunpack.c.l.b16 %v78
  %v223 = vunpack.c.l.b16 %v79
  %v224 = vunpack.c.l.b16 %v80
  %v225 = vunpack.c.l.b16 %v81
  %v226 = vunpack.c.l.b16 %v82
  %v227 = vunpack.c.l.b16 %v83
  %v228 = vunpack.c.l.b16 %v84
  %v229 = vunpack.c.l.b16 %v85
  %v230 = vunpack.c.l.b16 %v86
  %v231 = vunpack.c.l.b16 %v87
  %v232 = vunpack.c.l.b16 %v88
  %v233 = vunpack.c.l.b16 %v89
  %v234 = vunpack.c.l.b16 %v90
  %v235 = vunpack.c.l.b16 %v91
  %v236 = vunpack.c.l.b16 %v92
  %v237 = vunpack.c.l.b16 %v93
  %v238 = vunpack.c.l.b16 %v94
  %v239 = vunpack.c.l.b16 %v95
  %v240 = vpack.c.b16 %v209, %v208
  %v241 = vpack.c.b16 %v211, %v210
  %v242 = vpack.c.b16 %v213, %v212
  %v243 = vpack.c.b16 %v215, %v214
  %v244 = vpack.c.b16 %v217, %v216
  %v245 = vpack.c.b16 %v219, %v218
  %v246 = vpack.c.b16 %v221, %v220
  %v247 = vpack.c.b16 %v223, %v222
  %v248 = vpack.c.b16 %v225, %v224
  %v249 = vpack.c.b16 %v227, %v226
  %v250 = vpack.c.b16 %v229, %v228
  %v251 = vpack.c.b16 %v231, %v230
  %v252 = vpack.c.b16 %v233, %v232
  %v253 = vpack.c.b16 %v235, %v234
  %v254 = vpack.c.b16 %v237, %v236
  %v255 = vpack.c.b16 %v239, %v238
  %272 = vmatprep.subr.bf16.mxu0 0
  %273 = vmatpush1.bf16.msra.mxu0 %v240
  %274 = vmatprep.subr.bf16.mxu0 0
  %275 = vmatpush1.bf16.msra.mxu0 %v241
  %276 = vmatprep.subr.bf16.mxu0 0
  %277 = vmatpush1.bf16.msra.mxu0 %v242
  %278 = vmatprep.subr.bf16.mxu0 0
  %279 = vmatpush1.bf16.msra.mxu0 %v243
  %280 = vmatprep.subr.bf16.mxu0 0
  %281 = vmatpush1.bf16.msra.mxu0 %v244
  %282 = vmatprep.subr.bf16.mxu0 0
  %283 = vmatpush1.bf16.msra.mxu0 %v245
  %284 = vmatprep.subr.bf16.mxu0 0
  %285 = vmatpush1.bf16.msra.mxu0 %v246
  %286 = vmatprep.subr.bf16.mxu0 0
  %287 = vmatpush1.bf16.msra.mxu0 %v247
  %288 = vmatprep.subr.bf16.mxu0 0
  %289 = vmatpush1.bf16.msra.mxu0 %v248
  %290 = vmatprep.subr.bf16.mxu0 0
  %291 = vmatpush1.bf16.msra.mxu0 %v249
  %292 = vmatprep.subr.bf16.mxu0 0
  %293 = vmatpush1.bf16.msra.mxu0 %v250
  %294 = vmatprep.subr.bf16.mxu0 0
  %295 = vmatpush1.bf16.msra.mxu0 %v251
  %296 = vmatprep.subr.bf16.mxu0 0
  %297 = vmatpush1.bf16.msra.mxu0 %v252
  %298 = vmatprep.subr.bf16.mxu0 0
  %299 = vmatpush1.bf16.msra.mxu0 %v253
  %300 = vmatprep.subr.bf16.mxu0 0
  %301 = vmatpush1.bf16.msra.mxu0 %v254
  %302 = vmatprep.subr.bf16.mxu0 0
  %303 = vmatpush1.bf16.msra.mxu0 %v255
  %304 = vmatprep.mubr.bf16.mxu0 %v145
  %305 = vmatmul.mubr.bf16.gmra.mrb[0].mxu0 %v144
  %v306 = vpop.f32.mrb[0].mxu0
  %v307 = vadd.f32 0.0, %v306
  %v308 = vpop.f32.mrb[0].mxu0
  %v309 = vpop.f32.mrb[0].mxu0
  %v310 = vadd.f32 0.0, %v309
  %v311 = vpop.f32.mrb[0].mxu0
  %312 = vmatprep.mubr.bf16.mxu0 %v147
  %313 = vmatmul.mubr.bf16.gmra.mrb[0].mxu0 %v146
  %v314 = vpop.f32.mrb[0].mxu0
  %v315 = vadd.f32 0.0, %v314
  %v316 = vpop.f32.mrb[0].mxu0
  %v317 = vpop.f32.mrb[0].mxu0
  %v318 = vadd.f32 0.0, %v317
  %v319 = vpop.f32.mrb[0].mxu0
  %320 = vmatprep.mubr.bf16.mxu0 %v149
  %321 = vmatmul.mubr.bf16.gmra.mrb[0].mxu0 %v148
  %v322 = vpop.f32.mrb[0].mxu0
  %v323 = vadd.f32 0.0, %v322
  %v324 = vpop.f32.mrb[0].mxu0
  %v325 = vpop.f32.mrb[0].mxu0
  %v326 = vadd.f32 0.0, %v325
  %v327 = vpop.f32.mrb[0].mxu0
  %328 = vmatprep.mubr.bf16.mxu0 %v151
  %329 = vmatmul.mubr.bf16.gmra.mrb[0].mxu0 %v150
  %v330 = vpop.f32.mrb[0].mxu0
  %v331 = vadd.f32 0.0, %v330
  %v332 = vpop.f32.mrb[0].mxu0
  %v333 = vpop.f32.mrb[0].mxu0
  %v334 = vadd.f32 0.0, %v333
  %v335 = vpop.f32.mrb[0].mxu0
  %336 = vmatprep.mubr.bf16.mxu0 %v153
  %337 = vmatmul.mubr.bf16.gmra.mrb[0].mxu0 %v152
  %v338 = vpop.f32.mrb[0].mxu0
  %v339 = vadd.f32 0.0, %v338
  %v340 = vpop.f32.mrb[0].mxu0
  %v341 = vpop.f32.mrb[0].mxu0
  %v342 = vadd.f32 0.0, %v341
  %v343 = vpop.f32.mrb[0].mxu0
  %344 = vmatprep.mubr.bf16.mxu0 %v155
  %345 = vmatmul.mubr.bf16.gmra.mrb[0].mxu0 %v154
  %v346 = vpop.f32.mrb[0].mxu0
  %v347 = vadd.f32 0.0, %v346
  %v348 = vpop.f32.mrb[0].mxu0
  %v349 = vpop.f32.mrb[0].mxu0
  %v350 = vadd.f32 0.0, %v349
  %v351 = vpop.f32.mrb[0].mxu0
  %352 = vmatprep.mubr.bf16.mxu0 %v157
  %353 = vmatmul.mubr.bf16.gmra.mrb[0].mxu0 %v156
  %v354 = vpop.f32.mrb[0].mxu0
  %v355 = vadd.f32 0.0, %v354
  %v356 = vpop.f32.mrb[0].mxu0
  %v357 = vpop.f32.mrb[0].mxu0
  %v358 = vadd.f32 0.0, %v357
  %v359 = vpop.f32.mrb[0].mxu0
  %360 = vmatprep.mubr.bf16.mxu0 %v159
  %361 = vmatmul.mubr.bf16.gmra.mrb[0].mxu0 %v158
  %v362 = vpop.f32.mrb[0].mxu0
  %v363 = vadd.f32 0.0, %v362
  %v364 = vpop.f32.mrb[0].mxu0
  %v365 = vpop.f32.mrb[0].mxu0
  %v366 = vadd.f32 0.0, %v365
  %v367 = vpop.f32.mrb[0].mxu0
  %368 = vdwg.mxu0
  %v369 = vadd.f32 %v32, %v307
  %v370 = vadd.f32 %v33, %v310
  %v371 = vadd.f32 %v34, %v315
  %v372 = vadd.f32 %v35, %v318
  %v373 = vadd.f32 %v36, %v323
  %v374 = vadd.f32 %v37, %v326
  %v375 = vadd.f32 %v38, %v331
  %v376 = vadd.f32 %v39, %v334
  %v377 = vadd.f32 %v40, %v339
  %v378 = vadd.f32 %v41, %v342
  %v379 = vadd.f32 %v42, %v347
  %v380 = vadd.f32 %v43, %v350
  %v381 = vadd.f32 %v44, %v355
  %v382 = vadd.f32 %v45, %v358
  %v383 = vadd.f32 %v46, %v363
  %v384 = vadd.f32 %v47, %v366
  %385 = vst [vmem:[#allocation2] sm:$0xff] %v369
  %386 = vst [vmem:[#allocation2 + $0x8] sm:$0xff] %v370
  %387 = vst [vmem:[#allocation2 + $0x10] sm:$0xff] %v371
  %388 = vst [vmem:[#allocation2 + $0x18] sm:$0xff] %v372
  %389 = vst [vmem:[#allocation2 + $0x20] sm:$0xff] %v373
  %390 = vst [vmem:[#allocation2 + $0x28] sm:$0xff] %v374
  %391 = vst [vmem:[#allocation2 + $0x30] sm:$0xff] %v375
  %392 = vst [vmem:[#allocation2 + $0x38] sm:$0xff] %v376
  %393 = vst [vmem:[#allocation2 + $0x40] sm:$0xff] %v377
  %394 = vst [vmem:[#allocation2 + $0x48] sm:$0xff] %v378
  %395 = vst [vmem:[#allocation2 + $0x50] sm:$0xff] %v379
  %396 = vst [vmem:[#allocation2 + $0x58] sm:$0xff] %v380
  %397 = vst [vmem:[#allocation2 + $0x60] sm:$0xff] %v381
  %398 = vst [vmem:[#allocation2 + $0x68] sm:$0xff] %v382
  %399 = vst [vmem:[#allocation2 + $0x70] sm:$0xff] %v383
  %400 = vst [vmem:[#allocation2 + $0x78] sm:$0xff] %v384
  // Predicated region
  $region14: #{_lambda_.6} parent=0 // pred_check
    %p401 = pneg %p12
  $region15: #{_lambda_.6} parent=0 // pred_check_branch
    %403 = sbr.rel (%p401) target = $region17
  $region16: #{_lambda_.6} parent=0 // pred_region
    %v404 = vld [vmem:[#allocation2] sm:$0xff]
    %v405 = vld [vmem:[#allocation2 + $0x8] sm:$0xff]
    %v406 = vld [vmem:[#allocation2 + $0x10] sm:$0xff]
    %v407 = vld [vmem:[#allocation2 + $0x18] sm:$0xff]
    %v408 = vld [vmem:[#allocation2 + $0x20] sm:$0xff]
    %v409 = vld [vmem:[#allocation2 + $0x28] sm:$0xff]
    %v410 = vld [vmem:[#allocation2 + $0x30] sm:$0xff]
    %v411 = vld [vmem:[#allocation2 + $0x38] sm:$0xff]
    %v412 = vld [vmem:[#allocation2 + $0x40] sm:$0xff]
    %v413 = vld [vmem:[#allocation2 + $0x48] sm:$0xff]
    %v414 = vld [vmem:[#allocation2 + $0x50] sm:$0xff]
    %v415 = vld [vmem:[#allocation2 + $0x58] sm:$0xff]
    %v416 = vld [vmem:[#allocation2 + $0x60] sm:$0xff]
    %v417 = vld [vmem:[#allocation2 + $0x68] sm:$0xff]
    %v418 = vld [vmem:[#allocation2 + $0x70] sm:$0xff]
    %v419 = vld [vmem:[#allocation2 + $0x78] sm:$0xff]
    %v420 = vadd.f32 %v404, %v405
    %v421 = vadd.f32 %v420, %v406
    %v422 = vadd.f32 %v421, %v407
    %v423 = vadd.f32 %v422, %v408
    %v424 = vadd.f32 %v423, %v409
    %v425 = vadd.f32 %v424, %v410
    %v426 = vadd.f32 %v425, %v411
    %v427 = vadd.f32 %v426, %v412
    %v428 = vadd.f32 %v427, %v413
    %v429 = vadd.f32 %v428, %v414
    %v430 = vadd.f32 %v429, %v415
    %v431 = vadd.f32 %v430, %v416
    %v432 = vadd.f32 %v431, %v417
    %v433 = vadd.f32 %v432, %v418
    %v434 = vadd.f32 %v433, %v419
    %v435 = vrot.slane %v434, 4
    %v436 = vadd.f32 %v434, %v435
    %v437 = vrot.slane %v436, 2
    %v438 = vadd.f32 %v436, %v437
    %v439 = vrot.slane %v438, 1
    %v440 = vadd.f32 %v438, %v439
    %v441 = vmul.f32 %v404, %v404
    %v442 = vmul.f32 %v405, %v405
    %v443 = vmul.f32 %v406, %v406
    %v444 = vmul.f32 %v407, %v407
    %v445 = vmul.f32 %v408, %v408
    %v446 = vmul.f32 %v409, %v409
    %v447 = vmul.f32 %v410, %v410
    %v448 = vmul.f32 %v411, %v411
    %v449 = vmul.f32 %v412, %v412
    %v450 = vmul.f32 %v413, %v413
    %v451 = vmul.f32 %v414, %v414
    %v452 = vmul.f32 %v415, %v415
    %v453 = vmul.f32 %v416, %v416
    %v454 = vmul.f32 %v417, %v417
    %v455 = vmul.f32 %v418, %v418
    %v456 = vmul.f32 %v419, %v419
    %v457 = vadd.f32 %v441, %v442
    %v458 = vadd.f32 %v457, %v443
    %v459 = vadd.f32 %v458, %v444
    %v460 = vadd.f32 %v459, %v445
    %v461 = vadd.f32 %v460, %v446
    %v462 = vadd.f32 %v461, %v447
    %v463 = vadd.f32 %v462, %v448
    %v464 = vadd.f32 %v463, %v449
    %v465 = vadd.f32 %v464, %v450
    %v466 = vadd.f32 %v465, %v451
    %v467 = vadd.f32 %v466, %v452
    %v468 = vadd.f32 %v467, %v453
    %v469 = vadd.f32 %v468, %v454
    %v470 = vadd.f32 %v469, %v455
    %v471 = vadd.f32 %v470, %v456
    %v472 = vrot.slane %v471, 4
    %v473 = vadd.f32 %v471, %v472
    %v474 = vrot.slane %v473, 2
    %v475 = vadd.f32 %v473, %v474
    %v476 = vrot.slane %v475, 1
    %v477 = vadd.f32 %v475, %v476
    %v478 = vmul.f32 %v440, 0.0078125
    %v479 = vmul.f32 %v477, 0.0078125
    %v480 = vmul.f32 %v478, %v478
    %v481 = vsub.f32 %v479, %v480
    %v482 = vsub.f32 %v404, %v478
    %v483 = vsub.f32 %v405, %v478
    %v484 = vsub.f32 %v406, %v478
    %v485 = vsub.f32 %v407, %v478
    %v486 = vsub.f32 %v408, %v478
    %v487 = vsub.f32 %v409, %v478
    %v488 = vsub.f32 %v410, %v478
    %v489 = vsub.f32 %v411, %v478
    %v490 = vsub.f32 %v412, %v478
    %v491 = vsub.f32 %v413, %v478
    %v492 = vsub.f32 %v414, %v478
    %v493 = vsub.f32 %v415, %v478
    %v494 = vsub.f32 %v416, %v478
    %v495 = vsub.f32 %v417, %v478
    %v496 = vsub.f32 %v418, %v478
    %v497 = vsub.f32 %v419, %v478
    %v498 = vadd.f32 %v481, 1e-05
    %v499 = vrsqrt.pop %v498
    %v500 = vmul.f32 %v482, %v499
    %v501 = vmul.f32 %v483, %v499
    %v502 = vmul.f32 %v484, %v499
    %v503 = vmul.f32 %v485, %v499
    %v504 = vmul.f32 %v486, %v499
    %v505 = vmul.f32 %v487, %v499
    %v506 = vmul.f32 %v488, %v499
    %v507 = vmul.f32 %v489, %v499
    %v508 = vmul.f32 %v490, %v499
    %v509 = vmul.f32 %v491, %v499
    %v510 = vmul.f32 %v492, %v499
    %v511 = vmul.f32 %v493, %v499
    %v512 = vmul.f32 %v494, %v499
    %v513 = vmul.f32 %v495, %v499
    %v514 = vmul.f32 %v496, %v499
    %v515 = vmul.f32 %v497, %v499
    %vm516 = vcmp.gt.f32.partialorder %v500, 0.0
    %vm517 = vcmp.gt.f32.partialorder %v501, 0.0
    %vm518 = vcmp.gt.f32.partialorder %v502, 0.0
    %vm519 = vcmp.gt.f32.partialorder %v503, 0.0
    %vm520 = vcmp.gt.f32.partialorder %v504, 0.0
    %vm521 = vcmp.gt.f32.partialorder %v505, 0.0
    %vm522 = vcmp.gt.f32.partialorder %v506, 0.0
    %vm523 = vcmp.gt.f32.partialorder %v507, 0.0
    %vm524 = vcmp.gt.f32.partialorder %v508, 0.0
    %vm525 = vcmp.gt.f32.partialorder %v509, 0.0
    %vm526 = vcmp.gt.f32.partialorder %v510, 0.0
    %vm527 = vcmp.gt.f32.partialorder %v511, 0.0
    %vm528 = vcmp.gt.f32.partialorder %v512, 0.0
    %vm529 = vcmp.gt.f32.partialorder %v513, 0.0
    %vm530 = vcmp.gt.f32.partialorder %v514, 0.0
    %vm531 = vcmp.gt.f32.partialorder %v515, 0.0
    %v532 = vmul.f32 %v500, 0.2
    %v533 = vmul.f32 %v501, 0.2
    %v534 = vmul.f32 %v502, 0.2
    %v535 = vmul.f32 %v503, 0.2
    %v536 = vmul.f32 %v504, 0.2
    %v537 = vmul.f32 %v505, 0.2
    %v538 = vmul.f32 %v506, 0.2
    %v539 = vmul.f32 %v507, 0.2
    %v540 = vmul.f32 %v508, 0.2
    %v541 = vmul.f32 %v509, 0.2
    %v542 = vmul.f32 %v510, 0.2
    %v543 = vmul.f32 %v511, 0.2
    %v544 = vmul.f32 %v512, 0.2
    %v545 = vmul.f32 %v513, 0.2
    %v546 = vmul.f32 %v514, 0.2
    %v547 = vmul.f32 %v515, 0.2
    %v548 = vsel %vm516, %v500, %v532
    %v549 = vsel %vm517, %v501, %v533
    %v550 = vsel %vm518, %v502, %v534
    %v551 = vsel %vm519, %v503, %v535
    %v552 = vsel %vm520, %v504, %v536
    %v553 = vsel %vm521, %v505, %v537
    %v554 = vsel %vm522, %v506, %v538
    %v555 = vsel %vm523, %v507, %v539
    %v556 = vsel %vm524, %v508, %v540
    %v557 = vsel %vm525, %v509, %v541
    %v558 = vsel %vm526, %v510, %v542
    %v559 = vsel %vm527, %v511, %v543
    %v560 = vsel %vm528, %v512, %v544
    %v561 = vsel %vm529, %v513, %v545
    %v562 = vsel %vm530, %v514, %v546
    %v563 = vsel %vm531, %v515, %v547
    %v564 = vpack.c.bf16 %v549, %v548
    %v565 = vpack.c.bf16 %v551, %v550
    %v566 = vpack.c.bf16 %v553, %v552
    %v567 = vpack.c.bf16 %v555, %v554
    %v568 = vpack.c.bf16 %v557, %v556
    %v569 = vpack.c.bf16 %v559, %v558
    %v570 = vpack.c.bf16 %v561, %v560
    %v571 = vpack.c.bf16 %v563, %v562
    %v580 = vunpack.c.l.b16 %v564
    %v581 = vunpack.c.h.b16 %v564
    %v582 = vunpack.c.l.b16 %v565
    %v583 = vunpack.c.h.b16 %v565
    %v584 = vunpack.c.l.b16 %v566
    %v585 = vunpack.c.h.b16 %v566
    %v586 = vunpack.c.l.b16 %v567
    %v587 = vunpack.c.h.b16 %v567
    %v588 = vunpack.c.l.b16 %v568
    %v589 = vunpack.c.h.b16 %v568
    %v590 = vunpack.c.l.b16 %v569
    %v591 = vunpack.c.h.b16 %v569
    %v592 = vunpack.c.l.b16 %v570
    %v593 = vunpack.c.h.b16 %v570
    %v594 = vunpack.c.l.b16 %v571
    %v595 = vunpack.c.h.b16 %v571
    %v596 = vpack.c.b16 %v580, %v580
    %v597 = vpack.c.b16 %v581, %v581
    %v598 = vpack.c.b16 %v582, %v582
    %v599 = vpack.c.b16 %v583, %v583
    %v600 = vpack.c.b16 %v584, %v584
    %v601 = vpack.c.b16 %v585, %v585
    %v602 = vpack.c.b16 %v586, %v586
    %v603 = vpack.c.b16 %v587, %v587
    %v604 = vpack.c.b16 %v588, %v588
    %v605 = vpack.c.b16 %v589, %v589
    %v606 = vpack.c.b16 %v590, %v590
    %v607 = vpack.c.b16 %v591, %v591
    %v608 = vpack.c.b16 %v592, %v592
    %v609 = vpack.c.b16 %v593, %v593
    %v610 = vpack.c.b16 %v594, %v594
    %v611 = vpack.c.b16 %v595, %v595
    %628 = vst [vmem:[%s2] sm:$0xf] %v596
    %629 = vst [vmem:[%s2 + $0x4] sm:$0xf] %v597
    %630 = vst [vmem:[%s2 + $0x8] sm:$0xf] %v598
    %631 = vst [vmem:[%s2 + $0xc] sm:$0xf] %v599
    %632 = vst [vmem:[%s2 + $0x10] sm:$0xf] %v600
    %633 = vst [vmem:[%s2 + $0x14] sm:$0xf] %v601
    %634 = vst [vmem:[%s2 + $0x18] sm:$0xf] %v602
    %635 = vst [vmem:[%s2 + $0x1c] sm:$0xf] %v603
    %636 = vst [vmem:[%s2 + $0x20] sm:$0xf] %v604
    %637 = vst [vmem:[%s2 + $0x24] sm:$0xf] %v605
    %638 = vst [vmem:[%s2 + $0x28] sm:$0xf] %v606
    %639 = vst [vmem:[%s2 + $0x2c] sm:$0xf] %v607
    %640 = vst [vmem:[%s2 + $0x30] sm:$0xf] %v608
    %641 = vst [vmem:[%s2 + $0x34] sm:$0xf] %v609
    %642 = vst [vmem:[%s2 + $0x38] sm:$0xf] %v610
    %643 = vst [vmem:[%s2 + $0x3c] sm:$0xf] %v611
  $region17: #{_lambda_.6} parent=0 // pred_fallthru
    _
  // Predicated region
  $region18: #{_lambda_.6} parent=0 // pred_check
    _
  $region19: #{_lambda_.6} parent=0 // pred_check_branch
    %645 = sbr.rel (0) target = $region21
  $region20: #{_lambda_.6} parent=0 // pred_region
    _
  $region21: #{_lambda_.6} parent=0 // pred_fallthru
    _
  // Predicated region
  $region22: #{_lambda_.6} parent=0 // pred_check
    _
  $region23: #{_lambda_.6} parent=0 // pred_check_branch
    %647 = sbr.rel (0) target = $region25
  $region24: #{_lambda_.6} parent=0 // pred_region
    _
  $region25: #{_lambda_.6} parent=0 // pred_fallthru
    _

// kernel: _lambda_.7
$region0: #{_lambda_.7}
  #allocation0 [shape = 'u32[]', space=smem, size = 0x4, offset = 0x4, fixed_abs, tag = 'smem constant byte address 0x4 - core index']
  #allocation1 [shape = 'u32[144,128]{1,0:T(1,128)}', space=vmem, size = 0x12000, scoped, tag = 'internal scratch']
  #allocation2 [shape = 'f32[32,128]{1,0:T(8,128)}', space=vmem, size = 0x4000, scoped, tag = 'scratch operand']
  %s0 = inlined_call_operand.vmem [shape: bf16[32,512], index: 0, kind: input, shape index: {}]
  %s1 = inlined_call_operand.vmem [shape: bf16[512,128], index: 1, kind: input, shape index: {}]
  %s2 = inlined_call_operand.vmem [shape: f32[16,128], index: 2, kind: input, shape index: {}]
  %s3 = inlined_call_operand.vmem [shape: f32[2,1], index: 3, kind: output, shape index: {}]
  %s4 = sld [smem:[#allocation0]]
  $region91: #{_lambda_.7} parent=0
    _
  %s6 = ssub.s32 1, %s4
  %s7 = scalar_select 0, %s6, %s4
  $region1: #{_lambda_.7} parent=0
    #allocation3 [shape = 'u8[32768]{0}', space=vmem, size = 0x8000, scoped, tag = 'input window, operand 0']
    loop: start=0, step=1, limit=4
    $region2: #{_lambda_.7} parent=1 // loop_pre_header
      _
    $region3: #{_lambda_.7} parent=1 // loop_header
      %s9 = sphi 0, %s13
      %p10 = scmp.ge.s32.totalorder %s9, 4
      %s19 = sphi 0, %s21
      %s22 = sphi 0, %s19
      %s23 = sphi 0, %s22
      %s39 = sphi 0, %s23
      %s45 = sphi 0, %s47
      %s48 = sphi 0, %s45
      %s49 = sphi 0, %s48
      %s65 = sphi 0, %s49
      %s69 = sphi 0, %s69
      %s71 = sphi 0, %s69
      %s72 = sphi 0, %s71
      %s86 = sphi 0, %s72
      %s90 = sphi 0, %s90
      %s92 = sphi 0, %s90
      %s93 = sphi 0, %s92
      %s107 = sphi 0, %s93
    $region4: #{_lambda_.7} parent=1 // loop_header_branch
      %12 = sbr.rel (%p10) target = $region8
    $region5: #{_lambda_.7} parent=1 // loop_body
      %s14 = ssub.s32 %s9, 1
      %s15 = ssub.s32 %s9, 2
      %s16 = sadd.s32 %s9, 1
      %s17 = ssub.s32 %s9, %s16
      %p18 = scmp.eq.s32.totalorder %s17, 0
      %s20 = sadd.s32 %s19, 1
      %s21 = scalar_select %p18, %s19, %s20
      %p24 = pneg %p18
      %p25 = scmp.eq.s32.totalorder %s9, 1
      %p26 = por %p24, %p25
      %p27 = scmp.ne.s32.totalorder %s19, %s22
      %p28 = scmp.eq.s32.totalorder %s9, 0
      %p29 = por %p27, %p28
      %p30 = scmp.ne.s32.totalorder %s19, %s22
      %p31 = scmp.eq.s32.totalorder %s14, 1
      %p32 = por %p30, %p31
      %p33 = scmp.ne.s32.totalorder %s22, %s23
      %p34 = scmp.eq.s32.totalorder %s14, 0
      %p35 = por %p33, %p34
      %p36 = scmp.ne.s32.totalorder %s22, %s23
      %p37 = scmp.eq.s32.totalorder %s15, 1
      %p38 = por %p36, %p37
      %p40 = scmp.ne.s32.totalorder %s23, %s39
      %p41 = scmp.eq.s32.totalorder %s15, 0
      %p42 = por %p40, %p41
      %s43 = ssub.s32 %s9, %s16
      %p44 = scmp.eq.s32.totalorder %s43, 0
      %s46 = sadd.s32 %s45, 1
      %s47 = scalar_select %p44, %s45, %s46
      %p50 = pneg %p44
      %p51 = scmp.eq.s32.totalorder %s9, 1
      %p52 = por %p50, %p51
      %p53 = scmp.ne.s32.totalorder %s45, %s48
      %p54 = scmp.eq.s32.totalorder %s9, 0
      %p55 = por %p53, %p54
      %p56 = scmp.ne.s32.totalorder %s45, %s48
      %p57 = scmp.eq.s32.totalorder %s14, 1
      %p58 = por %p56, %p57
      %p59 = scmp.ne.s32.totalorder %s48, %s49
      %p60 = scmp.eq.s32.totalorder %s14, 0
      %p61 = por %p59, %p60
      %p62 = scmp.ne.s32.totalorder %s48, %s49
      %p63 = scmp.eq.s32.totalorder %s15, 1
      %p64 = por %p62, %p63
      %p66 = scmp.ne.s32.totalorder %s49, %s65
      %p67 = scmp.eq.s32.totalorder %s15, 0
      %p68 = por %p66, %p67
      %s70 = sadd.s32 %s69, 1
      %p73 = scmp.eq.s32.totalorder %s9, 1
      %p74 = scmp.ne.s32.totalorder %s69, %s71
      %p75 = scmp.eq.s32.totalorder %s9, 0
      %p76 = por %p74, %p75
      %p77 = scmp.ne.s32.totalorder %s69, %s71
      %p78 = scmp.eq.s32.totalorder %s14, 1
      %p79 = por %p77, %p78
      %p80 = scmp.ne.s32.totalorder %s71, %s72
      %p81 = scmp.eq.s32.totalorder %s14, 0
      %p82 = por %p80, %p81
      %p83 = scmp.ne.s32.totalorder %s71, %s72
      %p84 = scmp.eq.s32.totalorder %s15, 1
      %p85 = por %p83, %p84
      %p87 = scmp.ne.s32.totalorder %s72, %s86
      %p88 = scmp.eq.s32.totalorder %s15, 0
      %p89 = por %p87, %p88
      %s91 = sadd.s32 %s90, 1
      %p94 = scmp.eq.s32.totalorder %s9, 1
      %p95 = scmp.ne.s32.totalorder %s90, %s92
      %p96 = scmp.eq.s32.totalorder %s9, 0
      %p97 = por %p95, %p96
      %p98 = scmp.ne.s32.totalorder %s90, %s92
      %p99 = scmp.eq.s32.totalorder %s14, 1
      %p100 = por %p98, %p99
      %p101 = scmp.ne.s32.totalorder %s92, %s93
      %p102 = scmp.eq.s32.totalorder %s14, 0
      %p103 = por %p101, %p102
      %p104 = scmp.ne.s32.totalorder %s92, %s93
      %p105 = scmp.eq.s32.totalorder %s15, 1
      %p106 = por %p104, %p105
      %p108 = scmp.ne.s32.totalorder %s93, %s107
      %p109 = scmp.eq.s32.totalorder %s15, 0
      %p110 = por %p108, %p109
      %p111 = scmp.le.s32.totalorder 1, %s9
      %p112 = scmp.lt.s32.totalorder %s9, 3
      %p113 = pnand %p111, %p112
      %p114 = pneg %p113
      // Predicated region
      $region9: #{_lambda_.7} parent=5 // pred_check
        _
      $region10: #{_lambda_.7} parent=5 // pred_check_branch
        %116 = sbr.rel (%p113) target = $region12
      $region11: #{_lambda_.7} parent=5 // pred_region
        %s117 = ssub.s32 %s9, 1
        // Predicated region
        $region13: #{_lambda_.7} parent=11 // pred_check
          %p118 = pneg %p82
        $region14: #{_lambda_.7} parent=11 // pred_check_branch
          %120 = sbr.rel (%p118) target = $region16
        $region15: #{_lambda_.7} parent=11 // pred_region
          _
        $region16: #{_lambda_.7} parent=11 // pred_fallthru
          _
      $region12: #{_lambda_.7} parent=5 // pred_fallthru
        _
      %p121 = scmp.lt.s32.totalorder %s9, 2
      // Predicated region
      $region17: #{_lambda_.7} parent=5 // pred_check
        %p122 = pneg %p121
      $region18: #{_lambda_.7} parent=5 // pred_check_branch
        %124 = sbr.rel (%p122) target = $region20
      $region19: #{_lambda_.7} parent=5 // pred_region
        // Predicated region
        $region21: #{_lambda_.7} parent=19 // pred_check
          %p125 = pneg %p29
        $region22: #{_lambda_.7} parent=19 // pred_check_branch
          %127 = sbr.rel (%p125) target = $region24
        $region23: #{_lambda_.7} parent=19 // pred_region
          %s128 = sand.u32 %s19, 1
          %s129 = sand.u32 %s19, 1
          %s130 = smul.addr %s129, 32
          %s131 = scalar_lea.vmem [#allocation3], %s130
          %s132 = smul.u32 2, %s9
          %s133 = smul.addr %s132, 4
          %s134 = scalar_lea.vmem %s0, %s133
          // Predicated region
          $region25: #{_lambda_.7} parent=23 // pred_check
            _
          $region26: #{_lambda_.7} parent=23 // pred_check_branch
            %136 = sbr.rel (0) target = $region28
          $region27: #{_lambda_.7} parent=23 // pred_region
            // Predicated region
            $region29: #{_lambda_.7} parent=27 // pred_check
              _
            $region30: #{_lambda_.7} parent=27 // pred_check_branch
              %138 = sbr.rel (0) target = $region32
            $region31: #{_lambda_.7} parent=27 // pred_region
              // Predicated region
              $region44: #{_lambda_.7} parent=31 // pred_check
                _
              $region45: #{_lambda_.7} parent=31 // pred_check_branch
                %159 = sbr.rel (0) target = $region47
              $region46: #{_lambda_.7} parent=31 // pred_region
                loop: start=0, step=1, limit=1
                $region48: #{_lambda_.7} parent=46 // loop_pre_header
                  _
                $region49: #{_lambda_.7} parent=46 // loop_header
                  %s161 = sphi 0, %s165
                  %p162 = scmp.ge.s32.totalorder %s161, 1
                  %s166 = sphi %s134, %s134
                  %s167 = sphi %s131, %s131
                $region50: #{_lambda_.7} parent=46 // loop_header_branch
                  %164 = sbr.rel (%p162) target = $region54
                $region51: #{_lambda_.7} parent=46 // loop_body
                  %v168 = vld [vmem:[%s166] sm:$0xff]
                  %169 = vst [vmem:[%s167] sm:$0xff] %v168
                  %v170 = vld [vmem:[%s166 + $0x10] sm:$0xff]
                  %171 = vst [vmem:[%s167 + $0x8] sm:$0xff] %v170
                  %v172 = vld [vmem:[%s166 + $0x20] sm:$0xff]
                  %173 = vst [vmem:[%s167 + $0x10] sm:$0xff] %v172
                  %v174 = vld [vmem:[%s166 + $0x30] sm:$0xff]
                  %175 = vst [vmem:[%s167 + $0x18] sm:$0xff] %v174
                $region52: #{_lambda_.7} parent=46 // loop_footer
                  %s165 = sadd.s32 1, %s161
                $region53: #{_lambda_.7} parent=46 // loop_footer_branch
                  %160 = sbr.rel target = $region49
                $region54: #{_lambda_.7} parent=46 // loop_exit
                  _
              $region47: #{_lambda_.7} parent=31 // pred_fallthru
                _
              // Predicated region
              $region55: #{_lambda_.7} parent=31 // pred_check
                _
              $region56: #{_lambda_.7} parent=31 // pred_check_branch
                %177 = sbr.rel target = $region58
              $region57: #{_lambda_.7} parent=31 // pred_region
                _
              $region58: #{_lambda_.7} parent=31 // pred_fallthru
                _
            $region32: #{_lambda_.7} parent=27 // pred_fallthru
              _
            // Predicated region
            $region33: #{_lambda_.7} parent=27 // pred_check
              _
            $region34: #{_lambda_.7} parent=27 // pred_check_branch
              %140 = sbr.rel target = $region36
            $region35: #{_lambda_.7} parent=27 // pred_region
              loop: start=0, step=1, limit=1
              $region37: #{_lambda_.7} parent=35 // loop_pre_header
                _
              $region38: #{_lambda_.7} parent=35 // loop_header
                %s143 = sphi 0, %s147
                %p144 = scmp.ge.s32.totalorder %s143, 1
                %s148 = sphi %s134, %s134
                %s149 = sphi %s131, %s131
              $region39: #{_lambda_.7} parent=35 // loop_header_branch
                %146 = sbr.rel (%p144) target = $region43
              $region40: #{_lambda_.7} parent=35 // loop_body
                %v150 = vld [vmem:[%s148] sm:$0xff]
                %151 = vst [vmem:[%s149] sm:$0xff] %v150
                %v152 = vld [vmem:[%s148 + $0x10] sm:$0xff]
                %153 = vst [vmem:[%s149 + $0x8] sm:$0xff] %v152
                %v154 = vld [vmem:[%s148 + $0x20] sm:$0xff]
                %155 = vst [vmem:[%s149 + $0x10] sm:$0xff] %v154
                %v156 = vld [vmem:[%s148 + $0x30] sm:$0xff]
                %157 = vst [vmem:[%s149 + $0x18] sm:$0xff] %v156
              $region41: #{_lambda_.7} parent=35 // loop_footer
                %s147 = sadd.s32 1, %s143
              $region42: #{_lambda_.7} parent=35 // loop_footer_branch
                %142 = sbr.rel target = $region38
              $region43: #{_lambda_.7} parent=35 // loop_exit
                _
            $region36: #{_lambda_.7} parent=27 // pred_fallthru
              _
          $region28: #{_lambda_.7} parent=23 // pred_fallthru
            _
          %178 = vnop
        $region24: #{_lambda_.7} parent=19 // pred_fallthru
          _
        // Predicated region
        $region59: #{_lambda_.7} parent=19 // pred_check
          %p179 = pneg %p55
        $region60: #{_lambda_.7} parent=19 // pred_check_branch
          %181 = sbr.rel (%p179) target = $region62
        $region61: #{_lambda_.7} parent=19 // pred_region
          %s182 = smul.u32 32, %s9
          %p183 = scmp.lt.s32.totalorder %s182, 63
          %s184 = scalar_select %p183, %s182, 63
          %s185 = smul.addr %s184, 4
          %s186 = scalar_lea.vmem %s1, %s185
          %s187 = smul.u32 32, %s9
        $region62: #{_lambda_.7} parent=19 // pred_fallthru
          _
      $region20: #{_lambda_.7} parent=5 // pred_fallthru
        _
      %p188 = scmp.le.s32.totalorder 1, %s9
      %p189 = scmp.lt.s32.totalorder %s9, 3
      %p190 = pnand %p188, %p189
      %p191 = pneg %p190
      // Predicated region
      $region63: #{_lambda_.7} parent=5 // pred_check
        _
      $region64: #{_lambda_.7} parent=5 // pred_check_branch
        %193 = sbr.rel (%p190) target = $region66
      $region65: #{_lambda_.7} parent=5 // pred_region
        %s194 = ssub.s32 %s9, 1
        %s195 = sand.u32 %s22, 1
        %s196 = sand.u32 %s22, 1
        %s197 = smul.addr %s196, 32
        %s198 = scalar_lea.vmem [#allocation3], %s197
        // Predicated region
        $region67: #{_lambda_.7} parent=65 // pred_check
          %p199 = pneg %p35
        $region68: #{_lambda_.7} parent=65 // pred_check_branch
          %201 = sbr.rel (%p199) target = $region70
        $region69: #{_lambda_.7} parent=65 // pred_region
          _
        $region70: #{_lambda_.7} parent=65 // pred_fallthru
          _
        %s202 = sand.u32 %s22, 1
        %s203 = sand.u32 %s22, 1
        %s204 = smul.addr %s203, 32
        %s205 = scalar_lea.vmem [#allocation3], %s204
        %p206 = pneg %p35
        %p207 = pneg %p32
        %s208 = smul.u32 32, %s14
        %p209 = scmp.lt.s32.totalorder %s208, 63
        %s210 = scalar_select %p209, %s208, 63
        %s211 = smul.addr %s210, 4
        %s212 = scalar_lea.vmem %s1, %s211
        %p213 = pneg %p61
        %p214 = pneg %p58
        %p215 = pneg %p82
        %p216 = pneg %p79
        %p217 = pneg %p103
        %p218 = pneg %p100
        %s219 = smul.u32 2, %s14
        %s220 = smul.u32 32, %s14
        %p221 = scmp.lt.s32.totalorder %s220, 63
        %s222 = scalar_select %p221, %s220, 63
        %s223 = smul.addr %s222, 4
        %s224 = scalar_lea.vmem %s1, %s223
        %s225 = smul.u32 32, %s14
        %p227 = scmp.eq.s32.totalorder %s14, 0
        // Predicated region
        $region71: #{_lambda_.7} parent=65 // pred_check
          %p228 = pneg %p227
        $region72: #{_lambda_.7} parent=65 // pred_check_branch
          %230 = sbr.rel (%p228) target = $region74
        $region73: #{_lambda_.7} parent=65 // pred_region
          %231 = vst [vmem:[#allocation2] sm:$0xff] 0.0
          %232 = vst [vmem:[#allocation2 + $0x8] sm:$0xff] 0.0
          %233 = vst [vmem:[#allocation2 + $0x10] sm:$0xff] 0.0
          %234 = vst [vmem:[#allocation2 + $0x18] sm:$0xff] 0.0
        $region74: #{_lambda_.7} parent=65 // pred_fallthru
          _
        %v235 = vld [vmem:[#allocation2] sm:$0xff]
        %v236 = vld [vmem:[#allocation2 + $0x8] sm:$0xff]
        %v237 = vld [vmem:[#allocation2 + $0x10] sm:$0xff]
        %v238 = vld [vmem:[#allocation2 + $0x18] sm:$0xff]
        %v239 = vld [vmem:[%s198] sm:$0xff]
        %v240 = vld [vmem:[%s198 + $0x8] sm:$0xff]
        %v241 = vld [vmem:[%s198 + $0x10] sm:$0xff]
        %v242 = vld [vmem:[%s198 + $0x18] sm:$0xff]
        %v243 = vld [vmem:[%s224] sm:$0xf]
        %v244 = vld [vmem:[%s224 + $0x4] sm:$0xf]
        %v245 = vld [vmem:[%s224 + $0x8] sm:$0xf]
        %v246 = vld [vmem:[%s224 + $0xc] sm:$0xf]
        %v247 = vld [vmem:[%s224 + $0x10] sm:$0xf]
        %v248 = vld [vmem:[%s224 + $0x14] sm:$0xf]
        %v249 = vld [vmem:[%s224 + $0x18] sm:$0xf]
        %v250 = vld [vmem:[%s224 + $0x1c] sm:$0xf]
        %v251 = vld [vmem:[%s224 + $0x20] sm:$0xf]
        %v252 = vld [vmem:[%s224 + $0x24] sm:$0xf]
        %v253 = vld [vmem:[%s224 + $0x28] sm:$0xf]
        %v254 = vld [vmem:[%s224 + $0x2c] sm:$0xf]
        %v255 = vld [vmem:[%s224 + $0x30] sm:$0xf]
        %v256 = vld [vmem:[%s224 + $0x34] sm:$0xf]
        %v257 = vld [vmem:[%s224 + $0x38] sm:$0xf]
        %v258 = vld [vmem:[%s224 + $0x3c] sm:$0xf]
        %v259 = vld [vmem:[%s224 + $0x40] sm:$0xf]
        %v260 = vld [vmem:[%s224 + $0x44] sm:$0xf]
        %v261 = vld [vmem:[%s224 + $0x48] sm:$0xf]
        %v262 = vld [vmem:[%s224 + $0x4c] sm:$0xf]
        %v263 = vld [vmem:[%s224 + $0x50] sm:$0xf]
        %v264 = vld [vmem:[%s224 + $0x54] sm:$0xf]
        %v265 = vld [vmem:[%s224 + $0x58] sm:$0xf]
        %v266 = vld [vmem:[%s224 + $0x5c] sm:$0xf]
        %v267 = vld [vmem:[%s224 + $0x60] sm:$0xf]
        %v268 = vld [vmem:[%s224 + $0x64] sm:$0xf]
        %v269 = vld [vmem:[%s224 + $0x68] sm:$0xf]
        %v270 = vld [vmem:[%s224 + $0x6c] sm:$0xf]
        %v271 = vld [vmem:[%s224 + $0x70] sm:$0xf]
        %v272 = vld [vmem:[%s224 + $0x74] sm:$0xf]
        %v273 = vld [vmem:[%s224 + $0x78] sm:$0xf]
        %v274 = vld [vmem:[%s224 + $0x7c] sm:$0xf]
        %v279 = vunpack.c.l.b16 %v239
        %v280 = vunpack.c.h.b16 %v239
        %v281 = vunpack.c.l.b16 %v240
        %v282 = vunpack.c.h.b16 %v240
        %v283 = vunpack.c.l.b16 %v241
        %v284 = vunpack.c.h.b16 %v241
        %v285 = vunpack.c.l.b16 %v242
        %v286 = vunpack.c.h.b16 %v242
        %v287 = vpack.c.b16 %v281, %v279
        %v288 = vpack.c.b16 %v282, %v280
        %v289 = vpack.c.b16 %v285, %v283
        %v290 = vpack.c.b16 %v286, %v284
        %v327 = vunpack.c.l.b16 %v243
        %v328 = vunpack.c.l.b16 %v244
        %v329 = vunpack.c.l.b16 %v245
        %v330 = vunpack.c.l.b16 %v246
        %v331 = vunpack.c.l.b16 %v247
        %v332 = vunpack.c.l.b16 %v248
        %v333 = vunpack.c.l.b16 %v249
        %v334 = vunpack.c.l.b16 %v250
        %v335 = vunpack.c.l.b16 %v251
        %v336 = vunpack.c.l.b16 %v252
        %v337 = vunpack.c.l.b16 %v253
        %v338 = vunpack.c.l.b16 %v254
        %v339 = vunpack.c.l.b16 %v255
        %v340 = vunpack.c.l.b16 %v256
        %v341 = vunpack.c.l.b16 %v257
        %v342 = vunpack.c.l.b16 %v258
        %v343 = vunpack.c.l.b16 %v259
        %v344 = vunpack.c.l.b16 %v260
        %v345 = vunpack.c.l.b16 %v261
        %v346 = vunpack.c.l.b16 %v262
        %v347 = vunpack.c.l.b16 %v263
        %v348 = vunpack.c.l.b16 %v264
        %v349 = vunpack.c.l.b16 %v265
        %v350 = vunpack.c.l.b16 %v266
        %v351 = vunpack.c.l.b16 %v267
        %v352 = vunpack.c.l.b16 %v268
        %v353 = vunpack.c.l.b16 %v269
        %v354 = vunpack.c.l.b16 %v270
        %v355 = vunpack.c.l.b16 %v271
        %v356 = vunpack.c.l.b16 %v272
        %v357 = vunpack.c.l.b16 %v273
        %v358 = vunpack.c.l.b16 %v274
        %v359 = vpack.c.b16 %v328, %v327
        %v360 = vpack.c.b16 %v330, %v329
        %v361 = vpack.c.b16 %v332, %v331
        %v362 = vpack.c.b16 %v334, %v333
        %v363 = vpack.c.b16 %v336, %v335
        %v364 = vpack.c.b16 %v338, %v337
        %v365 = vpack.c.b16 %v340, %v339
        %v366 = vpack.c.b16 %v342, %v341
        %v367 = vpack.c.b16 %v344, %v343
        %v368 = vpack.c.b16 %v346, %v345
        %v369 = vpack.c.b16 %v348, %v347
        %v370 = vpack.c.b16 %v350, %v349
        %v371 = vpack.c.b16 %v352, %v351
        %v372 = vpack.c.b16 %v354, %v353
        %v373 = vpack.c.b16 %v356, %v355
        %v374 = vpack.c.b16 %v358, %v357
        %391 = vmatprep.subr.bf16.mxu0 0
        %392 = vmatpush1.bf16.msra.mxu0 %v359
        %393 = vmatprep.subr.bf16.mxu0 0
        %394 = vmatpush1.bf16.msra.mxu0 %v360
        %395 = vmatprep.subr.bf16.mxu0 0
        %396 = vmatpush1.bf16.msra.mxu0 %v361
        %397 = vmatprep.subr.bf16.mxu0 0
        %398 = vmatpush1.bf16.msra.mxu0 %v362
        %399 = vmatprep.subr.bf16.mxu0 0
        %400 = vmatpush1.bf16.msra.mxu0 %v363
        %401 = vmatprep.subr.bf16.mxu0 0
        %402 = vmatpush1.bf16.msra.mxu0 %v364
        %403 = vmatprep.subr.bf16.mxu0 0
        %404 = vmatpush1.bf16.msra.mxu0 %v365
        %405 = vmatprep.subr.bf16.mxu0 0
        %406 = vmatpush1.bf16.msra.mxu0 %v366
        %407 = vmatprep.subr.bf16.mxu0 0
        %408 = vmatpush1.bf16.msra.mxu0 %v367
        %409 = vmatprep.subr.bf16.mxu0 0
        %410 = vmatpush1.bf16.msra.mxu0 %v368
        %411 = vmatprep.subr.bf16.mxu0 0
        %412 = vmatpush1.bf16.msra.mxu0 %v369
        %413 = vmatprep.subr.bf16.mxu0 0
        %414 = vmatpush1.bf16.msra.mxu0 %v370
        %415 = vmatprep.subr.bf16.mxu0 0
        %416 = vmatpush1.bf16.msra.mxu0 %v371
        %417 = vmatprep.subr.bf16.mxu0 0
        %418 = vmatpush1.bf16.msra.mxu0 %v372
        %419 = vmatprep.subr.bf16.mxu0 0
        %420 = vmatpush1.bf16.msra.mxu0 %v373
        %421 = vmatprep.subr.bf16.mxu0 0
        %422 = vmatpush1.bf16.msra.mxu0 %v374
        %423 = vmatprep.mubr.bf16.mxu0 %v288
        %424 = vmatmul.mubr.bf16.gmra.mrb[0].mxu0 %v287
        %v425 = vpop.f32.mrb[0].mxu0
        %v426 = vadd.f32 0.0, %v425
        %v427 = vpop.f32.mrb[0].mxu0
        %v428 = vpop.f32.mrb[0].mxu0
        %v429 = vadd.f32 0.0, %v428
        %v430 = vpop.f32.mrb[0].mxu0
        %431 = vmatprep.mubr.bf16.mxu0 %v290
        %432 = vmatmul.mubr.bf16.gmra.mrb[0].mxu0 %v289
        %v433 = vpop.f32.mrb[0].mxu0
        %v434 = vadd.f32 0.0, %v433
        %v435 = vpop.f32.mrb[0].mxu0
        %v436 = vpop.f32.mrb[0].mxu0
        %v437 = vadd.f32 0.0, %v436
        %v438 = vpop.f32.mrb[0].mxu0
        %439 = vdwg.mxu0
        %v440 = vadd.f32 %v235, %v426
        %v441 = vadd.f32 %v236, %v429
        %v442 = vadd.f32 %v237, %v434
        %v443 = vadd.f32 %v238, %v437
        %444 = vst [vmem:[#allocation2] sm:$0xff] %v440
        %445 = vst [vmem:[#allocation2 + $0x8] sm:$0xff] %v441
        %446 = vst [vmem:[#allocation2 + $0x10] sm:$0xff] %v442
        %447 = vst [vmem:[#allocation2 + $0x18] sm:$0xff] %v443
        %p448 = scmp.eq.s32.totalorder %s14, 1
        // Predicated region
        $region75: #{_lambda_.7} parent=65 // pred_check
          %p449 = pneg %p448
        $region76: #{_lambda_.7} parent=65 // pred_check_branch
          %451 = sbr.rel (%p449) target = $region78
        $region77: #{_lambda_.7} parent=65 // pred_region
          %v452 = vld [vmem:[#allocation2] sm:$0xff]
          %v453 = vld [vmem:[#allocation2 + $0x8] sm:$0xff]
          %v454 = vld [vmem:[#allocation2 + $0x10] sm:$0xff]
          %v455 = vld [vmem:[#allocation2 + $0x18] sm:$0xff]
          %v456 = vadd.f32 %v452, %v453
          %v457 = vadd.f32 %v456, %v454
          %v458 = vadd.f32 %v457, %v455
          %v459 = vrot.slane %v458, 4
          %v460 = vadd.f32 %v458, %v459
          %v461 = vrot.slane %v460, 2
          %v462 = vadd.f32 %v460, %v461
          %v463 = vrot.slane %v462, 1
          %v464 = vadd.f32 %v462, %v463
          %v465 = vmul.f32 %v452, %v452
          %v466 = vmul.f32 %v453, %v453
          %v467 = vmul.f32 %v454, %v454
          %v468 = vmul.f32 %v455, %v455
          %v469 = vadd.f32 %v465, %v466
          %v470 = vadd.f32 %v469, %v467
          %v471 = vadd.f32 %v470, %v468
          %v472 = vrot.slane %v471, 4
          %v473 = vadd.f32 %v471, %v472
          %v474 = vrot.slane %v473, 2
          %v475 = vadd.f32 %v473, %v474
          %v476 = vrot.slane %v475, 1
          %v477 = vadd.f32 %v475, %v476
          %v478 = vmul.f32 %v464, 0.03125
          %v479 = vmul.f32 %v477, 0.03125
          %v480 = vmul.f32 %v478, %v478
          %v481 = vsub.f32 %v479, %v480
          %v482 = vsub.f32 %v452, %v478
          %v483 = vsub.f32 %v453, %v478
          %v484 = vsub.f32 %v454, %v478
          %v485 = vsub.f32 %v455, %v478
          %v486 = vadd.f32 %v481, 1e-05
          %v487 = vrsqrt.pop %v486
          %v488 = vmul.f32 %v482, %v487
          %v489 = vmul.f32 %v483, %v487
          %v490 = vmul.f32 %v484, %v487
          %v491 = vmul.f32 %v485, %v487
          %vm492 = vcmp.gt.f32.partialorder %v488, 0.0
          %vm493 = vcmp.gt.f32.partialorder %v489, 0.0
          %vm494 = vcmp.gt.f32.partialorder %v490, 0.0
          %vm495 = vcmp.gt.f32.partialorder %v491, 0.0
          %v496 = vmul.f32 %v488, 0.2
          %v497 = vmul.f32 %v489, 0.2
          %v498 = vmul.f32 %v490, 0.2
          %v499 = vmul.f32 %v491, 0.2
          %v500 = vsel %vm492, %v488, %v496
          %v501 = vsel %vm493, %v489, %v497
          %v502 = vsel %vm494, %v490, %v498
          %v503 = vsel %vm495, %v491, %v499
          %v504 = vld [vmem:[%s2] sm:$0xff]
          %v505 = vld [vmem:[%s2 + $0x8] sm:$0xff]
          %v506 = vmul.f32 %v500, %v504
          %v507 = vmul.f32 %v501, %v505
          %v508 = vmul.f32 %v502, %v504
          %v509 = vmul.f32 %v503, %v505
          %v510 = vadd.f32 %v506, %v507
          %v511 = vrot.slane %v510, 4
          %v512 = vadd.f32 %v510, %v511
          %v513 = vrot.slane %v512, 2
          %v514 = vadd.f32 %v512, %v513
          %v515 = vrot.slane %v514, 1
          %v516 = vadd.f32 %v514, %v515
          %v517 = vadd.f32 %v508, %v509
          %v518 = vrot.slane %v517, 4
          %v519 = vadd.f32 %v517, %v518
          %v520 = vrot.slane %v519, 2
          %v521 = vadd.f32 %v519, %v520
          %v522 = vrot.slane %v521, 1
          %v523 = vadd.f32 %v521, %v522
          %vm526 = vcmask 1041409
          %v527 = vsel %vm526, %v523, %v516
          %vm529 = vcmask 1041408
          %v530 = vsel %vm529, %v527, 0.0
          %531 = vadd.xlane.f32.xlu0 %v530
          %v532 = vpop.xlane.xlu0 %531
          %v533 = vsub.f32 0.0, %v532
          %v534 = vmul.f32 %v533, 1.442695
          %v535 = vpow.pop %v534
          %v536 = vadd.f32 %v535, 1.0
          %v537 = vrcp.pop %v536
          %v538 = vmul.f32 1.0, %v537
          %vm539 = vcmask 1024
          %540 = vst.msk [vmem:[%s3] sm:$0x3] %vm539, %v538
        $region78: #{_lambda_.7} parent=65 // pred_fallthru
          _
        // Predicated region
        $region79: #{_lambda_.7} parent=65 // pred_check
          %p541 = pneg %p100
        $region80: #{_lambda_.7} parent=65 // pred_check_branch
          %543 = sbr.rel (%p541) target = $region82
        $region81: #{_lambda_.7} parent=65 // pred_region
          _
        $region82: #{_lambda_.7} parent=65 // pred_fallthru
          _
        // Predicated region
        $region83: #{_lambda_.7} parent=65 // pred_check
          %p544 = pneg %p100
        $region84: #{_lambda_.7} parent=65 // pred_check_branch
          %546 = sbr.rel (%p544) target = $region86
        $region85: #{_lambda_.7} parent=65 // pred_region
          _
        $region86: #{_lambda_.7} parent=65 // pred_fallthru
          _
      $region66: #{_lambda_.7} parent=5 // pred_fallthru
        _
      %p547 = scmp.le.s32.totalorder 2, %s9
      // Predicated region
      $region87: #{_lambda_.7} parent=5 // pred_check
        %p548 = pneg %p547
      $region88: #{_lambda_.7} parent=5 // pred_check_branch
        %550 = sbr.rel (%p548) target = $region90
      $region89: #{_lambda_.7} parent=5 // pred_region
        %s551 = ssub.s32 %s9, 2
      $region90: #{_lambda_.7} parent=5 // pred_fallthru
        _
    $region6: #{_lambda_.7} parent=1 // loop_footer
      %s13 = sadd.s32 1, %s9
    $region7: #{_lambda_.7} parent=1 // loop_footer_branch
      %8 = sbr.rel target = $region3
    $region8: #{_lambda_.7} parent=1 // loop_exit
      _

</llo_original>
